<compile_context>
chip_gen: v5e
topology: v5e:2x2
jax: 0.10.0
libtpu: 0.0.40
codegen_flags: <defaults>
</compile_context>

<pallas_src>
import functools
import math

import jax
import jax.numpy as jnp
import numpy as np
from jax.experimental import pallas as pl
from jax.experimental.pallas import tpu as pltpu


# ----------------------------------------------------------------------------
# Fused Inception(d_model->d_ff) -> GELU -> Inception(d_ff->d_model) kernel
# ----------------------------------------------------------------------------
def _timesconv_kernel(*refs, K, Wp, L, rmin, rows, r_cat, groups1, groups2):
    """One batch element per grid step.

    refs = (x_ref, mask_ref, *w1_group_refs, *w2_group_refs, o_ref, mid_ref)
      x_ref:    (rows, Cin)  bf16   zero-padded spatial grid, flattened row-major
      mask_ref: (L, 1)       f32    0.5 on valid output rows, 0 on junk rows
      w*_refs:  (K, gsz*Cin, Cout)  bf16, kw-stacked weights per group
      o_ref:    (L, Cout)    f32
      mid_ref:  (rows, Cmid) bf16   VMEM scratch, zero-padded intermediate
    """
    n1, n2 = len(groups1), len(groups2)
    x_ref, mask_ref = refs[0], refs[1]
    w1_refs = refs[2:2 + n1]
    w2_refs = refs[2 + n1:2 + n1 + n2]
    o_ref = refs[2 + n1 + n2]
    mid_ref = refs[3 + n1 + n2]

    cmid = mid_ref.shape[-1]
    cout = o_ref.shape[-1]
    mask_half = mask_ref[...]                     # (L, 1), holds 0.5 * validity

    def conv(src_ref, w_refs, groups, c_out):
        acc = jnp.zeros((L, c_out), jnp.float32)
        for (kw0, gsz), w_ref in zip(groups, w_refs):
            # im2col per kw-group: concat the gsz column-shifted slices along
            # lanes -> one big-contraction dot per kernel row kh.  The concat
            # buffer is reused across all K kernel rows.
            if gsz == 1:
                cat = src_ref[kw0:kw0 + r_cat, :]
            else:
                cat = jnp.concatenate(
                    [src_ref[kw0 + j:kw0 + j + r_cat, :] for j in range(gsz)],
                    axis=-1)
            for kh in range(K):
                lhs = cat[kh * Wp:kh * Wp + L, :]        # aligned start (Wp%16==0)
                acc += jnp.dot(lhs, w_ref[kh],
                               preferred_element_type=jnp.float32)
        return acc

    # ---- Inception block 1 ----
    acc1 = conv(x_ref, w1_refs, groups1, cmid)

    # tanh-GELU (transcendental on the EUP); 0.5 and validity mask folded in.
    # The mask zeroes the alignment-junk rows: without it their values would
    # wrap into the left-halo columns that the second conv reads.
    c0 = 0.7978845608028654                    # sqrt(2/pi)
    c1 = 0.044715 * c0
    t = jnp.tanh(acc1 * (c0 + c1 * (acc1 * acc1)))
    act = (acc1 * mask_half) * (1.0 + t)

    # Write the zero-padded intermediate.  conv2 only ever reads rows in
    # [0, rmin + L + rmin), so zero exactly the top/bottom halo it can touch;
    # the [rmin, rmin+L) center is fully overwritten every iteration.
    if rmin > 0:
        mid_ref[0:rmin, :] = jnp.zeros((rmin, cmid), mid_ref.dtype)
    mid_ref[rmin:rmin + L, :] = act.astype(mid_ref.dtype)
    tail = min(rmin, rows - rmin - L)
    if tail > 0:
        mid_ref[rmin + L:rmin + L + tail, :] = jnp.zeros((tail, cmid),
                                                         mid_ref.dtype)

    # ---- Inception block 2 ----
    acc2 = conv(mid_ref, w2_refs, groups2, cout)
    o_ref[...] = acc2.astype(o_ref.dtype)


def _kw_groups(K, C, max_contract):
    """Chunk the K column shifts so each dot's contraction is <= max_contract."""
    gs = K if K * C <= max_contract else max(1, max_contract // C)
    groups, kw0 = [], 0
    while kw0 < K:
        g = min(gs, K - kw0)
        groups.append((kw0, g))
        kw0 += g
    return tuple(groups)


def _conv_pair_pallas(x_bhwc, w1, w2, max_contract=512):
    """TimesBlock.conv (Inception -> GELU -> Inception) as one Pallas kernel.

    x_bhwc: (B, H, W, C) NHWC.  w1: (K*K, C, Cmid), w2: (K*K, Cmid, Cout)
    (branch-averaged combined KxK weights).  Returns (B, H, W, Cout) f32.
    """
    B, H, W, C = x_bhwc.shape
    K = int(round(math.sqrt(w1.shape[0])))
    P = K // 2
    Cmid, Cout = w1.shape[2], w2.shape[2]

    SUB = 16                                     # bf16 sublane packing
    Wp = -(-(W + 2 * P) // SUB) * SUB            # aligned padded row stride
    Hp = H + 2 * P
    rows = Hp * Wp
    L = (H - 1) * Wp + W                         # contiguous output-row range
    r_cat = (K - 1) * Wp + L
    rmin = P * Wp + P

    # Zero-pad and flatten the spatial grid; bf16 operands for the MXU.
    # TODO(synk): padding could be done inside the kernel to save one XLA
    # materialization, but the strided (unaligned-by-P) in-kernel copies are
    # not obviously cheaper at these channel counts.
    xpad = jnp.pad(x_bhwc.astype(jnp.bfloat16),
                   ((0, 0), (P, P), (P, Wp - W - P), (0, 0)))
    xflat = xpad.reshape(B, rows, C)

    # 0.5 * validity mask over the L computed rows (folds GELU's 0.5 factor).
    col = np.arange(L) % Wp
    mask_half = jnp.asarray((col < W).astype(np.float32) * 0.5).reshape(L, 1)

    # kw-stacked weights per group, ready for the fused dots.
    groups1 = _kw_groups(K, C, max_contract)
    groups2 = _kw_groups(K, Cmid, max_contract)
    w1_4 = w1.reshape(K, K, C, Cmid).astype(jnp.bfloat16)
    w2_4 = w2.reshape(K, K, Cmid, Cout).astype(jnp.bfloat16)
    w1_groups = [w1_4[:, kw0:kw0 + g].reshape(K, g * C, Cmid)
                 for kw0, g in groups1]
    w2_groups = [w2_4[:, kw0:kw0 + g].reshape(K, g * Cmid, Cout)
                 for kw0, g in groups2]

    kernel = functools.partial(
        _timesconv_kernel, K=K, Wp=Wp, L=L, rmin=rmin, rows=rows, r_cat=r_cat,
        groups1=groups1, groups2=groups2)

    in_specs = [pl.BlockSpec((None, rows, C), lambda b: (b, 0, 0)),
                pl.BlockSpec((L, 1), lambda b: (0, 0))]
    in_specs += [pl.BlockSpec(w.shape, lambda b: (0, 0, 0))
                 for w in w1_groups + w2_groups]

    flops = 2 * B * K * K * L * (C * Cmid + Cmid * Cout)
    bytes_accessed = (xflat.size * 2 + mask_half.size * 4 +
                      sum(w.size * 2 for w in w1_groups + w2_groups) +
                      B * L * Cout * 4)

    out_flat = pl.pallas_call(
        kernel,
        grid=(B,),
        out_shape=jax.ShapeDtypeStruct((B, L, Cout), jnp.float32),
        in_specs=in_specs,
        out_specs=pl.BlockSpec((None, L, Cout), lambda b: (b, 0, 0)),
        scratch_shapes=[pltpu.VMEM((rows, Cmid), jnp.bfloat16)],
        compiler_params=pltpu.CompilerParams(
            dimension_semantics=("parallel",),       # v7x: 2 TCs over batch
            vmem_limit_bytes=32 * 1024 * 1024),
        cost_estimate=pl.CostEstimate(flops=flops,
                                      transcendentals=B * L * Cmid,
                                      bytes_accessed=bytes_accessed),
    )(xflat, mask_half, *w1_groups, *w2_groups)

    # Un-flatten: computed row index == h * Wp + w; keep the W valid columns.
    # TODO(synk): at realistic d_model >= 128 the channel/lane dim is
    # naturally 128-dense; output stores are half-masked at d_model=64.
    out_pad = jnp.pad(out_flat, ((0, 0), (0, H * Wp - L), (0, 0)))
    return out_pad.reshape(B, H, Wp, Cout)[:, :, :W, :]


_conv_pair_jit = jax.jit(_conv_pair_pallas, static_argnums=(3,))


# ----------------------------------------------------------------------------
# Pure-JAX reference conv pair (XLA conv) — used for the built-in self check.
# ----------------------------------------------------------------------------
def _conv_pair_ref(x_bhwc, w1, w2):
    K = int(round(math.sqrt(w1.shape[0])))
    P = K // 2
    dn = ('NHWC', 'HWIO', 'NHWC')
    y = jax.lax.conv_general_dilated(
        x_bhwc, w1.reshape(K, K, w1.shape[1], w1.shape[2]),
        window_strides=(1, 1), padding=[(P, P), (P, P)], dimension_numbers=dn)
    y = jax.nn.gelu(y, approximate=True)
    y = jax.lax.conv_general_dilated(
        y, w2.reshape(K, K, w2.shape[1], w2.shape[2]),
        window_strides=(1, 1), padding=[(P, P), (P, P)], dimension_numbers=dn)
    return y


# ----------------------------------------------------------------------------
# Weight construction: fold Inception_Block_V1's num_kernels same-padded
# Conv2d branches (sizes 1,3,...; kaiming_normal fan_out/relu; zero bias) and
# the final .mean(-1) into a single equivalent KxK conv weight.
# ----------------------------------------------------------------------------
def make_inception_combined_weight(key, in_ch, out_ch, num_kernels):
    K = 2 * (num_kernels - 1) + 1
    wc = jnp.zeros((K, K, in_ch, out_ch), jnp.float32)
    keys = jax.random.split(key, num_kernels)
    for i in range(num_kernels):
        ks = 2 * i + 1
        fan_out = out_ch * ks * ks
        std = math.sqrt(2.0 / fan_out)            # kaiming_normal_(fan_out, relu)
        w = std * jax.random.normal(keys[i], (ks, ks, in_ch, out_ch), jnp.float32)
        off = num_kernels - 1 - i                 # center smaller kernels in KxK
        wc = wc.at[off:off + ks, off:off + ks, :, :].add(w)
    wc = wc / float(num_kernels)                  # branch mean
    return wc.reshape(K * K, in_ch, out_ch)


# ----------------------------------------------------------------------------
# TimesBlock.forward
# ----------------------------------------------------------------------------
def times_block_forward(x, w1, w2, top_k, conv_fn):
    """x: (B, T, N=d_model) f32.  conv_fn(x4_bhwc, w1, w2) -> (B, H, W, N)."""
    B, T, N = x.shape
    xf = jnp.fft.rfft(x, axis=1)                  # (B, T//2+1, N) complex
    amp = jnp.abs(xf)
    freq = amp.mean(axis=0).mean(axis=-1)
    freq = freq.at[0].set(0.0)
    _, top = jax.lax.top_k(freq, top_k)

    # Data-dependent *shapes* (period -> reshape): resolved on host, mirroring
    # PyTorch eager semantics.
    # TODO(synk): bucket periods to a fixed set to enable end-to-end jit and a
    # single multi-branch launch instead of per-period calls.
    top_host = np.asarray(jax.device_get(top))

    res, cache = [], {}
    for i in range(top_k):
        p = int(T // int(top_host[i]))
        if p not in cache:                        # identical period => identical result
            pad = (p - T % p) % p
            xp = jnp.pad(x, ((0, 0), (0, pad), (0, 0)))
            Hh = (T + pad) // p
            x4 = xp.reshape(B, Hh, p, N)          # (B, H, W=p, C) NHWC
            y4 = conv_fn(x4, w1, w2)              # (B, H, p, N)
            cache[p] = y4.reshape(B, Hh * p, N)[:, :T, :]
        res.append(cache[p])
    res = jnp.stack(res, axis=-1)                 # (B, T, N, k)

    weight = jax.nn.softmax(amp.mean(axis=-1)[:, top], axis=1)   # (B, k)
    return jnp.sum(res * weight[:, None, None, :], axis=-1) + x


if __name__ == "__main__":
    # Small config consistent with TimesBlock(seq_len, top_k, d_model, d_ff, num_kernels)
    B, T = 2, 64
    d_model, d_ff = 64, 32                        # module defaults
    top_k, num_kernels = 3, 3                     # K = 5

    root = jax.random.PRNGKey(0)
    kx, k1, k2, kc = jax.random.split(root, 4)
    x = jax.random.normal(kx, (B, T, d_model), dtype=jnp.float32)
    w1 = make_inception_combined_weight(k1, d_model, d_ff, num_kernels)
    w2 = make_inception_combined_weight(k2, d_ff, d_model, num_kernels)

    conv_pallas = lambda a, ww1, ww2: _conv_pair_jit(a, ww1, ww2, 512)
    y = times_block_forward(x, w1, w2, top_k, conv_pallas)
    jax.block_until_ready(y)
    assert y.shape == (B, T, d_model) and y.dtype == jnp.float32

    # Sanity check vs a pure-JAX (XLA conv) reference of the same forward.
    # Tolerance covers bf16 matmuls + tanh-GELU; catches any indexing bug.
    y_ref = times_block_forward(x, w1, w2, top_k, _conv_pair_ref)
    np.testing.assert_allclose(np.asarray(y), np.asarray(y_ref),
                               rtol=0.1, atol=0.1)

    # Also exercise the contraction-capped multi-group path on an odd geometry.
    x4 = jax.random.normal(kc, (B, 6, 5, d_model), dtype=jnp.float32)
    y4 = _conv_pair_jit(x4, w1, w2, 96)
    np.testing.assert_allclose(np.asarray(y4), np.asarray(_conv_pair_ref(x4, w1, w2)),
                               rtol=0.1, atol=0.1)

    print("KERNEL_OK")
</pallas_src>

<mosaic_0001>
module attributes {stable_mosaic.version = 11 : i64} {
  func.func @_timesconv_kernel(%arg0: i32, %arg1: memref<1x176x64xbf16, #tpu.memory_space<vmem>>, %arg2: memref<106x1xf32, #tpu.memory_space<vmem>>, %arg3: memref<5x320x32xbf16, #tpu.memory_space<vmem>>, %arg4: memref<5x160x64xbf16, #tpu.memory_space<vmem>>, %arg5: memref<1x106x64xf32, #tpu.memory_space<vmem>>, %arg6: memref<176x32xbf16, #tpu.memory_space<vmem>>) attributes {dimension_semantics = [#tpu.dimension_semantics<parallel>], iteration_bounds = array<i64: 2>, scalar_prefetch = 0 : i64, scratch_operands = 1 : i64, tpu.core_type = #tpu.core_type<tc>, window_params = [{transform_indices = @transform_0, window_bounds = array<i64: 1, 176, 64>}, {pipeline_mode = #tpu.pipeline_mode<synchronous>, transform_indices = @transform_1, window_bounds = array<i64: 106, 1>}, {pipeline_mode = #tpu.pipeline_mode<synchronous>, transform_indices = @transform_2, window_bounds = array<i64: 5, 320, 32>}, {pipeline_mode = #tpu.pipeline_mode<synchronous>, transform_indices = @transform_3, window_bounds = array<i64: 5, 160, 64>}, {transform_indices = @transform_4, window_bounds = array<i64: 1, 106, 64>}]} {
    %c0 = arith.constant 0 : index
    %c0_0 = arith.constant 0 : index
    %0 = vector.load %arg2[%c0, %c0_0] : memref<106x1xf32, #tpu.memory_space<vmem>>, vector<106x1xf32>
    %cst = arith.constant 0.000000e+00 : f32
    %1 = vector.broadcast %cst : f32 to vector<106x32xf32>
    %c0_1 = arith.constant 0 : index
    %c0_2 = arith.constant 0 : index
    %c0_3 = arith.constant 0 : index
    %2 = vector.load %arg1[%c0_1, %c0_2, %c0_3] : memref<1x176x64xbf16, #tpu.memory_space<vmem>>, vector<1x170x64xbf16>
    %3 = vector.shape_cast %2 : vector<1x170x64xbf16> to vector<170x64xbf16>
    %c0_4 = arith.constant 0 : index
    %c1 = arith.constant 1 : index
    %c0_5 = arith.constant 0 : index
    %4 = vector.load %arg1[%c0_4, %c1, %c0_5] : memref<1x176x64xbf16, #tpu.memory_space<vmem>>, vector<1x170x64xbf16>
    %5 = vector.shape_cast %4 : vector<1x170x64xbf16> to vector<170x64xbf16>
    %c0_6 = arith.constant 0 : index
    %c2 = arith.constant 2 : index
    %c0_7 = arith.constant 0 : index
    %6 = vector.load %arg1[%c0_6, %c2, %c0_7] : memref<1x176x64xbf16, #tpu.memory_space<vmem>>, vector<1x170x64xbf16>
    %7 = vector.shape_cast %6 : vector<1x170x64xbf16> to vector<170x64xbf16>
    %c0_8 = arith.constant 0 : index
    %c3 = arith.constant 3 : index
    %c0_9 = arith.constant 0 : index
    %8 = vector.load %arg1[%c0_8, %c3, %c0_9] : memref<1x176x64xbf16, #tpu.memory_space<vmem>>, vector<1x170x64xbf16>
    %9 = vector.shape_cast %8 : vector<1x170x64xbf16> to vector<170x64xbf16>
    %c0_10 = arith.constant 0 : index
    %c4 = arith.constant 4 : index
    %c0_11 = arith.constant 0 : index
    %10 = vector.load %arg1[%c0_10, %c4, %c0_11] : memref<1x176x64xbf16, #tpu.memory_space<vmem>>, vector<1x170x64xbf16>
    %11 = vector.shape_cast %10 : vector<1x170x64xbf16> to vector<170x64xbf16>
    %12 = tpu.concatenate %3, %5, %7, %9, %11 in 1 : vector<170x64xbf16>, vector<170x64xbf16>, vector<170x64xbf16>, vector<170x64xbf16>, vector<170x64xbf16> -> vector<170x320xbf16>
    %13 = vector.extract_strided_slice %12 {offsets = [0, 0], sizes = [106, 320], strides = [1, 1]} : vector<170x320xbf16> to vector<106x320xbf16>
    %c0_12 = arith.constant 0 : index
    %c0_13 = arith.constant 0 : index
    %c0_14 = arith.constant 0 : index
    %14 = vector.load %arg3[%c0_12, %c0_13, %c0_14] : memref<5x320x32xbf16, #tpu.memory_space<vmem>>, vector<1x320x32xbf16>
    %15 = vector.shape_cast %14 : vector<1x320x32xbf16> to vector<320x32xbf16>
    %cst_15 = arith.constant dense<0.000000e+00> : vector<106x32xf32>
    %16 = tpu.matmul %13, %15, %cst_15 {dimension_numbers = #tpu.dot_dimension_numbers<[1], [0], [0], [1], [0, 0, 1, 1], [], []>} : vector<106x320xbf16>, vector<320x32xbf16>, vector<106x32xf32> -> vector<106x32xf32>
    %17 = arith.addf %1, %16 : vector<106x32xf32>
    %18 = vector.extract_strided_slice %12 {offsets = [16, 0], sizes = [106, 320], strides = [1, 1]} : vector<170x320xbf16> to vector<106x320xbf16>
    %c1_16 = arith.constant 1 : index
    %c0_17 = arith.constant 0 : index
    %c0_18 = arith.constant 0 : index
    %19 = vector.load %arg3[%c1_16, %c0_17, %c0_18] : memref<5x320x32xbf16, #tpu.memory_space<vmem>>, vector<1x320x32xbf16>
    %20 = vector.shape_cast %19 : vector<1x320x32xbf16> to vector<320x32xbf16>
    %cst_19 = arith.constant dense<0.000000e+00> : vector<106x32xf32>
    %21 = tpu.matmul %18, %20, %cst_19 {dimension_numbers = #tpu.dot_dimension_numbers<[1], [0], [0], [1], [0, 0, 1, 1], [], []>} : vector<106x320xbf16>, vector<320x32xbf16>, vector<106x32xf32> -> vector<106x32xf32>
    %22 = arith.addf %17, %21 : vector<106x32xf32>
    %23 = vector.extract_strided_slice %12 {offsets = [32, 0], sizes = [106, 320], strides = [1, 1]} : vector<170x320xbf16> to vector<106x320xbf16>
    %c2_20 = arith.constant 2 : index
    %c0_21 = arith.constant 0 : index
    %c0_22 = arith.constant 0 : index
    %24 = vector.load %arg3[%c2_20, %c0_21, %c0_22] : memref<5x320x32xbf16, #tpu.memory_space<vmem>>, vector<1x320x32xbf16>
    %25 = vector.shape_cast %24 : vector<1x320x32xbf16> to vector<320x32xbf16>
    %cst_23 = arith.constant dense<0.000000e+00> : vector<106x32xf32>
    %26 = tpu.matmul %23, %25, %cst_23 {dimension_numbers = #tpu.dot_dimension_numbers<[1], [0], [0], [1], [0, 0, 1, 1], [], []>} : vector<106x320xbf16>, vector<320x32xbf16>, vector<106x32xf32> -> vector<106x32xf32>
    %27 = arith.addf %22, %26 : vector<106x32xf32>
    %28 = vector.extract_strided_slice %12 {offsets = [48, 0], sizes = [106, 320], strides = [1, 1]} : vector<170x320xbf16> to vector<106x320xbf16>
    %c3_24 = arith.constant 3 : index
    %c0_25 = arith.constant 0 : index
    %c0_26 = arith.constant 0 : index
    %29 = vector.load %arg3[%c3_24, %c0_25, %c0_26] : memref<5x320x32xbf16, #tpu.memory_space<vmem>>, vector<1x320x32xbf16>
    %30 = vector.shape_cast %29 : vector<1x320x32xbf16> to vector<320x32xbf16>
    %cst_27 = arith.constant dense<0.000000e+00> : vector<106x32xf32>
    %31 = tpu.matmul %28, %30, %cst_27 {dimension_numbers = #tpu.dot_dimension_numbers<[1], [0], [0], [1], [0, 0, 1, 1], [], []>} : vector<106x320xbf16>, vector<320x32xbf16>, vector<106x32xf32> -> vector<106x32xf32>
    %32 = arith.addf %27, %31 : vector<106x32xf32>
    %33 = vector.extract_strided_slice %12 {offsets = [64, 0], sizes = [106, 320], strides = [1, 1]} : vector<170x320xbf16> to vector<106x320xbf16>
    %c4_28 = arith.constant 4 : index
    %c0_29 = arith.constant 0 : index
    %c0_30 = arith.constant 0 : index
    %34 = vector.load %arg3[%c4_28, %c0_29, %c0_30] : memref<5x320x32xbf16, #tpu.memory_space<vmem>>, vector<1x320x32xbf16>
    %35 = vector.shape_cast %34 : vector<1x320x32xbf16> to vector<320x32xbf16>
    %cst_31 = arith.constant dense<0.000000e+00> : vector<106x32xf32>
    %36 = tpu.matmul %33, %35, %cst_31 {dimension_numbers = #tpu.dot_dimension_numbers<[1], [0], [0], [1], [0, 0, 1, 1], [], []>} : vector<106x320xbf16>, vector<320x32xbf16>, vector<106x32xf32> -> vector<106x32xf32>
    %37 = arith.addf %32, %36 : vector<106x32xf32>
    %38 = arith.mulf %37, %37 : vector<106x32xf32>
    %cst_32 = arith.constant 0.0356774069 : f32
    %39 = vector.broadcast %cst_32 : f32 to vector<106x32xf32>
    %40 = arith.mulf %39, %38 : vector<106x32xf32>
    %cst_33 = arith.constant 0.797884583 : f32
    %41 = vector.broadcast %cst_33 : f32 to vector<106x32xf32>
    %42 = arith.addf %41, %40 : vector<106x32xf32>
    %43 = arith.mulf %37, %42 : vector<106x32xf32>
    %44 = math.tanh %43 : vector<106x32xf32>
    %45 = vector.broadcast %0 : vector<106x1xf32> to vector<106x32xf32>
    %46 = arith.mulf %37, %45 : vector<106x32xf32>
    %cst_34 = arith.constant 1.000000e+00 : f32
    %47 = vector.broadcast %cst_34 : f32 to vector<106x32xf32>
    %48 = arith.addf %47, %44 : vector<106x32xf32>
    %49 = arith.mulf %46, %48 : vector<106x32xf32>
    %cst_35 = arith.constant 0.000000e+00 : bf16
    %50 = vector.broadcast %cst_35 : bf16 to vector<34x32xbf16>
    %c0_36 = arith.constant 0 : index
    %c0_37 = arith.constant 0 : index
    %51 = vector.load %arg6[%c0_36, %c0_37] : memref<176x32xbf16, #tpu.memory_space<vmem>>, vector<34x32xbf16>
    tpu.vector_store %arg6[%c0_36, %c0_37], %50 {strides = array<i32>} : memref<176x32xbf16, #tpu.memory_space<vmem>>, vector<34x32xbf16>,
    %52 = arith.truncf %49 : vector<106x32xf32> to vector<106x32xbf16>
    %c34 = arith.constant 34 : index
    %c0_38 = arith.constant 0 : index
    %53 = vector.load %arg6[%c34, %c0_38] : memref<176x32xbf16, #tpu.memory_space<vmem>>, vector<106x32xbf16>
    tpu.vector_store %arg6[%c34, %c0_38], %52 {strides = array<i32>} : memref<176x32xbf16, #tpu.memory_space<vmem>>, vector<106x32xbf16>,
    %cst_39 = arith.constant 0.000000e+00 : bf16
    %54 = vector.broadcast %cst_39 : bf16 to vector<34x32xbf16>
    %c140 = arith.constant 140 : index
    %c0_40 = arith.constant 0 : index
    %55 = vector.load %arg6[%c140, %c0_40] : memref<176x32xbf16, #tpu.memory_space<vmem>>, vector<34x32xbf16>
    tpu.vector_store %arg6[%c140, %c0_40], %54 {strides = array<i32>} : memref<176x32xbf16, #tpu.memory_space<vmem>>, vector<34x32xbf16>,
    %cst_41 = arith.constant 0.000000e+00 : f32
    %56 = vector.broadcast %cst_41 : f32 to vector<106x64xf32>
    %c0_42 = arith.constant 0 : index
    %c0_43 = arith.constant 0 : index
    %57 = vector.load %arg6[%c0_42, %c0_43] : memref<176x32xbf16, #tpu.memory_space<vmem>>, vector<170x32xbf16>
    %c1_44 = arith.constant 1 : index
    %c0_45 = arith.constant 0 : index
    %58 = vector.load %arg6[%c1_44, %c0_45] : memref<176x32xbf16, #tpu.memory_space<vmem>>, vector<170x32xbf16>
    %c2_46 = arith.constant 2 : index
    %c0_47 = arith.constant 0 : index
    %59 = vector.load %arg6[%c2_46, %c0_47] : memref<176x32xbf16, #tpu.memory_space<vmem>>, vector<170x32xbf16>
    %c3_48 = arith.constant 3 : index
    %c0_49 = arith.constant 0 : index
    %60 = vector.load %arg6[%c3_48, %c0_49] : memref<176x32xbf16, #tpu.memory_space<vmem>>, vector<170x32xbf16>
    %c4_50 = arith.constant 4 : index
    %c0_51 = arith.constant 0 : index
    %61 = vector.load %arg6[%c4_50, %c0_51] : memref<176x32xbf16, #tpu.memory_space<vmem>>, vector<170x32xbf16>
    %62 = tpu.concatenate %57, %58, %59, %60, %61 in 1 : vector<170x32xbf16>, vector<170x32xbf16>, vector<170x32xbf16>, vector<170x32xbf16>, vector<170x32xbf16> -> vector<170x160xbf16>
    %63 = vector.extract_strided_slice %62 {offsets = [0, 0], sizes = [106, 160], strides = [1, 1]} : vector<170x160xbf16> to vector<106x160xbf16>
    %c0_52 = arith.constant 0 : index
    %c0_53 = arith.constant 0 : index
    %c0_54 = arith.constant 0 : index
    %64 = vector.load %arg4[%c0_52, %c0_53, %c0_54] : memref<5x160x64xbf16, #tpu.memory_space<vmem>>, vector<1x160x64xbf16>
    %65 = vector.shape_cast %64 : vector<1x160x64xbf16> to vector<160x64xbf16>
    %cst_55 = arith.constant dense<0.000000e+00> : vector<106x64xf32>
    %66 = tpu.matmul %63, %65, %cst_55 {dimension_numbers = #tpu.dot_dimension_numbers<[1], [0], [0], [1], [0, 0, 1, 1], [], []>} : vector<106x160xbf16>, vector<160x64xbf16>, vector<106x64xf32> -> vector<106x64xf32>
    %67 = arith.addf %56, %66 : vector<106x64xf32>
    %68 = vector.extract_strided_slice %62 {offsets = [16, 0], sizes = [106, 160], strides = [1, 1]} : vector<170x160xbf16> to vector<106x160xbf16>
    %c1_56 = arith.constant 1 : index
    %c0_57 = arith.constant 0 : index
    %c0_58 = arith.constant 0 : index
    %69 = vector.load %arg4[%c1_56, %c0_57, %c0_58] : memref<5x160x64xbf16, #tpu.memory_space<vmem>>, vector<1x160x64xbf16>
    %70 = vector.shape_cast %69 : vector<1x160x64xbf16> to vector<160x64xbf16>
    %cst_59 = arith.constant dense<0.000000e+00> : vector<106x64xf32>
    %71 = tpu.matmul %68, %70, %cst_59 {dimension_numbers = #tpu.dot_dimension_numbers<[1], [0], [0], [1], [0, 0, 1, 1], [], []>} : vector<106x160xbf16>, vector<160x64xbf16>, vector<106x64xf32> -> vector<106x64xf32>
    %72 = arith.addf %67, %71 : vector<106x64xf32>
    %73 = vector.extract_strided_slice %62 {offsets = [32, 0], sizes = [106, 160], strides = [1, 1]} : vector<170x160xbf16> to vector<106x160xbf16>
    %c2_60 = arith.constant 2 : index
    %c0_61 = arith.constant 0 : index
    %c0_62 = arith.constant 0 : index
    %74 = vector.load %arg4[%c2_60, %c0_61, %c0_62] : memref<5x160x64xbf16, #tpu.memory_space<vmem>>, vector<1x160x64xbf16>
    %75 = vector.shape_cast %74 : vector<1x160x64xbf16> to vector<160x64xbf16>
    %cst_63 = arith.constant dense<0.000000e+00> : vector<106x64xf32>
    %76 = tpu.matmul %73, %75, %cst_63 {dimension_numbers = #tpu.dot_dimension_numbers<[1], [0], [0], [1], [0, 0, 1, 1], [], []>} : vector<106x160xbf16>, vector<160x64xbf16>, vector<106x64xf32> -> vector<106x64xf32>
    %77 = arith.addf %72, %76 : vector<106x64xf32>
    %78 = vector.extract_strided_slice %62 {offsets = [48, 0], sizes = [106, 160], strides = [1, 1]} : vector<170x160xbf16> to vector<106x160xbf16>
    %c3_64 = arith.constant 3 : index
    %c0_65 = arith.constant 0 : index
    %c0_66 = arith.constant 0 : index
    %79 = vector.load %arg4[%c3_64, %c0_65, %c0_66] : memref<5x160x64xbf16, #tpu.memory_space<vmem>>, vector<1x160x64xbf16>
    %80 = vector.shape_cast %79 : vector<1x160x64xbf16> to vector<160x64xbf16>
    %cst_67 = arith.constant dense<0.000000e+00> : vector<106x64xf32>
    %81 = tpu.matmul %78, %80, %cst_67 {dimension_numbers = #tpu.dot_dimension_numbers<[1], [0], [0], [1], [0, 0, 1, 1], [], []>} : vector<106x160xbf16>, vector<160x64xbf16>, vector<106x64xf32> -> vector<106x64xf32>
    %82 = arith.addf %77, %81 : vector<106x64xf32>
    %83 = vector.extract_strided_slice %62 {offsets = [64, 0], sizes = [106, 160], strides = [1, 1]} : vector<170x160xbf16> to vector<106x160xbf16>
    %c4_68 = arith.constant 4 : index
    %c0_69 = arith.constant 0 : index
    %c0_70 = arith.constant 0 : index
    %84 = vector.load %arg4[%c4_68, %c0_69, %c0_70] : memref<5x160x64xbf16, #tpu.memory_space<vmem>>, vector<1x160x64xbf16>
    %85 = vector.shape_cast %84 : vector<1x160x64xbf16> to vector<160x64xbf16>
    %cst_71 = arith.constant dense<0.000000e+00> : vector<106x64xf32>
    %86 = tpu.matmul %83, %85, %cst_71 {dimension_numbers = #tpu.dot_dimension_numbers<[1], [0], [0], [1], [0, 0, 1, 1], [], []>} : vector<106x160xbf16>, vector<160x64xbf16>, vector<106x64xf32> -> vector<106x64xf32>
    %87 = arith.addf %82, %86 : vector<106x64xf32>
    %c0_72 = arith.constant 0 : index
    %c0_73 = arith.constant 0 : index
    %c0_74 = arith.constant 0 : index
    %88 = vector.load %arg5[%c0_72, %c0_73, %c0_74] : memref<1x106x64xf32, #tpu.memory_space<vmem>>, vector<1x106x64xf32>
    %89 = vector.shape_cast %88 : vector<1x106x64xf32> to vector<106x64xf32>
    %90 = vector.shape_cast %87 : vector<106x64xf32> to vector<1x106x64xf32>
    tpu.vector_store %arg5[%c0_72, %c0_73, %c0_74], %90 {strides = array<i32>} : memref<1x106x64xf32, #tpu.memory_space<vmem>>, vector<1x106x64xf32>,
    return
  }
  func.func @transform_0(%arg0: i32) -> (i32, i32, i32) {
    %c0_i32 = arith.constant 0 : i32
    %c0_i32_0 = arith.constant 0 : i32
    %c0_i32_1 = arith.constant 0 : i32
    return %arg0, %c0_i32, %c0_i32_0 : i32, i32, i32
  }
  func.func @transform_1(%arg0: i32) -> (i32, i32) {
    %c0_i32 = arith.constant 0 : i32
    %c0_i32_0 = arith.constant 0 : i32
    %c0_i32_1 = arith.constant 0 : i32
    return %c0_i32, %c0_i32_0 : i32, i32
  }
  func.func @transform_2(%arg0: i32) -> (i32, i32, i32) {
    %c0_i32 = arith.constant 0 : i32
    %c0_i32_0 = arith.constant 0 : i32
    %c0_i32_1 = arith.constant 0 : i32
    %c0_i32_2 = arith.constant 0 : i32
    return %c0_i32, %c0_i32_0, %c0_i32_1 : i32, i32, i32
  }
  func.func @transform_3(%arg0: i32) -> (i32, i32, i32) {
    %c0_i32 = arith.constant 0 : i32
    %c0_i32_0 = arith.constant 0 : i32
    %c0_i32_1 = arith.constant 0 : i32
    %c0_i32_2 = arith.constant 0 : i32
    return %c0_i32, %c0_i32_0, %c0_i32_1 : i32, i32, i32
  }
  func.func @transform_4(%arg0: i32) -> (i32, i32, i32) {
    %c0_i32 = arith.constant 0 : i32
    %c0_i32_0 = arith.constant 0 : i32
    %c0_i32_1 = arith.constant 0 : i32
    return %arg0, %c0_i32, %c0_i32_0 : i32, i32, i32
  }
}

</mosaic_0001>

<llo_original>
// kernel: _conv_pair_pallas.1
$region0: #{_conv_pair_pallas.1}
  #allocation0 [shape = 'u32[]', space=smem, size = 0x4, offset = 0x4, fixed_abs, tag = 'smem constant byte address 0x4 - core index']
  #allocation1 [shape = 'u32[72,128]{1,0:T(1,128)}', space=vmem, size = 0x9000, scoped, tag = 'internal scratch']
  #allocation2 [shape = 'bf16[176,32]{1,0:T(8,128)(2,1)}', space=vmem, size = 0xb000, scoped, tag = 'scratch operand']
  %s0 = inlined_call_operand.vmem [shape: bf16[2,176,64], index: 0, kind: input, shape index: {}]
  %s1 = inlined_call_operand.vmem [shape: f32[106,1], index: 1, kind: input, shape index: {}]
  %s2 = inlined_call_operand.vmem [shape: bf16[5,320,32], index: 2, kind: input, shape index: {}]
  %s3 = inlined_call_operand.vmem [shape: bf16[5,160,64], index: 3, kind: input, shape index: {}]
  %s4 = inlined_call_operand.vmem [shape: f32[2,106,64], index: 4, kind: output, shape index: {}]
  %s5 = sld [smem:[#allocation0]]
  $region49: #{_conv_pair_pallas.1} parent=0
    _
  %s7 = ssub.s32 1, %s5
  %s8 = scalar_select 0, %s7, %s5
  loop: start=0, step=1, limit=4
  $region2: #{_conv_pair_pallas.1} parent=0 // loop_pre_header
    _
  $region3: #{_conv_pair_pallas.1} parent=0 // loop_header
    %s10 = sphi 0, %s14
    %p11 = scmp.ge.s32.totalorder %s10, 4
    %s20 = sphi 0, %s22
    %s23 = sphi 0, %s20
    %s24 = sphi 0, %s23
    %s40 = sphi 0, %s24
    %s44 = sphi 0, %s44
    %s46 = sphi 0, %s44
    %s47 = sphi 0, %s46
    %s61 = sphi 0, %s47
    %s65 = sphi 0, %s65
    %s67 = sphi 0, %s65
    %s68 = sphi 0, %s67
    %s82 = sphi 0, %s68
    %s86 = sphi 0, %s86
    %s88 = sphi 0, %s86
    %s89 = sphi 0, %s88
    %s103 = sphi 0, %s89
    %s109 = sphi 0, %s111
    %s112 = sphi 0, %s109
    %s113 = sphi 0, %s112
    %s129 = sphi 0, %s113
  $region4: #{_conv_pair_pallas.1} parent=0 // loop_header_branch
    %13 = sbr.rel (%p11) target = $region8
  $region5: #{_conv_pair_pallas.1} parent=0 // loop_body
    %s15 = ssub.s32 %s10, 1
    %s16 = ssub.s32 %s10, 2
    %s17 = sadd.s32 %s10, 1
    %s18 = ssub.s32 %s10, %s17
    %p19 = scmp.eq.s32.totalorder %s18, 0
    %s21 = sadd.s32 %s20, 1
    %s22 = scalar_select %p19, %s20, %s21
    %p25 = pneg %p19
    %p26 = scmp.eq.s32.totalorder %s10, 1
    %p27 = por %p25, %p26
    %p28 = scmp.ne.s32.totalorder %s20, %s23
    %p29 = scmp.eq.s32.totalorder %s10, 0
    %p30 = por %p28, %p29
    %p31 = scmp.ne.s32.totalorder %s20, %s23
    %p32 = scmp.eq.s32.totalorder %s15, 1
    %p33 = por %p31, %p32
    %p34 = scmp.ne.s32.totalorder %s23, %s24
    %p35 = scmp.eq.s32.totalorder %s15, 0
    %p36 = por %p34, %p35
    %p37 = scmp.ne.s32.totalorder %s23, %s24
    %p38 = scmp.eq.s32.totalorder %s16, 1
    %p39 = por %p37, %p38
    %p41 = scmp.ne.s32.totalorder %s24, %s40
    %p42 = scmp.eq.s32.totalorder %s16, 0
    %p43 = por %p41, %p42
    %s45 = sadd.s32 %s44, 1
    %p48 = scmp.eq.s32.totalorder %s10, 1
    %p49 = scmp.ne.s32.totalorder %s44, %s46
    %p50 = scmp.eq.s32.totalorder %s10, 0
    %p51 = por %p49, %p50
    %p52 = scmp.ne.s32.totalorder %s44, %s46
    %p53 = scmp.eq.s32.totalorder %s15, 1
    %p54 = por %p52, %p53
    %p55 = scmp.ne.s32.totalorder %s46, %s47
    %p56 = scmp.eq.s32.totalorder %s15, 0
    %p57 = por %p55, %p56
    %p58 = scmp.ne.s32.totalorder %s46, %s47
    %p59 = scmp.eq.s32.totalorder %s16, 1
    %p60 = por %p58, %p59
    %p62 = scmp.ne.s32.totalorder %s47, %s61
    %p63 = scmp.eq.s32.totalorder %s16, 0
    %p64 = por %p62, %p63
    %s66 = sadd.s32 %s65, 1
    %p69 = scmp.eq.s32.totalorder %s10, 1
    %p70 = scmp.ne.s32.totalorder %s65, %s67
    %p71 = scmp.eq.s32.totalorder %s10, 0
    %p72 = por %p70, %p71
    %p73 = scmp.ne.s32.totalorder %s65, %s67
    %p74 = scmp.eq.s32.totalorder %s15, 1
    %p75 = por %p73, %p74
    %p76 = scmp.ne.s32.totalorder %s67, %s68
    %p77 = scmp.eq.s32.totalorder %s15, 0
    %p78 = por %p76, %p77
    %p79 = scmp.ne.s32.totalorder %s67, %s68
    %p80 = scmp.eq.s32.totalorder %s16, 1
    %p81 = por %p79, %p80
    %p83 = scmp.ne.s32.totalorder %s68, %s82
    %p84 = scmp.eq.s32.totalorder %s16, 0
    %p85 = por %p83, %p84
    %s87 = sadd.s32 %s86, 1
    %p90 = scmp.eq.s32.totalorder %s10, 1
    %p91 = scmp.ne.s32.totalorder %s86, %s88
    %p92 = scmp.eq.s32.totalorder %s10, 0
    %p93 = por %p91, %p92
    %p94 = scmp.ne.s32.totalorder %s86, %s88
    %p95 = scmp.eq.s32.totalorder %s15, 1
    %p96 = por %p94, %p95
    %p97 = scmp.ne.s32.totalorder %s88, %s89
    %p98 = scmp.eq.s32.totalorder %s15, 0
    %p99 = por %p97, %p98
    %p100 = scmp.ne.s32.totalorder %s88, %s89
    %p101 = scmp.eq.s32.totalorder %s16, 1
    %p102 = por %p100, %p101
    %p104 = scmp.ne.s32.totalorder %s89, %s103
    %p105 = scmp.eq.s32.totalorder %s16, 0
    %p106 = por %p104, %p105
    %s107 = ssub.s32 %s10, %s17
    %p108 = scmp.eq.s32.totalorder %s107, 0
    %s110 = sadd.s32 %s109, 1
    %s111 = scalar_select %p108, %s109, %s110
    %p114 = pneg %p108
    %p115 = scmp.eq.s32.totalorder %s10, 1
    %p116 = por %p114, %p115
    %p117 = scmp.ne.s32.totalorder %s109, %s112
    %p118 = scmp.eq.s32.totalorder %s10, 0
    %p119 = por %p117, %p118
    %p120 = scmp.ne.s32.totalorder %s109, %s112
    %p121 = scmp.eq.s32.totalorder %s15, 1
    %p122 = por %p120, %p121
    %p123 = scmp.ne.s32.totalorder %s112, %s113
    %p124 = scmp.eq.s32.totalorder %s15, 0
    %p125 = por %p123, %p124
    %p126 = scmp.ne.s32.totalorder %s112, %s113
    %p127 = scmp.eq.s32.totalorder %s16, 1
    %p128 = por %p126, %p127
    %p130 = scmp.ne.s32.totalorder %s113, %s129
    %p131 = scmp.eq.s32.totalorder %s16, 0
    %p132 = por %p130, %p131
    %p133 = scmp.le.s32.totalorder 1, %s10
    %p134 = scmp.lt.s32.totalorder %s10, 3
    %p135 = pnand %p133, %p134
    %p136 = pneg %p135
    // Predicated region
    $region9: #{_conv_pair_pallas.1} parent=5 // pred_check
      _
    $region10: #{_conv_pair_pallas.1} parent=5 // pred_check_branch
      %138 = sbr.rel (%p135) target = $region12
    $region11: #{_conv_pair_pallas.1} parent=5 // pred_region
      %s139 = ssub.s32 %s10, 1
      // Predicated region
      $region13: #{_conv_pair_pallas.1} parent=11 // pred_check
        %p140 = pneg %p57
      $region14: #{_conv_pair_pallas.1} parent=11 // pred_check_branch
        %142 = sbr.rel (%p140) target = $region16
      $region15: #{_conv_pair_pallas.1} parent=11 // pred_region
        _
      $region16: #{_conv_pair_pallas.1} parent=11 // pred_fallthru
        _
      // Predicated region
      $region17: #{_conv_pair_pallas.1} parent=11 // pred_check
        %p143 = pneg %p78
      $region18: #{_conv_pair_pallas.1} parent=11 // pred_check_branch
        %145 = sbr.rel (%p143) target = $region20
      $region19: #{_conv_pair_pallas.1} parent=11 // pred_region
        _
      $region20: #{_conv_pair_pallas.1} parent=11 // pred_fallthru
        _
      // Predicated region
      $region21: #{_conv_pair_pallas.1} parent=11 // pred_check
        %p146 = pneg %p99
      $region22: #{_conv_pair_pallas.1} parent=11 // pred_check_branch
        %148 = sbr.rel (%p146) target = $region24
      $region23: #{_conv_pair_pallas.1} parent=11 // pred_region
        _
      $region24: #{_conv_pair_pallas.1} parent=11 // pred_fallthru
        _
    $region12: #{_conv_pair_pallas.1} parent=5 // pred_fallthru
      _
    %p149 = scmp.lt.s32.totalorder %s10, 2
    // Predicated region
    $region25: #{_conv_pair_pallas.1} parent=5 // pred_check
      %p150 = pneg %p149
    $region26: #{_conv_pair_pallas.1} parent=5 // pred_check_branch
      %152 = sbr.rel (%p150) target = $region28
    $region27: #{_conv_pair_pallas.1} parent=5 // pred_region
      // Predicated region
      $region29: #{_conv_pair_pallas.1} parent=27 // pred_check
        %p153 = pneg %p30
      $region30: #{_conv_pair_pallas.1} parent=27 // pred_check_branch
        %155 = sbr.rel (%p153) target = $region32
      $region31: #{_conv_pair_pallas.1} parent=27 // pred_region
        %p156 = scmp.lt.s32.totalorder %s10, 1
        %s157 = scalar_select %p156, %s10, 1
        %s158 = smul.addr %s157, 22
        %s159 = smul.addr %s158, 4
        %s160 = scalar_lea.vmem %s0, %s159
      $region32: #{_conv_pair_pallas.1} parent=27 // pred_fallthru
        _
    $region28: #{_conv_pair_pallas.1} parent=5 // pred_fallthru
      _
    %p161 = scmp.le.s32.totalorder 1, %s10
    %p162 = scmp.lt.s32.totalorder %s10, 3
    %p163 = pnand %p161, %p162
    %p164 = pneg %p163
    // Predicated region
    $region33: #{_conv_pair_pallas.1} parent=5 // pred_check
      _
    $region34: #{_conv_pair_pallas.1} parent=5 // pred_check_branch
      %166 = sbr.rel (%p163) target = $region36
    $region35: #{_conv_pair_pallas.1} parent=5 // pred_region
      %s167 = ssub.s32 %s10, 1
      %p168 = scmp.lt.s32.totalorder %s15, 1
      %s169 = scalar_select %p168, %s15, 1
      %s170 = smul.addr %s169, 22
      %s171 = smul.addr %s170, 4
      %s172 = scalar_lea.vmem %s0, %s171
      %p173 = pneg %p36
      %p174 = pneg %p33
      %p175 = pneg %p57
      %p176 = pneg %p54
      %p177 = pneg %p78
      %p178 = pneg %p75
      %p179 = pneg %p99
      %p180 = pneg %p96
      %p181 = pneg %p125
      %p182 = pneg %p122
      %p183 = scmp.lt.s32.totalorder %s15, 1
      %s184 = scalar_select %p183, %s15, 1
      %s185 = smul.addr %s184, 14
      %s186 = smul.addr %s185, 8
      %s187 = scalar_lea.vmem %s4, %s186
      %p188 = scmp.lt.s32.totalorder %s15, 1
      %s189 = scalar_select %p188, %s15, 1
      %s190 = smul.addr %s189, 22
      %s191 = smul.addr %s190, 4
      %s192 = scalar_lea.vmem %s0, %s191
      %p193 = scmp.lt.s32.totalorder %s15, 1
      %s194 = scalar_select %p193, %s15, 1
      %s195 = smul.addr %s194, 14
      %s196 = smul.addr %s195, 8
      %s197 = scalar_lea.vmem %s4, %s196
      %v199 = vld [vmem:[%s1] sm:$0xff]
      %v200 = vld [vmem:[%s1 + $0x8] sm:$0xff]
      %v201 = vld [vmem:[%s1 + $0x10] sm:$0xff]
      %v202 = vld [vmem:[%s1 + $0x18] sm:$0xff]
      %v203 = vld [vmem:[%s1 + $0x20] sm:$0xff]
      %v204 = vld [vmem:[%s1 + $0x28] sm:$0xff]
      %v205 = vld [vmem:[%s1 + $0x30] sm:$0xff]
      %v206 = vld [vmem:[%s1 + $0x38] sm:$0xff]
      %v207 = vld [vmem:[%s1 + $0x40] sm:$0xff]
      %v208 = vld [vmem:[%s1 + $0x48] sm:$0xff]
      %v209 = vld [vmem:[%s1 + $0x50] sm:$0xff]
      %v210 = vld [vmem:[%s1 + $0x58] sm:$0xff]
      %v211 = vld [vmem:[%s1 + $0x60] sm:$0xff]
      %v212 = vld [vmem:[%s1 + $0x68] sm:$0x3]
      %v213 = vld [vmem:[%s192] sm:$0xf]
      %v214 = vld [vmem:[%s192 + $0x4] sm:$0xf]
      %v215 = vld [vmem:[%s192 + $0x8] sm:$0xf]
      %v216 = vld [vmem:[%s192 + $0xc] sm:$0xf]
      %v217 = vld [vmem:[%s192 + $0x10] sm:$0xf]
      %v218 = vld [vmem:[%s192 + $0x14] sm:$0xf]
      %v219 = vld [vmem:[%s192 + $0x18] sm:$0xf]
      %v220 = vld [vmem:[%s192 + $0x1c] sm:$0xf]
      %v221 = vld [vmem:[%s192 + $0x20] sm:$0xf]
      %v222 = vld [vmem:[%s192 + $0x24] sm:$0xf]
      %v223 = vld [vmem:[%s192 + $0x28] sm:$0xf]
      %v224 = vld [vmem:[%s192 + $0x2c] sm:$0xf]
      %v225 = vld [vmem:[%s192 + $0x30] sm:$0xf]
      %v226 = vld [vmem:[%s192 + $0x34] sm:$0xf]
      %v227 = vld [vmem:[%s192 + $0x38] sm:$0xf]
      %v228 = vld [vmem:[%s192 + $0x3c] sm:$0xf]
      %v229 = vld [vmem:[%s192 + $0x40] sm:$0xf]
      %v230 = vld [vmem:[%s192 + $0x44] sm:$0xf]
      %v231 = vld [vmem:[%s192 + $0x48] sm:$0xf]
      %v232 = vld [vmem:[%s192 + $0x4c] sm:$0xf]
      %v233 = vld [vmem:[%s192 + $0x50] sm:$0xf]
      %v234 = vld [vmem:[%s192 + $0x54] sm:$0x1]
      %v235 = vld [vmem:[%s192 + $0x54] sm:$0x3]
      %v236 = vld [vmem:[%s192] sm:$0xe]
      %v237 = vld [vmem:[%s192 + $0x54] sm:$0x7]
      %v238 = vld [vmem:[%s192] sm:$0xc]
      %v261 = vunpack.c.l.b16 %v213
      %v262 = vunpack.c.l.b16 %v214
      %v263 = vunpack.c.l.b16 %v215
      %v264 = vunpack.c.l.b16 %v216
      %v265 = vunpack.c.l.b16 %v217
      %v266 = vunpack.c.l.b16 %v218
      %v267 = vunpack.c.l.b16 %v219
      %v268 = vunpack.c.l.b16 %v220
      %v269 = vunpack.c.l.b16 %v221
      %v270 = vunpack.c.l.b16 %v222
      %v271 = vunpack.c.l.b16 %v223
      %v272 = vunpack.c.l.b16 %v224
      %v273 = vunpack.c.l.b16 %v225
      %v274 = vunpack.c.l.b16 %v226
      %v275 = vunpack.c.l.b16 %v227
      %v276 = vunpack.c.l.b16 %v228
      %v277 = vunpack.c.l.b16 %v229
      %v278 = vunpack.c.l.b16 %v230
      %v279 = vunpack.c.l.b16 %v231
      %v280 = vunpack.c.l.b16 %v232
      %v281 = vunpack.c.l.b16 %v233
      %v282 = vunpack.c.l.b16 %v234
      %v283 = vpack.c.b16 %v262, %v261
      %v284 = vpack.c.b16 %v264, %v263
      %v285 = vpack.c.b16 %v266, %v265
      %v286 = vpack.c.b16 %v268, %v267
      %v287 = vpack.c.b16 %v270, %v269
      %v288 = vpack.c.b16 %v272, %v271
      %v289 = vpack.c.b16 %v274, %v273
      %v290 = vpack.c.b16 %v276, %v275
      %v291 = vpack.c.b16 %v278, %v277
      %v292 = vpack.c.b16 %v280, %v279
      %v293 = vpack.c.b16 %v282, %v281
      %v295 = vunpack.c.l.b16 %v235
      %v296 = vpack.c.b16 %v295, %v281
      %vm297 = vsmask.f32 7424
      %v299 = vshrl.u32 %v283, 16
      %v301 = vshll.u32 %v283, 16
      %v303 = vrot.slane %v301, 1
      %v304 = vor.u32 %v299, %v303
      %v306 = vshll.u32 %v284, 16
      %v308 = vrot.slane %v306, 1
      %v309 = vsel %vm297, %v304, %v308
      %v310 = vshrl.u32 %v284, 16
      %v312 = vor.u32 %v310, %v308
      %v314 = vshll.u32 %v285, 16
      %v316 = vrot.slane %v314, 1
      %v317 = vsel %vm297, %v312, %v316
      %v318 = vshrl.u32 %v285, 16
      %v320 = vor.u32 %v318, %v316
      %v322 = vshll.u32 %v286, 16
      %v324 = vrot.slane %v322, 1
      %v325 = vsel %vm297, %v320, %v324
      %v326 = vshrl.u32 %v286, 16
      %v328 = vor.u32 %v326, %v324
      %v330 = vshll.u32 %v287, 16
      %v332 = vrot.slane %v330, 1
      %v333 = vsel %vm297, %v328, %v332
      %v334 = vshrl.u32 %v287, 16
      %v336 = vor.u32 %v334, %v332
      %v338 = vshll.u32 %v288, 16
      %v340 = vrot.slane %v338, 1
      %v341 = vsel %vm297, %v336, %v340
      %v342 = vshrl.u32 %v288, 16
      %v344 = vor.u32 %v342, %v340
      %v346 = vshll.u32 %v289, 16
      %v348 = vrot.slane %v346, 1
      %v349 = vsel %vm297, %v344, %v348
      %v350 = vshrl.u32 %v289, 16
      %v352 = vor.u32 %v350, %v348
      %v354 = vshll.u32 %v290, 16
      %v356 = vrot.slane %v354, 1
      %v357 = vsel %vm297, %v352, %v356
      %v358 = vshrl.u32 %v290, 16
      %v360 = vor.u32 %v358, %v356
      %v362 = vshll.u32 %v291, 16
      %v364 = vrot.slane %v362, 1
      %v365 = vsel %vm297, %v360, %v364
      %v366 = vshrl.u32 %v291, 16
      %v368 = vor.u32 %v366, %v364
      %v370 = vshll.u32 %v292, 16
      %v372 = vrot.slane %v370, 1
      %v373 = vsel %vm297, %v368, %v372
      %v374 = vshrl.u32 %v292, 16
      %v376 = vor.u32 %v374, %v372
      %v378 = vshll.u32 %v296, 16
      %v380 = vrot.slane %v378, 1
      %v381 = vsel %vm297, %v376, %v380
      %v382 = vshrl.u32 %v296, 16
      %v384 = vor.u32 %v382, %v380
      %385 = vrot.lane.b32.xlu0 %v309, 64
      %v386 = vpop.permute.xlu0 %385
      %387 = vrot.lane.b32.xlu0 %v317, 64
      %v388 = vpop.permute.xlu0 %387
      %389 = vrot.lane.b32.xlu0 %v325, 64
      %v390 = vpop.permute.xlu0 %389
      %391 = vrot.lane.b32.xlu0 %v333, 64
      %v392 = vpop.permute.xlu0 %391
      %393 = vrot.lane.b32.xlu0 %v341, 64
      %v394 = vpop.permute.xlu0 %393
      %395 = vrot.lane.b32.xlu0 %v349, 64
      %v396 = vpop.permute.xlu0 %395
      %397 = vrot.lane.b32.xlu0 %v357, 64
      %v398 = vpop.permute.xlu0 %397
      %399 = vrot.lane.b32.xlu0 %v365, 64
      %v400 = vpop.permute.xlu0 %399
      %401 = vrot.lane.b32.xlu0 %v373, 64
      %v402 = vpop.permute.xlu0 %401
      %403 = vrot.lane.b32.xlu0 %v381, 64
      %v404 = vpop.permute.xlu0 %403
      %405 = vrot.lane.b32.xlu0 %v384, 64
      %v406 = vpop.permute.xlu0 %405
      %v408 = vunpack.c.l.b16 %v236
      %v409 = vpack.c.b16 %v262, %v408
      %vm410 = vcmask 1046528
      %v411 = vrot.slane %v409, 1
      %v412 = vrot.slane %v284, 1
      %v413 = vsel %vm410, %v411, %v412
      %v414 = vrot.slane %v285, 1
      %v415 = vsel %vm410, %v412, %v414
      %v416 = vrot.slane %v286, 1
      %v417 = vsel %vm410, %v414, %v416
      %v418 = vrot.slane %v287, 1
      %v419 = vsel %vm410, %v416, %v418
      %v420 = vrot.slane %v288, 1
      %v421 = vsel %vm410, %v418, %v420
      %v422 = vrot.slane %v289, 1
      %v423 = vsel %vm410, %v420, %v422
      %v424 = vrot.slane %v290, 1
      %v425 = vsel %vm410, %v422, %v424
      %v426 = vrot.slane %v291, 1
      %v427 = vsel %vm410, %v424, %v426
      %v428 = vrot.slane %v292, 1
      %v429 = vsel %vm410, %v426, %v428
      %v430 = vrot.slane %v296, 1
      %v431 = vsel %vm410, %v428, %v430
      %v433 = vunpack.c.l.b16 %v237
      %v434 = vpack.c.b16 %v433, %v281
      %vm435 = vsmask.f32 6400
      %v437 = vshrl.u32 %v409, 16
      %v439 = vrot.slane %v437, 1
      %v440 = vshll.u32 %v409, 16
      %v442 = vrot.slane %v440, 2
      %v443 = vor.u32 %v439, %v442
      %v444 = vrot.slane %v310, 1
      %v445 = vrot.slane %v306, 2
      %v446 = vor.u32 %v444, %v445
      %v447 = vsel %vm435, %v443, %v446
      %v448 = vrot.slane %v318, 1
      %v449 = vrot.slane %v314, 2
      %v450 = vor.u32 %v448, %v449
      %v451 = vsel %vm435, %v446, %v450
      %v452 = vrot.slane %v326, 1
      %v453 = vrot.slane %v322, 2
      %v454 = vor.u32 %v452, %v453
      %v455 = vsel %vm435, %v450, %v454
      %v456 = vrot.slane %v334, 1
      %v457 = vrot.slane %v330, 2
      %v458 = vor.u32 %v456, %v457
      %v459 = vsel %vm435, %v454, %v458
      %v460 = vrot.slane %v342, 1
      %v461 = vrot.slane %v338, 2
      %v462 = vor.u32 %v460, %v461
      %v463 = vsel %vm435, %v458, %v462
      %v464 = vrot.slane %v350, 1
      %v465 = vrot.slane %v346, 2
      %v466 = vor.u32 %v464, %v465
      %v467 = vsel %vm435, %v462, %v466
      %v468 = vrot.slane %v358, 1
      %v469 = vrot.slane %v354, 2
      %v470 = vor.u32 %v468, %v469
      %v471 = vsel %vm435, %v466, %v470
      %v472 = vrot.slane %v366, 1
      %v473 = vrot.slane %v362, 2
      %v474 = vor.u32 %v472, %v473
      %v475 = vsel %vm435, %v470, %v474
      %v476 = vrot.slane %v374, 1
      %v477 = vrot.slane %v370, 2
      %v478 = vor.u32 %v476, %v477
      %v479 = vsel %vm435, %v474, %v478
      %v481 = vshrl.u32 %v434, 16
      %v483 = vrot.slane %v481, 1
      %v484 = vshll.u32 %v434, 16
      %v486 = vrot.slane %v484, 2
      %v487 = vor.u32 %v483, %v486
      %v488 = vsel %vm435, %v478, %v487
      %489 = vrot.lane.b32.xlu0 %v447, 64
      %v490 = vpop.permute.xlu0 %489
      %491 = vrot.lane.b32.xlu0 %v451, 64
      %v492 = vpop.permute.xlu0 %491
      %493 = vrot.lane.b32.xlu0 %v455, 64
      %v494 = vpop.permute.xlu0 %493
      %495 = vrot.lane.b32.xlu0 %v459, 64
      %v496 = vpop.permute.xlu0 %495
      %497 = vrot.lane.b32.xlu0 %v463, 64
      %v498 = vpop.permute.xlu0 %497
      %499 = vrot.lane.b32.xlu0 %v467, 64
      %v500 = vpop.permute.xlu0 %499
      %501 = vrot.lane.b32.xlu0 %v471, 64
      %v502 = vpop.permute.xlu0 %501
      %503 = vrot.lane.b32.xlu0 %v475, 64
      %v504 = vpop.permute.xlu0 %503
      %505 = vrot.lane.b32.xlu0 %v479, 64
      %v506 = vpop.permute.xlu0 %505
      %507 = vrot.lane.b32.xlu0 %v488, 64
      %v508 = vpop.permute.xlu0 %507
      %509 = vrot.lane.b32.xlu0 %v487, 64
      %v510 = vpop.permute.xlu0 %509
      %v512 = vunpack.c.l.b16 %v238
      %v513 = vpack.c.b16 %v262, %v512
      %vm514 = vcmask 1045504
      %v515 = vrot.slane %v513, 2
      %v516 = vrot.slane %v284, 2
      %v517 = vsel %vm514, %v515, %v516
      %v518 = vrot.slane %v285, 2
      %v519 = vsel %vm514, %v516, %v518
      %v520 = vrot.slane %v286, 2
      %v521 = vsel %vm514, %v518, %v520
      %v522 = vrot.slane %v287, 2
      %v523 = vsel %vm514, %v520, %v522
      %v524 = vrot.slane %v288, 2
      %v525 = vsel %vm514, %v522, %v524
      %v526 = vrot.slane %v289, 2
      %v527 = vsel %vm514, %v524, %v526
      %v528 = vrot.slane %v290, 2
      %v529 = vsel %vm514, %v526, %v528
      %v530 = vrot.slane %v291, 2
      %v531 = vsel %vm514, %v528, %v530
      %v532 = vrot.slane %v292, 2
      %v533 = vsel %vm514, %v530, %v532
      %v534 = vrot.slane %v434, 2
      %v535 = vsel %vm514, %v532, %v534
      %vm536 = vcmask 523264
      %v538 = vsel %vm536, %v283, %v386
      %v541 = vsel %vm536, %v284, %v388
      %v544 = vsel %vm536, %v285, %v390
      %v547 = vsel %vm536, %v286, %v392
      %v550 = vsel %vm536, %v287, %v394
      %v553 = vsel %vm536, %v288, %v396
      %v556 = vsel %vm536, %v289, %v398
      %v559 = vsel %vm536, %v290, %v400
      %v562 = vsel %vm536, %v291, %v402
      %v565 = vsel %vm536, %v292, %v404
      %v569 = vsel %vm536, %v293, %v406
      %v573 = vsel %vm536, %v413, %v490
      %v577 = vsel %vm536, %v415, %v492
      %v581 = vsel %vm536, %v417, %v494
      %v585 = vsel %vm536, %v419, %v496
      %v589 = vsel %vm536, %v421, %v498
      %v593 = vsel %vm536, %v423, %v500
      %v597 = vsel %vm536, %v425, %v502
      %v601 = vsel %vm536, %v427, %v504
      %v605 = vsel %vm536, %v429, %v506
      %v609 = vsel %vm536, %v431, %v508
      %v613 = vsel %vm536, %v430, %v510
      %v615 = vld [vmem:[%s2] sm:$0xf]
      %v616 = vld [vmem:[%s2 + $0x4] sm:$0xf]
      %v617 = vld [vmem:[%s2 + $0x8] sm:$0xf]
      %v618 = vld [vmem:[%s2 + $0xc] sm:$0xf]
      %v619 = vld [vmem:[%s2 + $0x10] sm:$0xf]
      %v620 = vld [vmem:[%s2 + $0x14] sm:$0xf]
      %v621 = vld [vmem:[%s2 + $0x18] sm:$0xf]
      %v622 = vld [vmem:[%s2 + $0x1c] sm:$0xf]
      %v623 = vld [vmem:[%s2 + $0x20] sm:$0xf]
      %v624 = vld [vmem:[%s2 + $0x24] sm:$0xf]
      %v625 = vld [vmem:[%s2 + $0x28] sm:$0xf]
      %v626 = vld [vmem:[%s2 + $0x2c] sm:$0xf]
      %v627 = vld [vmem:[%s2 + $0x30] sm:$0xf]
      %v628 = vld [vmem:[%s2 + $0x34] sm:$0xf]
      %v629 = vld [vmem:[%s2 + $0x38] sm:$0xf]
      %v630 = vld [vmem:[%s2 + $0x3c] sm:$0xf]
      %v631 = vld [vmem:[%s2 + $0x40] sm:$0xf]
      %v632 = vld [vmem:[%s2 + $0x44] sm:$0xf]
      %v633 = vld [vmem:[%s2 + $0x48] sm:$0xf]
      %v634 = vld [vmem:[%s2 + $0x4c] sm:$0xf]
      %v635 = vld [vmem:[%s2 + $0x50] sm:$0xf]
      %v636 = vld [vmem:[%s2 + $0x54] sm:$0xf]
      %v637 = vld [vmem:[%s2 + $0x58] sm:$0xf]
      %v638 = vld [vmem:[%s2 + $0x5c] sm:$0xf]
      %v639 = vld [vmem:[%s2 + $0x60] sm:$0xf]
      %v640 = vld [vmem:[%s2 + $0x64] sm:$0xf]
      %v641 = vld [vmem:[%s2 + $0x68] sm:$0xf]
      %v642 = vld [vmem:[%s2 + $0x6c] sm:$0xf]
      %v643 = vld [vmem:[%s2 + $0x70] sm:$0xf]
      %v644 = vld [vmem:[%s2 + $0x74] sm:$0xf]
      %v645 = vld [vmem:[%s2 + $0x78] sm:$0xf]
      %v646 = vld [vmem:[%s2 + $0x7c] sm:$0xf]
      %v647 = vld [vmem:[%s2 + $0x80] sm:$0xf]
      %v648 = vld [vmem:[%s2 + $0x84] sm:$0xf]
      %v649 = vld [vmem:[%s2 + $0x88] sm:$0xf]
      %v650 = vld [vmem:[%s2 + $0x8c] sm:$0xf]
      %v651 = vld [vmem:[%s2 + $0x90] sm:$0xf]
      %v652 = vld [vmem:[%s2 + $0x94] sm:$0xf]
      %v653 = vld [vmem:[%s2 + $0x98] sm:$0xf]
      %v654 = vld [vmem:[%s2 + $0x9c] sm:$0xf]
      %s655 = scalar_lea.vmem %s2, 160
      %v656 = vld [vmem:[%s655] sm:$0xf]
      %v657 = vld [vmem:[%s655 + $0x4] sm:$0xf]
      %v658 = vld [vmem:[%s655 + $0x8] sm:$0xf]
      %v659 = vld [vmem:[%s655 + $0xc] sm:$0xf]
      %v660 = vld [vmem:[%s655 + $0x10] sm:$0xf]
      %v661 = vld [vmem:[%s655 + $0x14] sm:$0xf]
      %v662 = vld [vmem:[%s655 + $0x18] sm:$0xf]
      %v663 = vld [vmem:[%s655 + $0x1c] sm:$0xf]
      %v664 = vld [vmem:[%s655 + $0x20] sm:$0xf]
      %v665 = vld [vmem:[%s655 + $0x24] sm:$0xf]
      %v666 = vld [vmem:[%s655 + $0x28] sm:$0xf]
      %v667 = vld [vmem:[%s655 + $0x2c] sm:$0xf]
      %v668 = vld [vmem:[%s655 + $0x30] sm:$0xf]
      %v669 = vld [vmem:[%s655 + $0x34] sm:$0xf]
      %v670 = vld [vmem:[%s655 + $0x38] sm:$0xf]
      %v671 = vld [vmem:[%s655 + $0x3c] sm:$0xf]
      %v672 = vld [vmem:[%s655 + $0x40] sm:$0xf]
      %v673 = vld [vmem:[%s655 + $0x44] sm:$0xf]
      %v674 = vld [vmem:[%s655 + $0x48] sm:$0xf]
      %v675 = vld [vmem:[%s655 + $0x4c] sm:$0xf]
      %v676 = vld [vmem:[%s655 + $0x50] sm:$0xf]
      %v677 = vld [vmem:[%s655 + $0x54] sm:$0xf]
      %v678 = vld [vmem:[%s655 + $0x58] sm:$0xf]
      %v679 = vld [vmem:[%s655 + $0x5c] sm:$0xf]
      %v680 = vld [vmem:[%s655 + $0x60] sm:$0xf]
      %v681 = vld [vmem:[%s655 + $0x64] sm:$0xf]
      %v682 = vld [vmem:[%s655 + $0x68] sm:$0xf]
      %v683 = vld [vmem:[%s655 + $0x6c] sm:$0xf]
      %v684 = vld [vmem:[%s655 + $0x70] sm:$0xf]
      %v685 = vld [vmem:[%s655 + $0x74] sm:$0xf]
      %v686 = vld [vmem:[%s655 + $0x78] sm:$0xf]
      %v687 = vld [vmem:[%s655 + $0x7c] sm:$0xf]
      %v688 = vld [vmem:[%s655 + $0x80] sm:$0xf]
      %v689 = vld [vmem:[%s655 + $0x84] sm:$0xf]
      %v690 = vld [vmem:[%s655 + $0x88] sm:$0xf]
      %v691 = vld [vmem:[%s655 + $0x8c] sm:$0xf]
      %v692 = vld [vmem:[%s655 + $0x90] sm:$0xf]
      %v693 = vld [vmem:[%s655 + $0x94] sm:$0xf]
      %v694 = vld [vmem:[%s655 + $0x98] sm:$0xf]
      %v695 = vld [vmem:[%s655 + $0x9c] sm:$0xf]
      %v736 = vunpack.c.l.b16 %v656
      %v737 = vunpack.c.l.b16 %v657
      %v738 = vunpack.c.l.b16 %v658
      %v739 = vunpack.c.l.b16 %v659
      %v740 = vunpack.c.l.b16 %v660
      %v741 = vunpack.c.l.b16 %v661
      %v742 = vunpack.c.l.b16 %v662
      %v743 = vunpack.c.l.b16 %v663
      %v744 = vunpack.c.l.b16 %v664
      %v745 = vunpack.c.l.b16 %v665
      %v746 = vunpack.c.l.b16 %v666
      %v747 = vunpack.c.l.b16 %v667
      %v748 = vunpack.c.l.b16 %v668
      %v749 = vunpack.c.l.b16 %v669
      %v750 = vunpack.c.l.b16 %v670
      %v751 = vunpack.c.l.b16 %v671
      %v752 = vunpack.c.l.b16 %v672
      %v753 = vunpack.c.l.b16 %v673
      %v754 = vunpack.c.l.b16 %v674
      %v755 = vunpack.c.l.b16 %v675
      %v756 = vunpack.c.l.b16 %v676
      %v757 = vunpack.c.l.b16 %v677
      %v758 = vunpack.c.l.b16 %v678
      %v759 = vunpack.c.l.b16 %v679
      %v760 = vunpack.c.l.b16 %v680
      %v761 = vunpack.c.l.b16 %v681
      %v762 = vunpack.c.l.b16 %v682
      %v763 = vunpack.c.l.b16 %v683
      %v764 = vunpack.c.l.b16 %v684
      %v765 = vunpack.c.l.b16 %v685
      %v766 = vunpack.c.l.b16 %v686
      %v767 = vunpack.c.l.b16 %v687
      %v768 = vunpack.c.l.b16 %v688
      %v769 = vunpack.c.l.b16 %v689
      %v770 = vunpack.c.l.b16 %v690
      %v771 = vunpack.c.l.b16 %v691
      %v772 = vunpack.c.l.b16 %v692
      %v773 = vunpack.c.l.b16 %v693
      %v774 = vunpack.c.l.b16 %v694
      %v775 = vunpack.c.l.b16 %v695
      %v776 = vpack.c.b16 %v737, %v736
      %v777 = vpack.c.b16 %v739, %v738
      %v778 = vpack.c.b16 %v741, %v740
      %v779 = vpack.c.b16 %v743, %v742
      %v780 = vpack.c.b16 %v745, %v744
      %v781 = vpack.c.b16 %v747, %v746
      %v782 = vpack.c.b16 %v749, %v748
      %v783 = vpack.c.b16 %v751, %v750
      %v784 = vpack.c.b16 %v753, %v752
      %v785 = vpack.c.b16 %v755, %v754
      %v786 = vpack.c.b16 %v757, %v756
      %v787 = vpack.c.b16 %v759, %v758
      %v788 = vpack.c.b16 %v761, %v760
      %v789 = vpack.c.b16 %v763, %v762
      %v790 = vpack.c.b16 %v765, %v764
      %v791 = vpack.c.b16 %v767, %v766
      %v792 = vpack.c.b16 %v769, %v768
      %v793 = vpack.c.b16 %v771, %v770
      %v794 = vpack.c.b16 %v773, %v772
      %v795 = vpack.c.b16 %v775, %v774
      %v817 = vsel %vm536, %v519, 0
      %v820 = vsel %vm536, %v521, 0
      %v823 = vsel %vm536, %v523, 0
      %v826 = vsel %vm536, %v525, 0
      %v829 = vsel %vm536, %v527, 0
      %v832 = vsel %vm536, %v529, 0
      %v835 = vsel %vm536, %v531, 0
      %837 = vmatpush.bf16.msra.mxu0 %v783
      %838 = vmatpush.bf16.msra.mxu0 %v782
      %839 = vmatpush.bf16.msra.mxu0 %v781
      %840 = vmatpush.bf16.msra.mxu0 %v780
      %841 = vmatpush.bf16.msra.mxu0 %v779
      %842 = vmatpush.bf16.msra.mxu0 %v778
      %843 = vmatpush.bf16.msra.mxu0 %v777
      %844 = vmatpush.bf16.msra.mxu0 %v776
      %845 = vmatmul.bf16.gmra.mxu0 %v541
      %v846 = vpop.f32.mrf.mxu0
      %v847 = vadd.f32 0.0, %v846
      %v848 = vpop.f32.mrf.mxu0
      %v849 = vadd.f32 0.0, %v848
      %850 = vmatmul.bf16.gmra.mxu0 %v544
      %v851 = vpop.f32.mrf.mxu0
      %v852 = vadd.f32 0.0, %v851
      %v853 = vpop.f32.mrf.mxu0
      %v854 = vadd.f32 0.0, %v853
      %855 = vmatmul.bf16.gmra.mxu0 %v547
      %v856 = vpop.f32.mrf.mxu0
      %v857 = vadd.f32 0.0, %v856
      %v858 = vpop.f32.mrf.mxu0
      %v859 = vadd.f32 0.0, %v858
      %860 = vmatmul.bf16.gmra.mxu0 %v550
      %v861 = vpop.f32.mrf.mxu0
      %v862 = vadd.f32 0.0, %v861
      %v863 = vpop.f32.mrf.mxu0
      %v864 = vadd.f32 0.0, %v863
      %865 = vmatmul.bf16.gmra.mxu0 %v553
      %v866 = vpop.f32.mrf.mxu0
      %v867 = vadd.f32 0.0, %v866
      %v868 = vpop.f32.mrf.mxu0
      %v869 = vadd.f32 0.0, %v868
      %870 = vmatmul.bf16.gmra.mxu0 %v556
      %v871 = vpop.f32.mrf.mxu0
      %v872 = vadd.f32 0.0, %v871
      %v873 = vpop.f32.mrf.mxu0
      %v874 = vadd.f32 0.0, %v873
      %875 = vmatmul.bf16.gmra.mxu0 %v559
      %v876 = vpop.f32.mrf.mxu0
      %v877 = vadd.f32 0.0, %v876
      %v878 = vpop.f32.mrf.mxu0
      %v879 = vadd.f32 0.0, %v878
      %880 = vdwg.mxu0
      %881 = vmatpush.bf16.msra.mxu0 %v791
      %882 = vmatpush.bf16.msra.mxu0 %v790
      %883 = vmatpush.bf16.msra.mxu0 %v789
      %884 = vmatpush.bf16.msra.mxu0 %v788
      %885 = vmatpush.bf16.msra.mxu0 %v787
      %886 = vmatpush.bf16.msra.mxu0 %v786
      %887 = vmatpush.bf16.msra.mxu0 %v785
      %888 = vmatpush.bf16.msra.mxu0 %v784
      %889 = vmatmul.bf16.gmra.mxu0 %v577
      %v890 = vpop.f32.mrf.mxu0
      %v891 = vadd.f32 %v847, %v890
      %v892 = vpop.f32.mrf.mxu0
      %v893 = vadd.f32 %v849, %v892
      %894 = vmatmul.bf16.gmra.mxu0 %v581
      %v895 = vpop.f32.mrf.mxu0
      %v896 = vadd.f32 %v852, %v895
      %v897 = vpop.f32.mrf.mxu0
      %v898 = vadd.f32 %v854, %v897
      %899 = vmatmul.bf16.gmra.mxu0 %v585
      %v900 = vpop.f32.mrf.mxu0
      %v901 = vadd.f32 %v857, %v900
      %v902 = vpop.f32.mrf.mxu0
      %v903 = vadd.f32 %v859, %v902
      %904 = vmatmul.bf16.gmra.mxu0 %v589
      %v905 = vpop.f32.mrf.mxu0
      %v906 = vadd.f32 %v862, %v905
      %v907 = vpop.f32.mrf.mxu0
      %v908 = vadd.f32 %v864, %v907
      %909 = vmatmul.bf16.gmra.mxu0 %v593
      %v910 = vpop.f32.mrf.mxu0
      %v911 = vadd.f32 %v867, %v910
      %v912 = vpop.f32.mrf.mxu0
      %v913 = vadd.f32 %v869, %v912
      %914 = vmatmul.bf16.gmra.mxu0 %v597
      %v915 = vpop.f32.mrf.mxu0
      %v916 = vadd.f32 %v872, %v915
      %v917 = vpop.f32.mrf.mxu0
      %v918 = vadd.f32 %v874, %v917
      %919 = vmatmul.bf16.gmra.mxu0 %v601
      %v920 = vpop.f32.mrf.mxu0
      %v921 = vadd.f32 %v877, %v920
      %v922 = vpop.f32.mrf.mxu0
      %v923 = vadd.f32 %v879, %v922
      %924 = vdwg.mxu0
      %925 = vmatpush.bf16.msra.mxu0 0
      %926 = vmatpush.bf16.msra.mxu0 0
      %927 = vmatpush.bf16.msra.mxu0 0
      %928 = vmatpush.bf16.msra.mxu0 0
      %929 = vmatpush.bf16.msra.mxu0 %v795
      %930 = vmatpush.bf16.msra.mxu0 %v794
      %931 = vmatpush.bf16.msra.mxu0 %v793
      %932 = vmatpush.bf16.msra.mxu0 %v792
      %933 = vmatmul.bf16.gmra.mxu0 %v817
      %v934 = vpop.f32.mrf.mxu0
      %v935 = vadd.f32 %v891, %v934
      %v936 = vpop.f32.mrf.mxu0
      %v937 = vadd.f32 %v893, %v936
      %938 = vmatmul.bf16.gmra.mxu0 %v820
      %v939 = vpop.f32.mrf.mxu0
      %v940 = vadd.f32 %v896, %v939
      %v941 = vpop.f32.mrf.mxu0
      %v942 = vadd.f32 %v898, %v941
      %943 = vmatmul.bf16.gmra.mxu0 %v823
      %v944 = vpop.f32.mrf.mxu0
      %v945 = vadd.f32 %v901, %v944
      %v946 = vpop.f32.mrf.mxu0
      %v947 = vadd.f32 %v903, %v946
      %948 = vmatmul.bf16.gmra.mxu0 %v826
      %v949 = vpop.f32.mrf.mxu0
      %v950 = vadd.f32 %v906, %v949
      %v951 = vpop.f32.mrf.mxu0
      %v952 = vadd.f32 %v908, %v951
      %953 = vmatmul.bf16.gmra.mxu0 %v829
      %v954 = vpop.f32.mrf.mxu0
      %v955 = vadd.f32 %v911, %v954
      %v956 = vpop.f32.mrf.mxu0
      %v957 = vadd.f32 %v913, %v956
      %958 = vmatmul.bf16.gmra.mxu0 %v832
      %v959 = vpop.f32.mrf.mxu0
      %v960 = vadd.f32 %v916, %v959
      %v961 = vpop.f32.mrf.mxu0
      %v962 = vadd.f32 %v918, %v961
      %963 = vmatmul.bf16.gmra.mxu0 %v835
      %v964 = vpop.f32.mrf.mxu0
      %v965 = vadd.f32 %v921, %v964
      %v966 = vpop.f32.mrf.mxu0
      %v967 = vadd.f32 %v923, %v966
      %968 = vdwg.mxu0
      %v1009 = vunpack.c.l.b16 %v615
      %v1010 = vunpack.c.l.b16 %v616
      %v1011 = vunpack.c.l.b16 %v617
      %v1012 = vunpack.c.l.b16 %v618
      %v1013 = vunpack.c.l.b16 %v619
      %v1014 = vunpack.c.l.b16 %v620
      %v1015 = vunpack.c.l.b16 %v621
      %v1016 = vunpack.c.l.b16 %v622
      %v1017 = vunpack.c.l.b16 %v623
      %v1018 = vunpack.c.l.b16 %v624
      %v1019 = vunpack.c.l.b16 %v625
      %v1020 = vunpack.c.l.b16 %v626
      %v1021 = vunpack.c.l.b16 %v627
      %v1022 = vunpack.c.l.b16 %v628
      %v1023 = vunpack.c.l.b16 %v629
      %v1024 = vunpack.c.l.b16 %v630
      %v1025 = vunpack.c.l.b16 %v631
      %v1026 = vunpack.c.l.b16 %v632
      %v1027 = vunpack.c.l.b16 %v633
      %v1028 = vunpack.c.l.b16 %v634
      %v1029 = vunpack.c.l.b16 %v635
      %v1030 = vunpack.c.l.b16 %v636
      %v1031 = vunpack.c.l.b16 %v637
      %v1032 = vunpack.c.l.b16 %v638
      %v1033 = vunpack.c.l.b16 %v639
      %v1034 = vunpack.c.l.b16 %v640
      %v1035 = vunpack.c.l.b16 %v641
      %v1036 = vunpack.c.l.b16 %v642
      %v1037 = vunpack.c.l.b16 %v643
      %v1038 = vunpack.c.l.b16 %v644
      %v1039 = vunpack.c.l.b16 %v645
      %v1040 = vunpack.c.l.b16 %v646
      %v1041 = vunpack.c.l.b16 %v647
      %v1042 = vunpack.c.l.b16 %v648
      %v1043 = vunpack.c.l.b16 %v649
      %v1044 = vunpack.c.l.b16 %v650
      %v1045 = vunpack.c.l.b16 %v651
      %v1046 = vunpack.c.l.b16 %v652
      %v1047 = vunpack.c.l.b16 %v653
      %v1048 = vunpack.c.l.b16 %v654
      %v1049 = vpack.c.b16 %v1010, %v1009
      %v1050 = vpack.c.b16 %v1012, %v1011
      %v1051 = vpack.c.b16 %v1014, %v1013
      %v1052 = vpack.c.b16 %v1016, %v1015
      %v1053 = vpack.c.b16 %v1018, %v1017
      %v1054 = vpack.c.b16 %v1020, %v1019
      %v1055 = vpack.c.b16 %v1022, %v1021
      %v1056 = vpack.c.b16 %v1024, %v1023
      %v1057 = vpack.c.b16 %v1026, %v1025
      %v1058 = vpack.c.b16 %v1028, %v1027
      %v1059 = vpack.c.b16 %v1030, %v1029
      %v1060 = vpack.c.b16 %v1032, %v1031
      %v1061 = vpack.c.b16 %v1034, %v1033
      %v1062 = vpack.c.b16 %v1036, %v1035
      %v1063 = vpack.c.b16 %v1038, %v1037
      %v1064 = vpack.c.b16 %v1040, %v1039
      %v1065 = vpack.c.b16 %v1042, %v1041
      %v1066 = vpack.c.b16 %v1044, %v1043
      %v1067 = vpack.c.b16 %v1046, %v1045
      %v1068 = vpack.c.b16 %v1048, %v1047
      %v1090 = vsel %vm536, %v517, 0
      %1092 = vmatpush.bf16.msra.mxu0 %v1056
      %1093 = vmatpush.bf16.msra.mxu0 %v1055
      %1094 = vmatpush.bf16.msra.mxu0 %v1054
      %1095 = vmatpush.bf16.msra.mxu0 %v1053
      %1096 = vmatpush.bf16.msra.mxu0 %v1052
      %1097 = vmatpush.bf16.msra.mxu0 %v1051
      %1098 = vmatpush.bf16.msra.mxu0 %v1050
      %1099 = vmatpush.bf16.msra.mxu0 %v1049
      %1100 = vmatmul.bf16.gmra.mxu0 %v538
      %v1101 = vpop.f32.mrf.mxu0
      %v1102 = vadd.f32 %v935, %v1101
      %v1103 = vpop.f32.mrf.mxu0
      %v1104 = vadd.f32 %v937, %v1103
      %1105 = vmatmul.bf16.gmra.mxu0 %v541
      %v1106 = vpop.f32.mrf.mxu0
      %v1107 = vadd.f32 %v940, %v1106
      %v1108 = vpop.f32.mrf.mxu0
      %v1109 = vadd.f32 %v942, %v1108
      %1110 = vmatmul.bf16.gmra.mxu0 %v544
      %v1111 = vpop.f32.mrf.mxu0
      %v1112 = vadd.f32 %v945, %v1111
      %v1113 = vpop.f32.mrf.mxu0
      %v1114 = vadd.f32 %v947, %v1113
      %1115 = vmatmul.bf16.gmra.mxu0 %v547
      %v1116 = vpop.f32.mrf.mxu0
      %v1117 = vadd.f32 %v950, %v1116
      %v1118 = vpop.f32.mrf.mxu0
      %v1119 = vadd.f32 %v952, %v1118
      %1120 = vmatmul.bf16.gmra.mxu0 %v550
      %v1121 = vpop.f32.mrf.mxu0
      %v1122 = vadd.f32 %v955, %v1121
      %v1123 = vpop.f32.mrf.mxu0
      %v1124 = vadd.f32 %v957, %v1123
      %1125 = vmatmul.bf16.gmra.mxu0 %v553
      %v1126 = vpop.f32.mrf.mxu0
      %v1127 = vadd.f32 %v960, %v1126
      %v1128 = vpop.f32.mrf.mxu0
      %v1129 = vadd.f32 %v962, %v1128
      %1130 = vmatmul.bf16.gmra.mxu0 %v556
      %v1131 = vpop.f32.mrf.mxu0
      %v1132 = vadd.f32 %v965, %v1131
      %v1133 = vpop.f32.mrf.mxu0
      %v1134 = vadd.f32 %v967, %v1133
      %1135 = vdwg.mxu0
      %1136 = vmatpush.bf16.msra.mxu0 %v1064
      %1137 = vmatpush.bf16.msra.mxu0 %v1063
      %1138 = vmatpush.bf16.msra.mxu0 %v1062
      %1139 = vmatpush.bf16.msra.mxu0 %v1061
      %1140 = vmatpush.bf16.msra.mxu0 %v1060
      %1141 = vmatpush.bf16.msra.mxu0 %v1059
      %1142 = vmatpush.bf16.msra.mxu0 %v1058
      %1143 = vmatpush.bf16.msra.mxu0 %v1057
      %1144 = vmatmul.bf16.gmra.mxu0 %v573
      %v1145 = vpop.f32.mrf.mxu0
      %v1146 = vadd.f32 %v1102, %v1145
      %v1147 = vpop.f32.mrf.mxu0
      %v1148 = vadd.f32 %v1104, %v1147
      %1149 = vmatmul.bf16.gmra.mxu0 %v577
      %v1150 = vpop.f32.mrf.mxu0
      %v1151 = vadd.f32 %v1107, %v1150
      %v1152 = vpop.f32.mrf.mxu0
      %v1153 = vadd.f32 %v1109, %v1152
      %1154 = vmatmul.bf16.gmra.mxu0 %v581
      %v1155 = vpop.f32.mrf.mxu0
      %v1156 = vadd.f32 %v1112, %v1155
      %v1157 = vpop.f32.mrf.mxu0
      %v1158 = vadd.f32 %v1114, %v1157
      %1159 = vmatmul.bf16.gmra.mxu0 %v585
      %v1160 = vpop.f32.mrf.mxu0
      %v1161 = vadd.f32 %v1117, %v1160
      %v1162 = vpop.f32.mrf.mxu0
      %v1163 = vadd.f32 %v1119, %v1162
      %1164 = vmatmul.bf16.gmra.mxu0 %v589
      %v1165 = vpop.f32.mrf.mxu0
      %v1166 = vadd.f32 %v1122, %v1165
      %v1167 = vpop.f32.mrf.mxu0
      %v1168 = vadd.f32 %v1124, %v1167
      %1169 = vmatmul.bf16.gmra.mxu0 %v593
      %v1170 = vpop.f32.mrf.mxu0
      %v1171 = vadd.f32 %v1127, %v1170
      %v1172 = vpop.f32.mrf.mxu0
      %v1173 = vadd.f32 %v1129, %v1172
      %1174 = vmatmul.bf16.gmra.mxu0 %v597
      %v1175 = vpop.f32.mrf.mxu0
      %v1176 = vadd.f32 %v1132, %v1175
      %v1177 = vpop.f32.mrf.mxu0
      %v1178 = vadd.f32 %v1134, %v1177
      %1179 = vdwg.mxu0
      %1180 = vmatpush.bf16.msra.mxu0 0
      %1181 = vmatpush.bf16.msra.mxu0 0
      %1182 = vmatpush.bf16.msra.mxu0 0
      %1183 = vmatpush.bf16.msra.mxu0 0
      %1184 = vmatpush.bf16.msra.mxu0 %v1068
      %1185 = vmatpush.bf16.msra.mxu0 %v1067
      %1186 = vmatpush.bf16.msra.mxu0 %v1066
      %1187 = vmatpush.bf16.msra.mxu0 %v1065
      %1188 = vmatmul.bf16.gmra.mxu0 %v1090
      %v1189 = vpop.f32.mrf.mxu0
      %v1190 = vadd.f32 %v1146, %v1189
      %v1191 = vpop.f32.mrf.mxu0
      %v1192 = vadd.f32 %v1148, %v1191
      %1193 = vmatmul.bf16.gmra.mxu0 %v817
      %v1194 = vpop.f32.mrf.mxu0
      %v1195 = vadd.f32 %v1151, %v1194
      %v1196 = vpop.f32.mrf.mxu0
      %v1197 = vadd.f32 %v1153, %v1196
      %1198 = vmatmul.bf16.gmra.mxu0 %v820
      %v1199 = vpop.f32.mrf.mxu0
      %v1200 = vadd.f32 %v1156, %v1199
      %v1201 = vpop.f32.mrf.mxu0
      %v1202 = vadd.f32 %v1158, %v1201
      %1203 = vmatmul.bf16.gmra.mxu0 %v823
      %v1204 = vpop.f32.mrf.mxu0
      %v1205 = vadd.f32 %v1161, %v1204
      %v1206 = vpop.f32.mrf.mxu0
      %v1207 = vadd.f32 %v1163, %v1206
      %1208 = vmatmul.bf16.gmra.mxu0 %v826
      %v1209 = vpop.f32.mrf.mxu0
      %v1210 = vadd.f32 %v1166, %v1209
      %v1211 = vpop.f32.mrf.mxu0
      %v1212 = vadd.f32 %v1168, %v1211
      %1213 = vmatmul.bf16.gmra.mxu0 %v829
      %v1214 = vpop.f32.mrf.mxu0
      %v1215 = vadd.f32 %v1171, %v1214
      %v1216 = vpop.f32.mrf.mxu0
      %v1217 = vadd.f32 %v1173, %v1216
      %1218 = vmatmul.bf16.gmra.mxu0 %v832
      %v1219 = vpop.f32.mrf.mxu0
      %v1220 = vadd.f32 %v1176, %v1219
      %v1221 = vpop.f32.mrf.mxu0
      %v1222 = vadd.f32 %v1178, %v1221
      %1223 = vdwg.mxu0
      %s1224 = scalar_lea.vmem %s2, 320
      %v1225 = vld [vmem:[%s1224] sm:$0xf]
      %v1226 = vld [vmem:[%s1224 + $0x4] sm:$0xf]
      %v1227 = vld [vmem:[%s1224 + $0x8] sm:$0xf]
      %v1228 = vld [vmem:[%s1224 + $0xc] sm:$0xf]
      %v1229 = vld [vmem:[%s1224 + $0x10] sm:$0xf]
      %v1230 = vld [vmem:[%s1224 + $0x14] sm:$0xf]
      %v1231 = vld [vmem:[%s1224 + $0x18] sm:$0xf]
      %v1232 = vld [vmem:[%s1224 + $0x1c] sm:$0xf]
      %v1233 = vld [vmem:[%s1224 + $0x20] sm:$0xf]
      %v1234 = vld [vmem:[%s1224 + $0x24] sm:$0xf]
      %v1235 = vld [vmem:[%s1224 + $0x28] sm:$0xf]
      %v1236 = vld [vmem:[%s1224 + $0x2c] sm:$0xf]
      %v1237 = vld [vmem:[%s1224 + $0x30] sm:$0xf]
      %v1238 = vld [vmem:[%s1224 + $0x34] sm:$0xf]
      %v1239 = vld [vmem:[%s1224 + $0x38] sm:$0xf]
      %v1240 = vld [vmem:[%s1224 + $0x3c] sm:$0xf]
      %v1241 = vld [vmem:[%s1224 + $0x40] sm:$0xf]
      %v1242 = vld [vmem:[%s1224 + $0x44] sm:$0xf]
      %v1243 = vld [vmem:[%s1224 + $0x48] sm:$0xf]
      %v1244 = vld [vmem:[%s1224 + $0x4c] sm:$0xf]
      %v1245 = vld [vmem:[%s1224 + $0x50] sm:$0xf]
      %v1246 = vld [vmem:[%s1224 + $0x54] sm:$0xf]
      %v1247 = vld [vmem:[%s1224 + $0x58] sm:$0xf]
      %v1248 = vld [vmem:[%s1224 + $0x5c] sm:$0xf]
      %v1249 = vld [vmem:[%s1224 + $0x60] sm:$0xf]
      %v1250 = vld [vmem:[%s1224 + $0x64] sm:$0xf]
      %v1251 = vld [vmem:[%s1224 + $0x68] sm:$0xf]
      %v1252 = vld [vmem:[%s1224 + $0x6c] sm:$0xf]
      %v1253 = vld [vmem:[%s1224 + $0x70] sm:$0xf]
      %v1254 = vld [vmem:[%s1224 + $0x74] sm:$0xf]
      %v1255 = vld [vmem:[%s1224 + $0x78] sm:$0xf]
      %v1256 = vld [vmem:[%s1224 + $0x7c] sm:$0xf]
      %v1257 = vld [vmem:[%s1224 + $0x80] sm:$0xf]
      %v1258 = vld [vmem:[%s1224 + $0x84] sm:$0xf]
      %v1259 = vld [vmem:[%s1224 + $0x88] sm:$0xf]
      %v1260 = vld [vmem:[%s1224 + $0x8c] sm:$0xf]
      %v1261 = vld [vmem:[%s1224 + $0x90] sm:$0xf]
      %v1262 = vld [vmem:[%s1224 + $0x94] sm:$0xf]
      %v1263 = vld [vmem:[%s1224 + $0x98] sm:$0xf]
      %v1264 = vld [vmem:[%s1224 + $0x9c] sm:$0xf]
      %v1305 = vunpack.c.l.b16 %v1225
      %v1306 = vunpack.c.l.b16 %v1226
      %v1307 = vunpack.c.l.b16 %v1227
      %v1308 = vunpack.c.l.b16 %v1228
      %v1309 = vunpack.c.l.b16 %v1229
      %v1310 = vunpack.c.l.b16 %v1230
      %v1311 = vunpack.c.l.b16 %v1231
      %v1312 = vunpack.c.l.b16 %v1232
      %v1313 = vunpack.c.l.b16 %v1233
      %v1314 = vunpack.c.l.b16 %v1234
      %v1315 = vunpack.c.l.b16 %v1235
      %v1316 = vunpack.c.l.b16 %v1236
      %v1317 = vunpack.c.l.b16 %v1237
      %v1318 = vunpack.c.l.b16 %v1238
      %v1319 = vunpack.c.l.b16 %v1239
      %v1320 = vunpack.c.l.b16 %v1240
      %v1321 = vunpack.c.l.b16 %v1241
      %v1322 = vunpack.c.l.b16 %v1242
      %v1323 = vunpack.c.l.b16 %v1243
      %v1324 = vunpack.c.l.b16 %v1244
      %v1325 = vunpack.c.l.b16 %v1245
      %v1326 = vunpack.c.l.b16 %v1246
      %v1327 = vunpack.c.l.b16 %v1247
      %v1328 = vunpack.c.l.b16 %v1248
      %v1329 = vunpack.c.l.b16 %v1249
      %v1330 = vunpack.c.l.b16 %v1250
      %v1331 = vunpack.c.l.b16 %v1251
      %v1332 = vunpack.c.l.b16 %v1252
      %v1333 = vunpack.c.l.b16 %v1253
      %v1334 = vunpack.c.l.b16 %v1254
      %v1335 = vunpack.c.l.b16 %v1255
      %v1336 = vunpack.c.l.b16 %v1256
      %v1337 = vunpack.c.l.b16 %v1257
      %v1338 = vunpack.c.l.b16 %v1258
      %v1339 = vunpack.c.l.b16 %v1259
      %v1340 = vunpack.c.l.b16 %v1260
      %v1341 = vunpack.c.l.b16 %v1261
      %v1342 = vunpack.c.l.b16 %v1262
      %v1343 = vunpack.c.l.b16 %v1263
      %v1344 = vunpack.c.l.b16 %v1264
      %v1345 = vpack.c.b16 %v1306, %v1305
      %v1346 = vpack.c.b16 %v1308, %v1307
      %v1347 = vpack.c.b16 %v1310, %v1309
      %v1348 = vpack.c.b16 %v1312, %v1311
      %v1349 = vpack.c.b16 %v1314, %v1313
      %v1350 = vpack.c.b16 %v1316, %v1315
      %v1351 = vpack.c.b16 %v1318, %v1317
      %v1352 = vpack.c.b16 %v1320, %v1319
      %v1353 = vpack.c.b16 %v1322, %v1321
      %v1354 = vpack.c.b16 %v1324, %v1323
      %v1355 = vpack.c.b16 %v1326, %v1325
      %v1356 = vpack.c.b16 %v1328, %v1327
      %v1357 = vpack.c.b16 %v1330, %v1329
      %v1358 = vpack.c.b16 %v1332, %v1331
      %v1359 = vpack.c.b16 %v1334, %v1333
      %v1360 = vpack.c.b16 %v1336, %v1335
      %v1361 = vpack.c.b16 %v1338, %v1337
      %v1362 = vpack.c.b16 %v1340, %v1339
      %v1363 = vpack.c.b16 %v1342, %v1341
      %v1364 = vpack.c.b16 %v1344, %v1343
      %v1386 = vsel %vm536, %v533, 0
      %1388 = vmatpush.bf16.msra.mxu0 %v1352
      %1389 = vmatpush.bf16.msra.mxu0 %v1351
      %1390 = vmatpush.bf16.msra.mxu0 %v1350
      %1391 = vmatpush.bf16.msra.mxu0 %v1349
      %1392 = vmatpush.bf16.msra.mxu0 %v1348
      %1393 = vmatpush.bf16.msra.mxu0 %v1347
      %1394 = vmatpush.bf16.msra.mxu0 %v1346
      %1395 = vmatpush.bf16.msra.mxu0 %v1345
      %1396 = vmatmul.bf16.gmra.mxu0 %v544
      %v1397 = vpop.f32.mrf.mxu0
      %v1398 = vadd.f32 0.0, %v1397
      %v1399 = vpop.f32.mrf.mxu0
      %v1400 = vadd.f32 0.0, %v1399
      %1401 = vmatmul.bf16.gmra.mxu0 %v547
      %v1402 = vpop.f32.mrf.mxu0
      %v1403 = vadd.f32 0.0, %v1402
      %v1404 = vpop.f32.mrf.mxu0
      %v1405 = vadd.f32 0.0, %v1404
      %1406 = vmatmul.bf16.gmra.mxu0 %v550
      %v1407 = vpop.f32.mrf.mxu0
      %v1408 = vadd.f32 0.0, %v1407
      %v1409 = vpop.f32.mrf.mxu0
      %v1410 = vadd.f32 0.0, %v1409
      %1411 = vmatmul.bf16.gmra.mxu0 %v553
      %v1412 = vpop.f32.mrf.mxu0
      %v1413 = vadd.f32 0.0, %v1412
      %v1414 = vpop.f32.mrf.mxu0
      %v1415 = vadd.f32 0.0, %v1414
      %1416 = vmatmul.bf16.gmra.mxu0 %v556
      %v1417 = vpop.f32.mrf.mxu0
      %v1418 = vadd.f32 0.0, %v1417
      %v1419 = vpop.f32.mrf.mxu0
      %v1420 = vadd.f32 0.0, %v1419
      %1421 = vmatmul.bf16.gmra.mxu0 %v559
      %v1422 = vpop.f32.mrf.mxu0
      %v1423 = vadd.f32 0.0, %v1422
      %v1424 = vpop.f32.mrf.mxu0
      %v1425 = vadd.f32 0.0, %v1424
      %1426 = vmatmul.bf16.gmra.mxu0 %v562
      %v1427 = vpop.f32.mrf.mxu0
      %v1428 = vadd.f32 0.0, %v1427
      %v1429 = vpop.f32.mrf.mxu0
      %v1430 = vadd.f32 0.0, %v1429
      %1431 = vdwg.mxu0
      %1432 = vmatpush.bf16.msra.mxu0 %v1360
      %1433 = vmatpush.bf16.msra.mxu0 %v1359
      %1434 = vmatpush.bf16.msra.mxu0 %v1358
      %1435 = vmatpush.bf16.msra.mxu0 %v1357
      %1436 = vmatpush.bf16.msra.mxu0 %v1356
      %1437 = vmatpush.bf16.msra.mxu0 %v1355
      %1438 = vmatpush.bf16.msra.mxu0 %v1354
      %1439 = vmatpush.bf16.msra.mxu0 %v1353
      %1440 = vmatmul.bf16.gmra.mxu0 %v581
      %v1441 = vpop.f32.mrf.mxu0
      %v1442 = vadd.f32 %v1398, %v1441
      %v1443 = vpop.f32.mrf.mxu0
      %v1444 = vadd.f32 %v1400, %v1443
      %1445 = vmatmul.bf16.gmra.mxu0 %v585
      %v1446 = vpop.f32.mrf.mxu0
      %v1447 = vadd.f32 %v1403, %v1446
      %v1448 = vpop.f32.mrf.mxu0
      %v1449 = vadd.f32 %v1405, %v1448
      %1450 = vmatmul.bf16.gmra.mxu0 %v589
      %v1451 = vpop.f32.mrf.mxu0
      %v1452 = vadd.f32 %v1408, %v1451
      %v1453 = vpop.f32.mrf.mxu0
      %v1454 = vadd.f32 %v1410, %v1453
      %1455 = vmatmul.bf16.gmra.mxu0 %v593
      %v1456 = vpop.f32.mrf.mxu0
      %v1457 = vadd.f32 %v1413, %v1456
      %v1458 = vpop.f32.mrf.mxu0
      %v1459 = vadd.f32 %v1415, %v1458
      %1460 = vmatmul.bf16.gmra.mxu0 %v597
      %v1461 = vpop.f32.mrf.mxu0
      %v1462 = vadd.f32 %v1418, %v1461
      %v1463 = vpop.f32.mrf.mxu0
      %v1464 = vadd.f32 %v1420, %v1463
      %1465 = vmatmul.bf16.gmra.mxu0 %v601
      %v1466 = vpop.f32.mrf.mxu0
      %v1467 = vadd.f32 %v1423, %v1466
      %v1468 = vpop.f32.mrf.mxu0
      %v1469 = vadd.f32 %v1425, %v1468
      %1470 = vmatmul.bf16.gmra.mxu0 %v605
      %v1471 = vpop.f32.mrf.mxu0
      %v1472 = vadd.f32 %v1428, %v1471
      %v1473 = vpop.f32.mrf.mxu0
      %v1474 = vadd.f32 %v1430, %v1473
      %1475 = vdwg.mxu0
      %1476 = vmatpush.bf16.msra.mxu0 0
      %1477 = vmatpush.bf16.msra.mxu0 0
      %1478 = vmatpush.bf16.msra.mxu0 0
      %1479 = vmatpush.bf16.msra.mxu0 0
      %1480 = vmatpush.bf16.msra.mxu0 %v1364
      %1481 = vmatpush.bf16.msra.mxu0 %v1363
      %1482 = vmatpush.bf16.msra.mxu0 %v1362
      %1483 = vmatpush.bf16.msra.mxu0 %v1361
      %1484 = vmatmul.bf16.gmra.mxu0 %v820
      %v1485 = vpop.f32.mrf.mxu0
      %v1486 = vadd.f32 %v1442, %v1485
      %v1487 = vpop.f32.mrf.mxu0
      %v1488 = vadd.f32 %v1444, %v1487
      %1489 = vmatmul.bf16.gmra.mxu0 %v823
      %v1490 = vpop.f32.mrf.mxu0
      %v1491 = vadd.f32 %v1447, %v1490
      %v1492 = vpop.f32.mrf.mxu0
      %v1493 = vadd.f32 %v1449, %v1492
      %1494 = vmatmul.bf16.gmra.mxu0 %v826
      %v1495 = vpop.f32.mrf.mxu0
      %v1496 = vadd.f32 %v1452, %v1495
      %v1497 = vpop.f32.mrf.mxu0
      %v1498 = vadd.f32 %v1454, %v1497
      %1499 = vmatmul.bf16.gmra.mxu0 %v829
      %v1500 = vpop.f32.mrf.mxu0
      %v1501 = vadd.f32 %v1457, %v1500
      %v1502 = vpop.f32.mrf.mxu0
      %v1503 = vadd.f32 %v1459, %v1502
      %1504 = vmatmul.bf16.gmra.mxu0 %v832
      %v1505 = vpop.f32.mrf.mxu0
      %v1506 = vadd.f32 %v1462, %v1505
      %v1507 = vpop.f32.mrf.mxu0
      %v1508 = vadd.f32 %v1464, %v1507
      %1509 = vmatmul.bf16.gmra.mxu0 %v835
      %v1510 = vpop.f32.mrf.mxu0
      %v1511 = vadd.f32 %v1467, %v1510
      %v1512 = vpop.f32.mrf.mxu0
      %v1513 = vadd.f32 %v1469, %v1512
      %1514 = vmatmul.bf16.gmra.mxu0 %v1386
      %v1515 = vpop.f32.mrf.mxu0
      %v1516 = vadd.f32 %v1472, %v1515
      %v1517 = vpop.f32.mrf.mxu0
      %v1518 = vadd.f32 %v1474, %v1517
      %1519 = vdwg.mxu0
      %v1520 = vadd.f32 %v1190, %v1486
      %v1521 = vadd.f32 %v1192, %v1488
      %v1522 = vadd.f32 %v1195, %v1491
      %v1523 = vadd.f32 %v1197, %v1493
      %v1524 = vadd.f32 %v1200, %v1496
      %v1525 = vadd.f32 %v1202, %v1498
      %v1526 = vadd.f32 %v1205, %v1501
      %v1527 = vadd.f32 %v1207, %v1503
      %v1528 = vadd.f32 %v1210, %v1506
      %v1529 = vadd.f32 %v1212, %v1508
      %v1530 = vadd.f32 %v1215, %v1511
      %v1531 = vadd.f32 %v1217, %v1513
      %v1532 = vadd.f32 %v1220, %v1516
      %v1533 = vadd.f32 %v1222, %v1518
      %s1534 = scalar_lea.vmem %s2, 480
      %v1535 = vld [vmem:[%s1534] sm:$0xf]
      %v1536 = vld [vmem:[%s1534 + $0x4] sm:$0xf]
      %v1537 = vld [vmem:[%s1534 + $0x8] sm:$0xf]
      %v1538 = vld [vmem:[%s1534 + $0xc] sm:$0xf]
      %v1539 = vld [vmem:[%s1534 + $0x10] sm:$0xf]
      %v1540 = vld [vmem:[%s1534 + $0x14] sm:$0xf]
      %v1541 = vld [vmem:[%s1534 + $0x18] sm:$0xf]
      %v1542 = vld [vmem:[%s1534 + $0x1c] sm:$0xf]
      %v1543 = vld [vmem:[%s1534 + $0x20] sm:$0xf]
      %v1544 = vld [vmem:[%s1534 + $0x24] sm:$0xf]
      %v1545 = vld [vmem:[%s1534 + $0x28] sm:$0xf]
      %v1546 = vld [vmem:[%s1534 + $0x2c] sm:$0xf]
      %v1547 = vld [vmem:[%s1534 + $0x30] sm:$0xf]
      %v1548 = vld [vmem:[%s1534 + $0x34] sm:$0xf]
      %v1549 = vld [vmem:[%s1534 + $0x38] sm:$0xf]
      %v1550 = vld [vmem:[%s1534 + $0x3c] sm:$0xf]
      %v1551 = vld [vmem:[%s1534 + $0x40] sm:$0xf]
      %v1552 = vld [vmem:[%s1534 + $0x44] sm:$0xf]
      %v1553 = vld [vmem:[%s1534 + $0x48] sm:$0xf]
      %v1554 = vld [vmem:[%s1534 + $0x4c] sm:$0xf]
      %v1555 = vld [vmem:[%s1534 + $0x50] sm:$0xf]
      %v1556 = vld [vmem:[%s1534 + $0x54] sm:$0xf]
      %v1557 = vld [vmem:[%s1534 + $0x58] sm:$0xf]
      %v1558 = vld [vmem:[%s1534 + $0x5c] sm:$0xf]
      %v1559 = vld [vmem:[%s1534 + $0x60] sm:$0xf]
      %v1560 = vld [vmem:[%s1534 + $0x64] sm:$0xf]
      %v1561 = vld [vmem:[%s1534 + $0x68] sm:$0xf]
      %v1562 = vld [vmem:[%s1534 + $0x6c] sm:$0xf]
      %v1563 = vld [vmem:[%s1534 + $0x70] sm:$0xf]
      %v1564 = vld [vmem:[%s1534 + $0x74] sm:$0xf]
      %v1565 = vld [vmem:[%s1534 + $0x78] sm:$0xf]
      %v1566 = vld [vmem:[%s1534 + $0x7c] sm:$0xf]
      %v1567 = vld [vmem:[%s1534 + $0x80] sm:$0xf]
      %v1568 = vld [vmem:[%s1534 + $0x84] sm:$0xf]
      %v1569 = vld [vmem:[%s1534 + $0x88] sm:$0xf]
      %v1570 = vld [vmem:[%s1534 + $0x8c] sm:$0xf]
      %v1571 = vld [vmem:[%s1534 + $0x90] sm:$0xf]
      %v1572 = vld [vmem:[%s1534 + $0x94] sm:$0xf]
      %v1573 = vld [vmem:[%s1534 + $0x98] sm:$0xf]
      %v1574 = vld [vmem:[%s1534 + $0x9c] sm:$0xf]
      %v1615 = vunpack.c.l.b16 %v1535
      %v1616 = vunpack.c.l.b16 %v1536
      %v1617 = vunpack.c.l.b16 %v1537
      %v1618 = vunpack.c.l.b16 %v1538
      %v1619 = vunpack.c.l.b16 %v1539
      %v1620 = vunpack.c.l.b16 %v1540
      %v1621 = vunpack.c.l.b16 %v1541
      %v1622 = vunpack.c.l.b16 %v1542
      %v1623 = vunpack.c.l.b16 %v1543
      %v1624 = vunpack.c.l.b16 %v1544
      %v1625 = vunpack.c.l.b16 %v1545
      %v1626 = vunpack.c.l.b16 %v1546
      %v1627 = vunpack.c.l.b16 %v1547
      %v1628 = vunpack.c.l.b16 %v1548
      %v1629 = vunpack.c.l.b16 %v1549
      %v1630 = vunpack.c.l.b16 %v1550
      %v1631 = vunpack.c.l.b16 %v1551
      %v1632 = vunpack.c.l.b16 %v1552
      %v1633 = vunpack.c.l.b16 %v1553
      %v1634 = vunpack.c.l.b16 %v1554
      %v1635 = vunpack.c.l.b16 %v1555
      %v1636 = vunpack.c.l.b16 %v1556
      %v1637 = vunpack.c.l.b16 %v1557
      %v1638 = vunpack.c.l.b16 %v1558
      %v1639 = vunpack.c.l.b16 %v1559
      %v1640 = vunpack.c.l.b16 %v1560
      %v1641 = vunpack.c.l.b16 %v1561
      %v1642 = vunpack.c.l.b16 %v1562
      %v1643 = vunpack.c.l.b16 %v1563
      %v1644 = vunpack.c.l.b16 %v1564
      %v1645 = vunpack.c.l.b16 %v1565
      %v1646 = vunpack.c.l.b16 %v1566
      %v1647 = vunpack.c.l.b16 %v1567
      %v1648 = vunpack.c.l.b16 %v1568
      %v1649 = vunpack.c.l.b16 %v1569
      %v1650 = vunpack.c.l.b16 %v1570
      %v1651 = vunpack.c.l.b16 %v1571
      %v1652 = vunpack.c.l.b16 %v1572
      %v1653 = vunpack.c.l.b16 %v1573
      %v1654 = vunpack.c.l.b16 %v1574
      %v1655 = vpack.c.b16 %v1616, %v1615
      %v1656 = vpack.c.b16 %v1618, %v1617
      %v1657 = vpack.c.b16 %v1620, %v1619
      %v1658 = vpack.c.b16 %v1622, %v1621
      %v1659 = vpack.c.b16 %v1624, %v1623
      %v1660 = vpack.c.b16 %v1626, %v1625
      %v1661 = vpack.c.b16 %v1628, %v1627
      %v1662 = vpack.c.b16 %v1630, %v1629
      %v1663 = vpack.c.b16 %v1632, %v1631
      %v1664 = vpack.c.b16 %v1634, %v1633
      %v1665 = vpack.c.b16 %v1636, %v1635
      %v1666 = vpack.c.b16 %v1638, %v1637
      %v1667 = vpack.c.b16 %v1640, %v1639
      %v1668 = vpack.c.b16 %v1642, %v1641
      %v1669 = vpack.c.b16 %v1644, %v1643
      %v1670 = vpack.c.b16 %v1646, %v1645
      %v1671 = vpack.c.b16 %v1648, %v1647
      %v1672 = vpack.c.b16 %v1650, %v1649
      %v1673 = vpack.c.b16 %v1652, %v1651
      %v1674 = vpack.c.b16 %v1654, %v1653
      %v1696 = vsel %vm536, %v535, 0
      %1698 = vmatpush.bf16.msra.mxu0 %v1662
      %1699 = vmatpush.bf16.msra.mxu0 %v1661
      %1700 = vmatpush.bf16.msra.mxu0 %v1660
      %1701 = vmatpush.bf16.msra.mxu0 %v1659
      %1702 = vmatpush.bf16.msra.mxu0 %v1658
      %1703 = vmatpush.bf16.msra.mxu0 %v1657
      %1704 = vmatpush.bf16.msra.mxu0 %v1656
      %1705 = vmatpush.bf16.msra.mxu0 %v1655
      %1706 = vmatmul.bf16.gmra.mxu0 %v547
      %v1707 = vpop.f32.mrf.mxu0
      %v1708 = vadd.f32 0.0, %v1707
      %v1709 = vpop.f32.mrf.mxu0
      %v1710 = vadd.f32 0.0, %v1709
      %1711 = vmatmul.bf16.gmra.mxu0 %v550
      %v1712 = vpop.f32.mrf.mxu0
      %v1713 = vadd.f32 0.0, %v1712
      %v1714 = vpop.f32.mrf.mxu0
      %v1715 = vadd.f32 0.0, %v1714
      %1716 = vmatmul.bf16.gmra.mxu0 %v553
      %v1717 = vpop.f32.mrf.mxu0
      %v1718 = vadd.f32 0.0, %v1717
      %v1719 = vpop.f32.mrf.mxu0
      %v1720 = vadd.f32 0.0, %v1719
      %1721 = vmatmul.bf16.gmra.mxu0 %v556
      %v1722 = vpop.f32.mrf.mxu0
      %v1723 = vadd.f32 0.0, %v1722
      %v1724 = vpop.f32.mrf.mxu0
      %v1725 = vadd.f32 0.0, %v1724
      %1726 = vmatmul.bf16.gmra.mxu0 %v559
      %v1727 = vpop.f32.mrf.mxu0
      %v1728 = vadd.f32 0.0, %v1727
      %v1729 = vpop.f32.mrf.mxu0
      %v1730 = vadd.f32 0.0, %v1729
      %1731 = vmatmul.bf16.gmra.mxu0 %v562
      %v1732 = vpop.f32.mrf.mxu0
      %v1733 = vadd.f32 0.0, %v1732
      %v1734 = vpop.f32.mrf.mxu0
      %v1735 = vadd.f32 0.0, %v1734
      %1736 = vmatmul.bf16.gmra.mxu0 %v565
      %v1737 = vpop.f32.mrf.mxu0
      %v1738 = vadd.f32 0.0, %v1737
      %v1739 = vpop.f32.mrf.mxu0
      %v1740 = vadd.f32 0.0, %v1739
      %1741 = vdwg.mxu0
      %1742 = vmatpush.bf16.msra.mxu0 %v1670
      %1743 = vmatpush.bf16.msra.mxu0 %v1669
      %1744 = vmatpush.bf16.msra.mxu0 %v1668
      %1745 = vmatpush.bf16.msra.mxu0 %v1667
      %1746 = vmatpush.bf16.msra.mxu0 %v1666
      %1747 = vmatpush.bf16.msra.mxu0 %v1665
      %1748 = vmatpush.bf16.msra.mxu0 %v1664
      %1749 = vmatpush.bf16.msra.mxu0 %v1663
      %1750 = vmatmul.bf16.gmra.mxu0 %v585
      %v1751 = vpop.f32.mrf.mxu0
      %v1752 = vadd.f32 %v1708, %v1751
      %v1753 = vpop.f32.mrf.mxu0
      %v1754 = vadd.f32 %v1710, %v1753
      %1755 = vmatmul.bf16.gmra.mxu0 %v589
      %v1756 = vpop.f32.mrf.mxu0
      %v1757 = vadd.f32 %v1713, %v1756
      %v1758 = vpop.f32.mrf.mxu0
      %v1759 = vadd.f32 %v1715, %v1758
      %1760 = vmatmul.bf16.gmra.mxu0 %v593
      %v1761 = vpop.f32.mrf.mxu0
      %v1762 = vadd.f32 %v1718, %v1761
      %v1763 = vpop.f32.mrf.mxu0
      %v1764 = vadd.f32 %v1720, %v1763
      %1765 = vmatmul.bf16.gmra.mxu0 %v597
      %v1766 = vpop.f32.mrf.mxu0
      %v1767 = vadd.f32 %v1723, %v1766
      %v1768 = vpop.f32.mrf.mxu0
      %v1769 = vadd.f32 %v1725, %v1768
      %1770 = vmatmul.bf16.gmra.mxu0 %v601
      %v1771 = vpop.f32.mrf.mxu0
      %v1772 = vadd.f32 %v1728, %v1771
      %v1773 = vpop.f32.mrf.mxu0
      %v1774 = vadd.f32 %v1730, %v1773
      %1775 = vmatmul.bf16.gmra.mxu0 %v605
      %v1776 = vpop.f32.mrf.mxu0
      %v1777 = vadd.f32 %v1733, %v1776
      %v1778 = vpop.f32.mrf.mxu0
      %v1779 = vadd.f32 %v1735, %v1778
      %1780 = vmatmul.bf16.gmra.mxu0 %v609
      %v1781 = vpop.f32.mrf.mxu0
      %v1782 = vadd.f32 %v1738, %v1781
      %v1783 = vpop.f32.mrf.mxu0
      %v1784 = vadd.f32 %v1740, %v1783
      %1785 = vdwg.mxu0
      %1786 = vmatpush.bf16.msra.mxu0 0
      %1787 = vmatpush.bf16.msra.mxu0 0
      %1788 = vmatpush.bf16.msra.mxu0 0
      %1789 = vmatpush.bf16.msra.mxu0 0
      %1790 = vmatpush.bf16.msra.mxu0 %v1674
      %1791 = vmatpush.bf16.msra.mxu0 %v1673
      %1792 = vmatpush.bf16.msra.mxu0 %v1672
      %1793 = vmatpush.bf16.msra.mxu0 %v1671
      %1794 = vmatmul.bf16.gmra.mxu0 %v823
      %v1795 = vpop.f32.mrf.mxu0
      %v1796 = vadd.f32 %v1752, %v1795
      %v1797 = vpop.f32.mrf.mxu0
      %v1798 = vadd.f32 %v1754, %v1797
      %1799 = vmatmul.bf16.gmra.mxu0 %v826
      %v1800 = vpop.f32.mrf.mxu0
      %v1801 = vadd.f32 %v1757, %v1800
      %v1802 = vpop.f32.mrf.mxu0
      %v1803 = vadd.f32 %v1759, %v1802
      %1804 = vmatmul.bf16.gmra.mxu0 %v829
      %v1805 = vpop.f32.mrf.mxu0
      %v1806 = vadd.f32 %v1762, %v1805
      %v1807 = vpop.f32.mrf.mxu0
      %v1808 = vadd.f32 %v1764, %v1807
      %1809 = vmatmul.bf16.gmra.mxu0 %v832
      %v1810 = vpop.f32.mrf.mxu0
      %v1811 = vadd.f32 %v1767, %v1810
      %v1812 = vpop.f32.mrf.mxu0
      %v1813 = vadd.f32 %v1769, %v1812
      %1814 = vmatmul.bf16.gmra.mxu0 %v835
      %v1815 = vpop.f32.mrf.mxu0
      %v1816 = vadd.f32 %v1772, %v1815
      %v1817 = vpop.f32.mrf.mxu0
      %v1818 = vadd.f32 %v1774, %v1817
      %1819 = vmatmul.bf16.gmra.mxu0 %v1386
      %v1820 = vpop.f32.mrf.mxu0
      %v1821 = vadd.f32 %v1777, %v1820
      %v1822 = vpop.f32.mrf.mxu0
      %v1823 = vadd.f32 %v1779, %v1822
      %1824 = vmatmul.bf16.gmra.mxu0 %v1696
      %v1825 = vpop.f32.mrf.mxu0
      %v1826 = vadd.f32 %v1782, %v1825
      %v1827 = vpop.f32.mrf.mxu0
      %v1828 = vadd.f32 %v1784, %v1827
      %1829 = vdwg.mxu0
      %v1830 = vadd.f32 %v1520, %v1796
      %v1831 = vadd.f32 %v1521, %v1798
      %v1832 = vadd.f32 %v1522, %v1801
      %v1833 = vadd.f32 %v1523, %v1803
      %v1834 = vadd.f32 %v1524, %v1806
      %v1835 = vadd.f32 %v1525, %v1808
      %v1836 = vadd.f32 %v1526, %v1811
      %v1837 = vadd.f32 %v1527, %v1813
      %v1838 = vadd.f32 %v1528, %v1816
      %v1839 = vadd.f32 %v1529, %v1818
      %v1840 = vadd.f32 %v1530, %v1821
      %v1841 = vadd.f32 %v1531, %v1823
      %v1842 = vadd.f32 %v1532, %v1826
      %v1843 = vadd.f32 %v1533, %v1828
      %s1844 = scalar_lea.vmem %s2, 640
      %v1845 = vld [vmem:[%s1844] sm:$0xf]
      %v1846 = vld [vmem:[%s1844 + $0x4] sm:$0xf]
      %v1847 = vld [vmem:[%s1844 + $0x8] sm:$0xf]
      %v1848 = vld [vmem:[%s1844 + $0xc] sm:$0xf]
      %v1849 = vld [vmem:[%s1844 + $0x10] sm:$0xf]
      %v1850 = vld [vmem:[%s1844 + $0x14] sm:$0xf]
      %v1851 = vld [vmem:[%s1844 + $0x18] sm:$0xf]
      %v1852 = vld [vmem:[%s1844 + $0x1c] sm:$0xf]
      %v1853 = vld [vmem:[%s1844 + $0x20] sm:$0xf]
      %v1854 = vld [vmem:[%s1844 + $0x24] sm:$0xf]
      %v1855 = vld [vmem:[%s1844 + $0x28] sm:$0xf]
      %v1856 = vld [vmem:[%s1844 + $0x2c] sm:$0xf]
      %v1857 = vld [vmem:[%s1844 + $0x30] sm:$0xf]
      %v1858 = vld [vmem:[%s1844 + $0x34] sm:$0xf]
      %v1859 = vld [vmem:[%s1844 + $0x38] sm:$0xf]
      %v1860 = vld [vmem:[%s1844 + $0x3c] sm:$0xf]
      %v1861 = vld [vmem:[%s1844 + $0x40] sm:$0xf]
      %v1862 = vld [vmem:[%s1844 + $0x44] sm:$0xf]
      %v1863 = vld [vmem:[%s1844 + $0x48] sm:$0xf]
      %v1864 = vld [vmem:[%s1844 + $0x4c] sm:$0xf]
      %v1865 = vld [vmem:[%s1844 + $0x50] sm:$0xf]
      %v1866 = vld [vmem:[%s1844 + $0x54] sm:$0xf]
      %v1867 = vld [vmem:[%s1844 + $0x58] sm:$0xf]
      %v1868 = vld [vmem:[%s1844 + $0x5c] sm:$0xf]
      %v1869 = vld [vmem:[%s1844 + $0x60] sm:$0xf]
      %v1870 = vld [vmem:[%s1844 + $0x64] sm:$0xf]
      %v1871 = vld [vmem:[%s1844 + $0x68] sm:$0xf]
      %v1872 = vld [vmem:[%s1844 + $0x6c] sm:$0xf]
      %v1873 = vld [vmem:[%s1844 + $0x70] sm:$0xf]
      %v1874 = vld [vmem:[%s1844 + $0x74] sm:$0xf]
      %v1875 = vld [vmem:[%s1844 + $0x78] sm:$0xf]
      %v1876 = vld [vmem:[%s1844 + $0x7c] sm:$0xf]
      %v1877 = vld [vmem:[%s1844 + $0x80] sm:$0xf]
      %v1878 = vld [vmem:[%s1844 + $0x84] sm:$0xf]
      %v1879 = vld [vmem:[%s1844 + $0x88] sm:$0xf]
      %v1880 = vld [vmem:[%s1844 + $0x8c] sm:$0xf]
      %v1881 = vld [vmem:[%s1844 + $0x90] sm:$0xf]
      %v1882 = vld [vmem:[%s1844 + $0x94] sm:$0xf]
      %v1883 = vld [vmem:[%s1844 + $0x98] sm:$0xf]
      %v1884 = vld [vmem:[%s1844 + $0x9c] sm:$0xf]
      %v1925 = vunpack.c.l.b16 %v1845
      %v1926 = vunpack.c.l.b16 %v1846
      %v1927 = vunpack.c.l.b16 %v1847
      %v1928 = vunpack.c.l.b16 %v1848
      %v1929 = vunpack.c.l.b16 %v1849
      %v1930 = vunpack.c.l.b16 %v1850
      %v1931 = vunpack.c.l.b16 %v1851
      %v1932 = vunpack.c.l.b16 %v1852
      %v1933 = vunpack.c.l.b16 %v1853
      %v1934 = vunpack.c.l.b16 %v1854
      %v1935 = vunpack.c.l.b16 %v1855
      %v1936 = vunpack.c.l.b16 %v1856
      %v1937 = vunpack.c.l.b16 %v1857
      %v1938 = vunpack.c.l.b16 %v1858
      %v1939 = vunpack.c.l.b16 %v1859
      %v1940 = vunpack.c.l.b16 %v1860
      %v1941 = vunpack.c.l.b16 %v1861
      %v1942 = vunpack.c.l.b16 %v1862
      %v1943 = vunpack.c.l.b16 %v1863
      %v1944 = vunpack.c.l.b16 %v1864
      %v1945 = vunpack.c.l.b16 %v1865
      %v1946 = vunpack.c.l.b16 %v1866
      %v1947 = vunpack.c.l.b16 %v1867
      %v1948 = vunpack.c.l.b16 %v1868
      %v1949 = vunpack.c.l.b16 %v1869
      %v1950 = vunpack.c.l.b16 %v1870
      %v1951 = vunpack.c.l.b16 %v1871
      %v1952 = vunpack.c.l.b16 %v1872
      %v1953 = vunpack.c.l.b16 %v1873
      %v1954 = vunpack.c.l.b16 %v1874
      %v1955 = vunpack.c.l.b16 %v1875
      %v1956 = vunpack.c.l.b16 %v1876
      %v1957 = vunpack.c.l.b16 %v1877
      %v1958 = vunpack.c.l.b16 %v1878
      %v1959 = vunpack.c.l.b16 %v1879
      %v1960 = vunpack.c.l.b16 %v1880
      %v1961 = vunpack.c.l.b16 %v1881
      %v1962 = vunpack.c.l.b16 %v1882
      %v1963 = vunpack.c.l.b16 %v1883
      %v1964 = vunpack.c.l.b16 %v1884
      %v1965 = vpack.c.b16 %v1926, %v1925
      %v1966 = vpack.c.b16 %v1928, %v1927
      %v1967 = vpack.c.b16 %v1930, %v1929
      %v1968 = vpack.c.b16 %v1932, %v1931
      %v1969 = vpack.c.b16 %v1934, %v1933
      %v1970 = vpack.c.b16 %v1936, %v1935
      %v1971 = vpack.c.b16 %v1938, %v1937
      %v1972 = vpack.c.b16 %v1940, %v1939
      %v1973 = vpack.c.b16 %v1942, %v1941
      %v1974 = vpack.c.b16 %v1944, %v1943
      %v1975 = vpack.c.b16 %v1946, %v1945
      %v1976 = vpack.c.b16 %v1948, %v1947
      %v1977 = vpack.c.b16 %v1950, %v1949
      %v1978 = vpack.c.b16 %v1952, %v1951
      %v1979 = vpack.c.b16 %v1954, %v1953
      %v1980 = vpack.c.b16 %v1956, %v1955
      %v1981 = vpack.c.b16 %v1958, %v1957
      %v1982 = vpack.c.b16 %v1960, %v1959
      %v1983 = vpack.c.b16 %v1962, %v1961
      %v1984 = vpack.c.b16 %v1964, %v1963
      %v2006 = vsel %vm536, %v534, 0
      %2008 = vmatpush.bf16.msra.mxu0 %v1972
      %2009 = vmatpush.bf16.msra.mxu0 %v1971
      %2010 = vmatpush.bf16.msra.mxu0 %v1970
      %2011 = vmatpush.bf16.msra.mxu0 %v1969
      %2012 = vmatpush.bf16.msra.mxu0 %v1968
      %2013 = vmatpush.bf16.msra.mxu0 %v1967
      %2014 = vmatpush.bf16.msra.mxu0 %v1966
      %2015 = vmatpush.bf16.msra.mxu0 %v1965
      %2016 = vmatmul.bf16.gmra.mxu0 %v550
      %v2017 = vpop.f32.mrf.mxu0
      %v2018 = vadd.f32 0.0, %v2017
      %v2019 = vpop.f32.mrf.mxu0
      %v2020 = vadd.f32 0.0, %v2019
      %2021 = vmatmul.bf16.gmra.mxu0 %v553
      %v2022 = vpop.f32.mrf.mxu0
      %v2023 = vadd.f32 0.0, %v2022
      %v2024 = vpop.f32.mrf.mxu0
      %v2025 = vadd.f32 0.0, %v2024
      %2026 = vmatmul.bf16.gmra.mxu0 %v556
      %v2027 = vpop.f32.mrf.mxu0
      %v2028 = vadd.f32 0.0, %v2027
      %v2029 = vpop.f32.mrf.mxu0
      %v2030 = vadd.f32 0.0, %v2029
      %2031 = vmatmul.bf16.gmra.mxu0 %v559
      %v2032 = vpop.f32.mrf.mxu0
      %v2033 = vadd.f32 0.0, %v2032
      %v2034 = vpop.f32.mrf.mxu0
      %v2035 = vadd.f32 0.0, %v2034
      %2036 = vmatmul.bf16.gmra.mxu0 %v562
      %v2037 = vpop.f32.mrf.mxu0
      %v2038 = vadd.f32 0.0, %v2037
      %v2039 = vpop.f32.mrf.mxu0
      %v2040 = vadd.f32 0.0, %v2039
      %2041 = vmatmul.bf16.gmra.mxu0 %v565
      %v2042 = vpop.f32.mrf.mxu0
      %v2043 = vadd.f32 0.0, %v2042
      %v2044 = vpop.f32.mrf.mxu0
      %v2045 = vadd.f32 0.0, %v2044
      %2046 = vmatmul.bf16.gmra.mxu0 %v569
      %v2047 = vpop.f32.mrf.mxu0
      %v2048 = vadd.f32 0.0, %v2047
      %v2049 = vpop.f32.mrf.mxu0
      %v2050 = vadd.f32 0.0, %v2049
      %2051 = vdwg.mxu0
      %2052 = vmatpush.bf16.msra.mxu0 %v1980
      %2053 = vmatpush.bf16.msra.mxu0 %v1979
      %2054 = vmatpush.bf16.msra.mxu0 %v1978
      %2055 = vmatpush.bf16.msra.mxu0 %v1977
      %2056 = vmatpush.bf16.msra.mxu0 %v1976
      %2057 = vmatpush.bf16.msra.mxu0 %v1975
      %2058 = vmatpush.bf16.msra.mxu0 %v1974
      %2059 = vmatpush.bf16.msra.mxu0 %v1973
      %2060 = vmatmul.bf16.gmra.mxu0 %v589
      %v2061 = vpop.f32.mrf.mxu0
      %v2062 = vadd.f32 %v2018, %v2061
      %v2063 = vpop.f32.mrf.mxu0
      %v2064 = vadd.f32 %v2020, %v2063
      %2065 = vmatmul.bf16.gmra.mxu0 %v593
      %v2066 = vpop.f32.mrf.mxu0
      %v2067 = vadd.f32 %v2023, %v2066
      %v2068 = vpop.f32.mrf.mxu0
      %v2069 = vadd.f32 %v2025, %v2068
      %2070 = vmatmul.bf16.gmra.mxu0 %v597
      %v2071 = vpop.f32.mrf.mxu0
      %v2072 = vadd.f32 %v2028, %v2071
      %v2073 = vpop.f32.mrf.mxu0
      %v2074 = vadd.f32 %v2030, %v2073
      %2075 = vmatmul.bf16.gmra.mxu0 %v601
      %v2076 = vpop.f32.mrf.mxu0
      %v2077 = vadd.f32 %v2033, %v2076
      %v2078 = vpop.f32.mrf.mxu0
      %v2079 = vadd.f32 %v2035, %v2078
      %2080 = vmatmul.bf16.gmra.mxu0 %v605
      %v2081 = vpop.f32.mrf.mxu0
      %v2082 = vadd.f32 %v2038, %v2081
      %v2083 = vpop.f32.mrf.mxu0
      %v2084 = vadd.f32 %v2040, %v2083
      %2085 = vmatmul.bf16.gmra.mxu0 %v609
      %v2086 = vpop.f32.mrf.mxu0
      %v2087 = vadd.f32 %v2043, %v2086
      %v2088 = vpop.f32.mrf.mxu0
      %v2089 = vadd.f32 %v2045, %v2088
      %2090 = vmatmul.bf16.gmra.mxu0 %v613
      %v2091 = vpop.f32.mrf.mxu0
      %v2092 = vadd.f32 %v2048, %v2091
      %v2093 = vpop.f32.mrf.mxu0
      %v2094 = vadd.f32 %v2050, %v2093
      %2095 = vdwg.mxu0
      %2096 = vmatpush.bf16.msra.mxu0 0
      %2097 = vmatpush.bf16.msra.mxu0 0
      %2098 = vmatpush.bf16.msra.mxu0 0
      %2099 = vmatpush.bf16.msra.mxu0 0
      %2100 = vmatpush.bf16.msra.mxu0 %v1984
      %2101 = vmatpush.bf16.msra.mxu0 %v1983
      %2102 = vmatpush.bf16.msra.mxu0 %v1982
      %2103 = vmatpush.bf16.msra.mxu0 %v1981
      %2104 = vmatmul.bf16.gmra.mxu0 %v826
      %v2105 = vpop.f32.mrf.mxu0
      %v2106 = vadd.f32 %v2062, %v2105
      %v2107 = vpop.f32.mrf.mxu0
      %v2108 = vadd.f32 %v2064, %v2107
      %2109 = vmatmul.bf16.gmra.mxu0 %v829
      %v2110 = vpop.f32.mrf.mxu0
      %v2111 = vadd.f32 %v2067, %v2110
      %v2112 = vpop.f32.mrf.mxu0
      %v2113 = vadd.f32 %v2069, %v2112
      %2114 = vmatmul.bf16.gmra.mxu0 %v832
      %v2115 = vpop.f32.mrf.mxu0
      %v2116 = vadd.f32 %v2072, %v2115
      %v2117 = vpop.f32.mrf.mxu0
      %v2118 = vadd.f32 %v2074, %v2117
      %2119 = vmatmul.bf16.gmra.mxu0 %v835
      %v2120 = vpop.f32.mrf.mxu0
      %v2121 = vadd.f32 %v2077, %v2120
      %v2122 = vpop.f32.mrf.mxu0
      %v2123 = vadd.f32 %v2079, %v2122
      %2124 = vmatmul.bf16.gmra.mxu0 %v1386
      %v2125 = vpop.f32.mrf.mxu0
      %v2126 = vadd.f32 %v2082, %v2125
      %v2127 = vpop.f32.mrf.mxu0
      %v2128 = vadd.f32 %v2084, %v2127
      %2129 = vmatmul.bf16.gmra.mxu0 %v1696
      %v2130 = vpop.f32.mrf.mxu0
      %v2131 = vadd.f32 %v2087, %v2130
      %v2132 = vpop.f32.mrf.mxu0
      %v2133 = vadd.f32 %v2089, %v2132
      %2134 = vmatmul.bf16.gmra.mxu0 %v2006
      %v2135 = vpop.f32.mrf.mxu0
      %v2136 = vadd.f32 %v2092, %v2135
      %v2137 = vpop.f32.mrf.mxu0
      %v2138 = vadd.f32 %v2094, %v2137
      %2139 = vdwg.mxu0
      %v2140 = vadd.f32 %v1830, %v2106
      %v2141 = vadd.f32 %v1831, %v2108
      %v2142 = vadd.f32 %v1832, %v2111
      %v2143 = vadd.f32 %v1833, %v2113
      %v2144 = vadd.f32 %v1834, %v2116
      %v2145 = vadd.f32 %v1835, %v2118
      %v2146 = vadd.f32 %v1836, %v2121
      %v2147 = vadd.f32 %v1837, %v2123
      %v2148 = vadd.f32 %v1838, %v2126
      %v2149 = vadd.f32 %v1839, %v2128
      %v2150 = vadd.f32 %v1840, %v2131
      %v2151 = vadd.f32 %v1841, %v2133
      %v2152 = vadd.f32 %v1842, %v2136
      %v2153 = vadd.f32 %v1843, %v2138
      %v2154 = vmul.f32 %v2140, %v2140
      %v2155 = vmul.f32 %v2141, %v2141
      %v2156 = vmul.f32 %v2142, %v2142
      %v2157 = vmul.f32 %v2143, %v2143
      %v2158 = vmul.f32 %v2144, %v2144
      %v2159 = vmul.f32 %v2145, %v2145
      %v2160 = vmul.f32 %v2146, %v2146
      %v2161 = vmul.f32 %v2147, %v2147
      %v2162 = vmul.f32 %v2148, %v2148
      %v2163 = vmul.f32 %v2149, %v2149
      %v2164 = vmul.f32 %v2150, %v2150
      %v2165 = vmul.f32 %v2151, %v2151
      %v2166 = vmul.f32 %v2152, %v2152
      %v2167 = vmul.f32 %v2153, %v2153
      %v2168 = vmul.f32 %v2154, 0.035677407
      %v2169 = vmul.f32 %v2155, 0.035677407
      %v2170 = vmul.f32 %v2156, 0.035677407
      %v2171 = vmul.f32 %v2157, 0.035677407
      %v2172 = vmul.f32 %v2158, 0.035677407
      %v2173 = vmul.f32 %v2159, 0.035677407
      %v2174 = vmul.f32 %v2160, 0.035677407
      %v2175 = vmul.f32 %v2161, 0.035677407
      %v2176 = vmul.f32 %v2162, 0.035677407
      %v2177 = vmul.f32 %v2163, 0.035677407
      %v2178 = vmul.f32 %v2164, 0.035677407
      %v2179 = vmul.f32 %v2165, 0.035677407
      %v2180 = vmul.f32 %v2166, 0.035677407
      %v2181 = vmul.f32 %v2167, 0.035677407
      %v2182 = vadd.f32 %v2168, 0.7978846
      %v2183 = vadd.f32 %v2169, 0.7978846
      %v2184 = vadd.f32 %v2170, 0.7978846
      %v2185 = vadd.f32 %v2171, 0.7978846
      %v2186 = vadd.f32 %v2172, 0.7978846
      %v2187 = vadd.f32 %v2173, 0.7978846
      %v2188 = vadd.f32 %v2174, 0.7978846
      %v2189 = vadd.f32 %v2175, 0.7978846
      %v2190 = vadd.f32 %v2176, 0.7978846
      %v2191 = vadd.f32 %v2177, 0.7978846
      %v2192 = vadd.f32 %v2178, 0.7978846
      %v2193 = vadd.f32 %v2179, 0.7978846
      %v2194 = vadd.f32 %v2180, 0.7978846
      %v2195 = vadd.f32 %v2181, 0.7978846
      %v2196 = vmul.f32 %v2140, %v2182
      %v2197 = vmul.f32 %v2141, %v2183
      %v2198 = vmul.f32 %v2142, %v2184
      %v2199 = vmul.f32 %v2143, %v2185
      %v2200 = vmul.f32 %v2144, %v2186
      %v2201 = vmul.f32 %v2145, %v2187
      %v2202 = vmul.f32 %v2146, %v2188
      %v2203 = vmul.f32 %v2147, %v2189
      %v2204 = vmul.f32 %v2148, %v2190
      %v2205 = vmul.f32 %v2149, %v2191
      %v2206 = vmul.f32 %v2150, %v2192
      %v2207 = vmul.f32 %v2151, %v2193
      %v2208 = vmul.f32 %v2152, %v2194
      %v2209 = vmul.f32 %v2153, %v2195
      %v2210 = vtanh.pop %v2196
      %v2211 = vtanh.pop %v2197
      %v2212 = vtanh.pop %v2198
      %v2213 = vtanh.pop %v2199
      %v2214 = vtanh.pop %v2200
      %v2215 = vtanh.pop %v2201
      %v2216 = vtanh.pop %v2202
      %v2217 = vtanh.pop %v2203
      %v2218 = vtanh.pop %v2204
      %v2219 = vtanh.pop %v2205
      %v2220 = vtanh.pop %v2206
      %v2221 = vtanh.pop %v2207
      %v2222 = vtanh.pop %v2208
      %v2223 = vtanh.pop %v2209
      %2225 = vset.pattern.permute.xlu0 0
      %2226 = vperm.xlu0 %2225, %v199
      %v2227 = vpop.permute.xlu0 %2226
      %2230 = vset.pattern.permute.xlu0 0
      %2231 = vperm.xlu0 %2230, %v200
      %v2232 = vpop.permute.xlu0 %2231
      %2235 = vset.pattern.permute.xlu0 0
      %2236 = vperm.xlu0 %2235, %v201
      %v2237 = vpop.permute.xlu0 %2236
      %2240 = vset.pattern.permute.xlu0 0
      %2241 = vperm.xlu0 %2240, %v202
      %v2242 = vpop.permute.xlu0 %2241
      %2245 = vset.pattern.permute.xlu0 0
      %2246 = vperm.xlu0 %2245, %v203
      %v2247 = vpop.permute.xlu0 %2246
      %2250 = vset.pattern.permute.xlu0 0
      %2251 = vperm.xlu0 %2250, %v204
      %v2252 = vpop.permute.xlu0 %2251
      %2255 = vset.pattern.permute.xlu0 0
      %2256 = vperm.xlu0 %2255, %v205
      %v2257 = vpop.permute.xlu0 %2256
      %2260 = vset.pattern.permute.xlu0 0
      %2261 = vperm.xlu0 %2260, %v206
      %v2262 = vpop.permute.xlu0 %2261
      %2265 = vset.pattern.permute.xlu0 0
      %2266 = vperm.xlu0 %2265, %v207
      %v2267 = vpop.permute.xlu0 %2266
      %2270 = vset.pattern.permute.xlu0 0
      %2271 = vperm.xlu0 %2270, %v208
      %v2272 = vpop.permute.xlu0 %2271
      %2275 = vset.pattern.permute.xlu0 0
      %2276 = vperm.xlu0 %2275, %v209
      %v2277 = vpop.permute.xlu0 %2276
      %2280 = vset.pattern.permute.xlu0 0
      %2281 = vperm.xlu0 %2280, %v210
      %v2282 = vpop.permute.xlu0 %2281
      %2285 = vset.pattern.permute.xlu0 0
      %2286 = vperm.xlu0 %2285, %v211
      %v2287 = vpop.permute.xlu0 %2286
      %2290 = vset.pattern.permute.xlu0 0
      %2291 = vperm.xlu0 %2290, %v212
      %v2292 = vpop.permute.xlu0 %2291
      %v2294 = vmul.f32 %v2140, %v2227
      %v2295 = vmul.f32 %v2141, %v2232
      %v2296 = vmul.f32 %v2142, %v2237
      %v2297 = vmul.f32 %v2143, %v2242
      %v2298 = vmul.f32 %v2144, %v2247
      %v2299 = vmul.f32 %v2145, %v2252
      %v2300 = vmul.f32 %v2146, %v2257
      %v2301 = vmul.f32 %v2147, %v2262
      %v2302 = vmul.f32 %v2148, %v2267
      %v2303 = vmul.f32 %v2149, %v2272
      %v2304 = vmul.f32 %v2150, %v2277
      %v2305 = vmul.f32 %v2151, %v2282
      %v2306 = vmul.f32 %v2152, %v2287
      %v2307 = vmul.f32 %v2153, %v2292
      %v2308 = vadd.f32 %v2210, 1.0
      %v2309 = vadd.f32 %v2211, 1.0
      %v2310 = vadd.f32 %v2212, 1.0
      %v2311 = vadd.f32 %v2213, 1.0
      %v2312 = vadd.f32 %v2214, 1.0
      %v2313 = vadd.f32 %v2215, 1.0
      %v2314 = vadd.f32 %v2216, 1.0
      %v2315 = vadd.f32 %v2217, 1.0
      %v2316 = vadd.f32 %v2218, 1.0
      %v2317 = vadd.f32 %v2219, 1.0
      %v2318 = vadd.f32 %v2220, 1.0
      %v2319 = vadd.f32 %v2221, 1.0
      %v2320 = vadd.f32 %v2222, 1.0
      %v2321 = vadd.f32 %v2223, 1.0
      %v2322 = vmul.f32 %v2294, %v2308
      %v2323 = vmul.f32 %v2295, %v2309
      %v2324 = vmul.f32 %v2296, %v2310
      %v2325 = vmul.f32 %v2297, %v2311
      %v2326 = vmul.f32 %v2298, %v2312
      %v2327 = vmul.f32 %v2299, %v2313
      %v2328 = vmul.f32 %v2300, %v2314
      %v2329 = vmul.f32 %v2301, %v2315
      %v2330 = vmul.f32 %v2302, %v2316
      %v2331 = vmul.f32 %v2303, %v2317
      %v2332 = vmul.f32 %v2304, %v2318
      %v2333 = vmul.f32 %v2305, %v2319
      %v2334 = vmul.f32 %v2306, %v2320
      %v2335 = vmul.f32 %v2307, %v2321
      %vm2336 = vcmask 257024
      %2337 = vst.msk [vmem:[#allocation2] sm:$0xf] %vm2336, 0
      %2338 = vst.msk [vmem:[#allocation2 + $0x4] sm:$0xf] %vm2336, 0
      %2339 = vst.msk [vmem:[#allocation2 + $0x8] sm:$0xf] %vm2336, 0
      %2340 = vst.msk [vmem:[#allocation2 + $0xc] sm:$0xf] %vm2336, 0
      %vm2341 = vcmask 253952
      %2342 = vst.msk [vmem:[#allocation2 + $0x10] sm:$0x1] %vm2341, 0
      %v2343 = vpack.c.bf16 %v2322, %v2322
      %v2344 = vpack.c.bf16 %v2323, %v2323
      %v2345 = vpack.c.bf16 %v2324, %v2324
      %v2346 = vpack.c.bf16 %v2325, %v2325
      %v2347 = vpack.c.bf16 %v2326, %v2326
      %v2348 = vpack.c.bf16 %v2327, %v2327
      %v2349 = vpack.c.bf16 %v2328, %v2328
      %v2350 = vpack.c.bf16 %v2329, %v2329
      %v2351 = vpack.c.bf16 %v2330, %v2330
      %v2352 = vpack.c.bf16 %v2331, %v2331
      %v2353 = vpack.c.bf16 %v2332, %v2332
      %v2354 = vpack.c.bf16 %v2333, %v2333
      %v2355 = vpack.c.bf16 %v2334, %v2334
      %v2356 = vpack.c.bf16 %v2335, %v2335
      %vm2371 = vcmask 1040384
      %vm2372 = vcmask 1044484
      %vm2373 = vmor %vm2371, %vm2372
      %v2374 = vrot.slane %v2343, 7
      %v2375 = vrot.slane %v2374, 4
      %v2376 = vrot.slane %v2344, 7
      %v2377 = vsel %vm2373, %v2375, %v2376
      %v2378 = vrot.slane %v2376, 4
      %v2379 = vrot.slane %v2345, 7
      %v2380 = vsel %vm2373, %v2378, %v2379
      %v2381 = vrot.slane %v2379, 4
      %v2382 = vrot.slane %v2346, 7
      %v2383 = vsel %vm2373, %v2381, %v2382
      %v2384 = vrot.slane %v2382, 4
      %v2385 = vrot.slane %v2347, 7
      %v2386 = vsel %vm2373, %v2384, %v2385
      %v2387 = vrot.slane %v2385, 4
      %v2388 = vrot.slane %v2348, 7
      %v2389 = vsel %vm2373, %v2387, %v2388
      %v2390 = vrot.slane %v2388, 4
      %v2391 = vrot.slane %v2349, 7
      %v2392 = vsel %vm2373, %v2390, %v2391
      %v2393 = vrot.slane %v2391, 4
      %v2394 = vrot.slane %v2350, 7
      %v2395 = vsel %vm2373, %v2393, %v2394
      %v2396 = vrot.slane %v2394, 4
      %v2397 = vrot.slane %v2351, 7
      %v2398 = vsel %vm2373, %v2396, %v2397
      %v2399 = vrot.slane %v2397, 4
      %v2400 = vrot.slane %v2352, 7
      %v2401 = vsel %vm2373, %v2399, %v2400
      %v2402 = vrot.slane %v2400, 4
      %v2403 = vrot.slane %v2353, 7
      %v2404 = vsel %vm2373, %v2402, %v2403
      %v2405 = vrot.slane %v2403, 4
      %v2406 = vrot.slane %v2354, 7
      %v2407 = vsel %vm2373, %v2405, %v2406
      %v2408 = vrot.slane %v2406, 4
      %v2409 = vrot.slane %v2355, 7
      %v2410 = vsel %vm2373, %v2408, %v2409
      %v2411 = vrot.slane %v2409, 4
      %v2412 = vrot.slane %v2356, 7
      %v2413 = vsel %vm2373, %v2411, %v2412
      %vm2428 = vcmask 257025
      %2429 = vst.msk [vmem:[#allocation2 + $0x10] sm:$0xe] %vm2428, %v2374
      %2430 = vst.msk [vmem:[#allocation2 + $0x14] sm:$0xf] %vm2336, %v2377
      %2431 = vst.msk [vmem:[#allocation2 + $0x18] sm:$0xf] %vm2336, %v2380
      %2432 = vst.msk [vmem:[#allocation2 + $0x1c] sm:$0xf] %vm2336, %v2383
      %2433 = vst.msk [vmem:[#allocation2 + $0x20] sm:$0xf] %vm2336, %v2386
      %2434 = vst.msk [vmem:[#allocation2 + $0x24] sm:$0xf] %vm2336, %v2389
      %2435 = vst.msk [vmem:[#allocation2 + $0x28] sm:$0xf] %vm2336, %v2392
      %2436 = vst.msk [vmem:[#allocation2 + $0x2c] sm:$0xf] %vm2336, %v2395
      %2437 = vst.msk [vmem:[#allocation2 + $0x30] sm:$0xf] %vm2336, %v2398
      %2438 = vst.msk [vmem:[#allocation2 + $0x34] sm:$0xf] %vm2336, %v2401
      %2439 = vst.msk [vmem:[#allocation2 + $0x38] sm:$0xf] %vm2336, %v2404
      %2440 = vst.msk [vmem:[#allocation2 + $0x3c] sm:$0xf] %vm2336, %v2407
      %2441 = vst.msk [vmem:[#allocation2 + $0x40] sm:$0xf] %vm2336, %v2410
      %vm2442 = vcmask 254976
      %2443 = vst.msk [vmem:[#allocation2 + $0x44] sm:$0x3] %vm2442, %v2413
      %vm2444 = vcmask 257026
      %2445 = vst.msk [vmem:[#allocation2 + $0x44] sm:$0xc] %vm2444, 0
      %2446 = vst.msk [vmem:[#allocation2 + $0x48] sm:$0xf] %vm2336, 0
      %2447 = vst.msk [vmem:[#allocation2 + $0x4c] sm:$0xf] %vm2336, 0
      %2448 = vst.msk [vmem:[#allocation2 + $0x50] sm:$0xf] %vm2336, 0
      %vm2449 = vcmask 256000
      %2450 = vst.msk [vmem:[#allocation2 + $0x54] sm:$0x7] %vm2449, 0
      %v2451 = vld [vmem:[#allocation2] sm:$0xf]
      %v2452 = vld [vmem:[#allocation2 + $0x4] sm:$0xf]
      %v2453 = vld [vmem:[#allocation2 + $0x8] sm:$0xf]
      %v2454 = vld [vmem:[#allocation2 + $0xc] sm:$0xf]
      %v2455 = vld [vmem:[#allocation2 + $0x10] sm:$0xf]
      %v2456 = vld [vmem:[#allocation2 + $0x14] sm:$0xf]
      %v2457 = vld [vmem:[#allocation2 + $0x18] sm:$0xf]
      %v2458 = vld [vmem:[#allocation2 + $0x1c] sm:$0xf]
      %v2459 = vld [vmem:[#allocation2 + $0x20] sm:$0xf]
      %v2460 = vld [vmem:[#allocation2 + $0x24] sm:$0xf]
      %v2461 = vld [vmem:[#allocation2 + $0x28] sm:$0xf]
      %v2462 = vld [vmem:[#allocation2 + $0x2c] sm:$0xf]
      %v2463 = vld [vmem:[#allocation2 + $0x30] sm:$0xf]
      %v2464 = vld [vmem:[#allocation2 + $0x34] sm:$0xf]
      %v2465 = vld [vmem:[#allocation2 + $0x38] sm:$0xf]
      %v2466 = vld [vmem:[#allocation2 + $0x3c] sm:$0xf]
      %v2467 = vld [vmem:[#allocation2 + $0x40] sm:$0xf]
      %v2468 = vld [vmem:[#allocation2 + $0x44] sm:$0xf]
      %v2469 = vld [vmem:[#allocation2 + $0x48] sm:$0xf]
      %v2470 = vld [vmem:[#allocation2 + $0x4c] sm:$0xf]
      %v2471 = vld [vmem:[#allocation2 + $0x50] sm:$0xf]
      %v2472 = vld [vmem:[#allocation2 + $0x54] sm:$0x1]
      %v2473 = vld [vmem:[#allocation2 + $0x54] sm:$0x3]
      %v2474 = vld [vmem:[#allocation2] sm:$0xe]
      %v2475 = vld [vmem:[#allocation2 + $0x54] sm:$0x7]
      %v2476 = vld [vmem:[#allocation2] sm:$0xc]
      %v2499 = vunpack.c.l.b16 %v2451
      %v2500 = vunpack.c.l.b16 %v2452
      %v2501 = vunpack.c.l.b16 %v2453
      %v2502 = vunpack.c.l.b16 %v2454
      %v2503 = vunpack.c.l.b16 %v2455
      %v2504 = vunpack.c.l.b16 %v2456
      %v2505 = vunpack.c.l.b16 %v2457
      %v2506 = vunpack.c.l.b16 %v2458
      %v2507 = vunpack.c.l.b16 %v2459
      %v2508 = vunpack.c.l.b16 %v2460
      %v2509 = vunpack.c.l.b16 %v2461
      %v2510 = vunpack.c.l.b16 %v2462
      %v2511 = vunpack.c.l.b16 %v2463
      %v2512 = vunpack.c.l.b16 %v2464
      %v2513 = vunpack.c.l.b16 %v2465
      %v2514 = vunpack.c.l.b16 %v2466
      %v2515 = vunpack.c.l.b16 %v2467
      %v2516 = vunpack.c.l.b16 %v2468
      %v2517 = vunpack.c.l.b16 %v2469
      %v2518 = vunpack.c.l.b16 %v2470
      %v2519 = vunpack.c.l.b16 %v2471
      %v2520 = vunpack.c.l.b16 %v2472
      %v2521 = vpack.c.b16 %v2500, %v2499
      %v2522 = vpack.c.b16 %v2502, %v2501
      %v2523 = vpack.c.b16 %v2504, %v2503
      %v2524 = vpack.c.b16 %v2506, %v2505
      %v2525 = vpack.c.b16 %v2508, %v2507
      %v2526 = vpack.c.b16 %v2510, %v2509
      %v2527 = vpack.c.b16 %v2512, %v2511
      %v2528 = vpack.c.b16 %v2514, %v2513
      %v2529 = vpack.c.b16 %v2516, %v2515
      %v2530 = vpack.c.b16 %v2518, %v2517
      %v2531 = vpack.c.b16 %v2520, %v2519
      %v2533 = vunpack.c.l.b16 %v2473
      %v2534 = vpack.c.b16 %v2533, %v2519
      %v2536 = vshrl.u32 %v2521, 16
      %v2538 = vshll.u32 %v2521, 16
      %v2540 = vrot.slane %v2538, 1
      %v2541 = vor.u32 %v2536, %v2540
      %v2543 = vshll.u32 %v2522, 16
      %v2545 = vrot.slane %v2543, 1
      %v2546 = vsel %vm297, %v2541, %v2545
      %v2547 = vshrl.u32 %v2522, 16
      %v2549 = vor.u32 %v2547, %v2545
      %v2551 = vshll.u32 %v2523, 16
      %v2553 = vrot.slane %v2551, 1
      %v2554 = vsel %vm297, %v2549, %v2553
      %v2555 = vshrl.u32 %v2523, 16
      %v2557 = vor.u32 %v2555, %v2553
      %v2559 = vshll.u32 %v2524, 16
      %v2561 = vrot.slane %v2559, 1
      %v2562 = vsel %vm297, %v2557, %v2561
      %v2563 = vshrl.u32 %v2524, 16
      %v2565 = vor.u32 %v2563, %v2561
      %v2567 = vshll.u32 %v2525, 16
      %v2569 = vrot.slane %v2567, 1
      %v2570 = vsel %vm297, %v2565, %v2569
      %v2571 = vshrl.u32 %v2525, 16
      %v2573 = vor.u32 %v2571, %v2569
      %v2575 = vshll.u32 %v2526, 16
      %v2577 = vrot.slane %v2575, 1
      %v2578 = vsel %vm297, %v2573, %v2577
      %v2579 = vshrl.u32 %v2526, 16
      %v2581 = vor.u32 %v2579, %v2577
      %v2583 = vshll.u32 %v2527, 16
      %v2585 = vrot.slane %v2583, 1
      %v2586 = vsel %vm297, %v2581, %v2585
      %v2587 = vshrl.u32 %v2527, 16
      %v2589 = vor.u32 %v2587, %v2585
      %v2591 = vshll.u32 %v2528, 16
      %v2593 = vrot.slane %v2591, 1
      %v2594 = vsel %vm297, %v2589, %v2593
      %v2595 = vshrl.u32 %v2528, 16
      %v2597 = vor.u32 %v2595, %v2593
      %v2599 = vshll.u32 %v2529, 16
      %v2601 = vrot.slane %v2599, 1
      %v2602 = vsel %vm297, %v2597, %v2601
      %v2603 = vshrl.u32 %v2529, 16
      %v2605 = vor.u32 %v2603, %v2601
      %v2607 = vshll.u32 %v2530, 16
      %v2609 = vrot.slane %v2607, 1
      %v2610 = vsel %vm297, %v2605, %v2609
      %v2611 = vshrl.u32 %v2530, 16
      %v2613 = vor.u32 %v2611, %v2609
      %v2615 = vshll.u32 %v2534, 16
      %v2617 = vrot.slane %v2615, 1
      %v2618 = vsel %vm297, %v2613, %v2617
      %v2619 = vshrl.u32 %v2534, 16
      %v2621 = vor.u32 %v2619, %v2617
      %2622 = vrot.lane.b32.xlu0 %v2546, 32
      %v2623 = vpop.permute.xlu0 %2622
      %2624 = vrot.lane.b32.xlu0 %v2554, 32
      %v2625 = vpop.permute.xlu0 %2624
      %2626 = vrot.lane.b32.xlu0 %v2562, 32
      %v2627 = vpop.permute.xlu0 %2626
      %2628 = vrot.lane.b32.xlu0 %v2570, 32
      %v2629 = vpop.permute.xlu0 %2628
      %2630 = vrot.lane.b32.xlu0 %v2578, 32
      %v2631 = vpop.permute.xlu0 %2630
      %2632 = vrot.lane.b32.xlu0 %v2586, 32
      %v2633 = vpop.permute.xlu0 %2632
      %2634 = vrot.lane.b32.xlu0 %v2594, 32
      %v2635 = vpop.permute.xlu0 %2634
      %2636 = vrot.lane.b32.xlu0 %v2602, 32
      %v2637 = vpop.permute.xlu0 %2636
      %2638 = vrot.lane.b32.xlu0 %v2610, 32
      %v2639 = vpop.permute.xlu0 %2638
      %2640 = vrot.lane.b32.xlu0 %v2618, 32
      %v2641 = vpop.permute.xlu0 %2640
      %2642 = vrot.lane.b32.xlu0 %v2621, 32
      %v2643 = vpop.permute.xlu0 %2642
      %v2645 = vunpack.c.l.b16 %v2474
      %v2646 = vpack.c.b16 %v2500, %v2645
      %v2647 = vrot.slane %v2646, 1
      %v2648 = vrot.slane %v2522, 1
      %v2649 = vsel %vm410, %v2647, %v2648
      %v2650 = vrot.slane %v2523, 1
      %v2651 = vsel %vm410, %v2648, %v2650
      %v2652 = vrot.slane %v2524, 1
      %v2653 = vsel %vm410, %v2650, %v2652
      %v2654 = vrot.slane %v2525, 1
      %v2655 = vsel %vm410, %v2652, %v2654
      %v2656 = vrot.slane %v2526, 1
      %v2657 = vsel %vm410, %v2654, %v2656
      %v2658 = vrot.slane %v2527, 1
      %v2659 = vsel %vm410, %v2656, %v2658
      %v2660 = vrot.slane %v2528, 1
      %v2661 = vsel %vm410, %v2658, %v2660
      %v2662 = vrot.slane %v2529, 1
      %v2663 = vsel %vm410, %v2660, %v2662
      %v2664 = vrot.slane %v2530, 1
      %v2665 = vsel %vm410, %v2662, %v2664
      %v2666 = vrot.slane %v2534, 1
      %v2667 = vsel %vm410, %v2664, %v2666
      %2668 = vrot.lane.b32.xlu0 %v2649, 64
      %v2669 = vpop.permute.xlu0 %2668
      %2670 = vrot.lane.b32.xlu0 %v2651, 64
      %v2671 = vpop.permute.xlu0 %2670
      %2672 = vrot.lane.b32.xlu0 %v2653, 64
      %v2673 = vpop.permute.xlu0 %2672
      %2674 = vrot.lane.b32.xlu0 %v2655, 64
      %v2675 = vpop.permute.xlu0 %2674
      %2676 = vrot.lane.b32.xlu0 %v2657, 64
      %v2677 = vpop.permute.xlu0 %2676
      %2678 = vrot.lane.b32.xlu0 %v2659, 64
      %v2679 = vpop.permute.xlu0 %2678
      %2680 = vrot.lane.b32.xlu0 %v2661, 64
      %v2681 = vpop.permute.xlu0 %2680
      %2682 = vrot.lane.b32.xlu0 %v2663, 64
      %v2683 = vpop.permute.xlu0 %2682
      %2684 = vrot.lane.b32.xlu0 %v2665, 64
      %v2685 = vpop.permute.xlu0 %2684
      %2686 = vrot.lane.b32.xlu0 %v2667, 64
      %v2687 = vpop.permute.xlu0 %2686
      %2688 = vrot.lane.b32.xlu0 %v2666, 64
      %v2689 = vpop.permute.xlu0 %2688
      %v2691 = vunpack.c.l.b16 %v2475
      %v2692 = vpack.c.b16 %v2691, %v2519
      %v2694 = vshrl.u32 %v2646, 16
      %v2696 = vrot.slane %v2694, 1
      %v2697 = vshll.u32 %v2646, 16
      %v2699 = vrot.slane %v2697, 2
      %v2700 = vor.u32 %v2696, %v2699
      %v2701 = vrot.slane %v2547, 1
      %v2702 = vrot.slane %v2543, 2
      %v2703 = vor.u32 %v2701, %v2702
      %v2704 = vsel %vm435, %v2700, %v2703
      %v2705 = vrot.slane %v2555, 1
      %v2706 = vrot.slane %v2551, 2
      %v2707 = vor.u32 %v2705, %v2706
      %v2708 = vsel %vm435, %v2703, %v2707
      %v2709 = vrot.slane %v2563, 1
      %v2710 = vrot.slane %v2559, 2
      %v2711 = vor.u32 %v2709, %v2710
      %v2712 = vsel %vm435, %v2707, %v2711
      %v2713 = vrot.slane %v2571, 1
      %v2714 = vrot.slane %v2567, 2
      %v2715 = vor.u32 %v2713, %v2714
      %v2716 = vsel %vm435, %v2711, %v2715
      %v2717 = vrot.slane %v2579, 1
      %v2718 = vrot.slane %v2575, 2
      %v2719 = vor.u32 %v2717, %v2718
      %v2720 = vsel %vm435, %v2715, %v2719
      %v2721 = vrot.slane %v2587, 1
      %v2722 = vrot.slane %v2583, 2
      %v2723 = vor.u32 %v2721, %v2722
      %v2724 = vsel %vm435, %v2719, %v2723
      %v2725 = vrot.slane %v2595, 1
      %v2726 = vrot.slane %v2591, 2
      %v2727 = vor.u32 %v2725, %v2726
      %v2728 = vsel %vm435, %v2723, %v2727
      %v2729 = vrot.slane %v2603, 1
      %v2730 = vrot.slane %v2599, 2
      %v2731 = vor.u32 %v2729, %v2730
      %v2732 = vsel %vm435, %v2727, %v2731
      %v2733 = vrot.slane %v2611, 1
      %v2734 = vrot.slane %v2607, 2
      %v2735 = vor.u32 %v2733, %v2734
      %v2736 = vsel %vm435, %v2731, %v2735
      %v2738 = vshrl.u32 %v2692, 16
      %v2740 = vrot.slane %v2738, 1
      %v2741 = vshll.u32 %v2692, 16
      %v2743 = vrot.slane %v2741, 2
      %v2744 = vor.u32 %v2740, %v2743
      %v2745 = vsel %vm435, %v2735, %v2744
      %2746 = vrot.lane.b32.xlu0 %v2704, 96
      %v2747 = vpop.permute.xlu0 %2746
      %2748 = vrot.lane.b32.xlu0 %v2708, 96
      %v2749 = vpop.permute.xlu0 %2748
      %2750 = vrot.lane.b32.xlu0 %v2712, 96
      %v2751 = vpop.permute.xlu0 %2750
      %2752 = vrot.lane.b32.xlu0 %v2716, 96
      %v2753 = vpop.permute.xlu0 %2752
      %2754 = vrot.lane.b32.xlu0 %v2720, 96
      %v2755 = vpop.permute.xlu0 %2754
      %2756 = vrot.lane.b32.xlu0 %v2724, 96
      %v2757 = vpop.permute.xlu0 %2756
      %2758 = vrot.lane.b32.xlu0 %v2728, 96
      %v2759 = vpop.permute.xlu0 %2758
      %2760 = vrot.lane.b32.xlu0 %v2732, 96
      %v2761 = vpop.permute.xlu0 %2760
      %2762 = vrot.lane.b32.xlu0 %v2736, 96
      %v2763 = vpop.permute.xlu0 %2762
      %2764 = vrot.lane.b32.xlu0 %v2745, 96
      %v2765 = vpop.permute.xlu0 %2764
      %2766 = vrot.lane.b32.xlu0 %v2744, 96
      %v2767 = vpop.permute.xlu0 %2766
      %v2769 = vunpack.c.l.b16 %v2476
      %v2770 = vpack.c.b16 %v2500, %v2769
      %v2771 = vrot.slane %v2770, 2
      %v2772 = vrot.slane %v2522, 2
      %v2773 = vsel %vm514, %v2771, %v2772
      %v2774 = vrot.slane %v2523, 2
      %v2775 = vsel %vm514, %v2772, %v2774
      %v2776 = vrot.slane %v2524, 2
      %v2777 = vsel %vm514, %v2774, %v2776
      %v2778 = vrot.slane %v2525, 2
      %v2779 = vsel %vm514, %v2776, %v2778
      %v2780 = vrot.slane %v2526, 2
      %v2781 = vsel %vm514, %v2778, %v2780
      %v2782 = vrot.slane %v2527, 2
      %v2783 = vsel %vm514, %v2780, %v2782
      %v2784 = vrot.slane %v2528, 2
      %v2785 = vsel %vm514, %v2782, %v2784
      %v2786 = vrot.slane %v2529, 2
      %v2787 = vsel %vm514, %v2784, %v2786
      %v2788 = vrot.slane %v2530, 2
      %v2789 = vsel %vm514, %v2786, %v2788
      %v2790 = vrot.slane %v2692, 2
      %v2791 = vsel %vm514, %v2788, %v2790
      %vm2792 = vcmask 261120
      %v2794 = vsel %vm2792, %v2521, %v2623
      %v2796 = vsel %vm2792, %v2522, %v2625
      %v2798 = vsel %vm2792, %v2523, %v2627
      %v2800 = vsel %vm2792, %v2524, %v2629
      %v2802 = vsel %vm2792, %v2525, %v2631
      %v2804 = vsel %vm2792, %v2526, %v2633
      %v2806 = vsel %vm2792, %v2527, %v2635
      %v2808 = vsel %vm2792, %v2528, %v2637
      %v2810 = vsel %vm2792, %v2529, %v2639
      %v2812 = vsel %vm2792, %v2530, %v2641
      %v2815 = vsel %vm2792, %v2531, %v2643
      %v2817 = vsel %vm536, %v2794, %v2669
      %v2819 = vsel %vm536, %v2796, %v2671
      %v2821 = vsel %vm536, %v2798, %v2673
      %v2823 = vsel %vm536, %v2800, %v2675
      %v2825 = vsel %vm536, %v2802, %v2677
      %v2827 = vsel %vm536, %v2804, %v2679
      %v2829 = vsel %vm536, %v2806, %v2681
      %v2831 = vsel %vm536, %v2808, %v2683
      %v2833 = vsel %vm536, %v2810, %v2685
      %v2835 = vsel %vm536, %v2812, %v2687
      %v2837 = vsel %vm536, %v2815, %v2689
      %vm2838 = vcmask 785408
      %v2840 = vsel %vm2838, %v2817, %v2747
      %v2843 = vsel %vm2838, %v2819, %v2749
      %v2846 = vsel %vm2838, %v2821, %v2751
      %v2849 = vsel %vm2838, %v2823, %v2753
      %v2852 = vsel %vm2838, %v2825, %v2755
      %v2855 = vsel %vm2838, %v2827, %v2757
      %v2858 = vsel %vm2838, %v2829, %v2759
      %v2861 = vsel %vm2838, %v2831, %v2761
      %v2864 = vsel %vm2838, %v2833, %v2763
      %v2867 = vsel %vm2838, %v2835, %v2765
      %v2870 = vsel %vm2838, %v2837, %v2767
      %v2872 = vld [vmem:[%s3] sm:$0xf]
      %v2873 = vld [vmem:[%s3 + $0x4] sm:$0xf]
      %v2874 = vld [vmem:[%s3 + $0x8] sm:$0xf]
      %v2875 = vld [vmem:[%s3 + $0xc] sm:$0xf]
      %v2876 = vld [vmem:[%s3 + $0x10] sm:$0xf]
      %v2877 = vld [vmem:[%s3 + $0x14] sm:$0xf]
      %v2878 = vld [vmem:[%s3 + $0x18] sm:$0xf]
      %v2879 = vld [vmem:[%s3 + $0x1c] sm:$0xf]
      %v2880 = vld [vmem:[%s3 + $0x20] sm:$0xf]
      %v2881 = vld [vmem:[%s3 + $0x24] sm:$0xf]
      %v2882 = vld [vmem:[%s3 + $0x28] sm:$0xf]
      %v2883 = vld [vmem:[%s3 + $0x2c] sm:$0xf]
      %v2884 = vld [vmem:[%s3 + $0x30] sm:$0xf]
      %v2885 = vld [vmem:[%s3 + $0x34] sm:$0xf]
      %v2886 = vld [vmem:[%s3 + $0x38] sm:$0xf]
      %v2887 = vld [vmem:[%s3 + $0x3c] sm:$0xf]
      %v2888 = vld [vmem:[%s3 + $0x40] sm:$0xf]
      %v2889 = vld [vmem:[%s3 + $0x44] sm:$0xf]
      %v2890 = vld [vmem:[%s3 + $0x48] sm:$0xf]
      %v2891 = vld [vmem:[%s3 + $0x4c] sm:$0xf]
      %s2892 = scalar_lea.vmem %s3, 80
      %v2893 = vld [vmem:[%s2892] sm:$0xf]
      %v2894 = vld [vmem:[%s2892 + $0x4] sm:$0xf]
      %v2895 = vld [vmem:[%s2892 + $0x8] sm:$0xf]
      %v2896 = vld [vmem:[%s2892 + $0xc] sm:$0xf]
      %v2897 = vld [vmem:[%s2892 + $0x10] sm:$0xf]
      %v2898 = vld [vmem:[%s2892 + $0x14] sm:$0xf]
      %v2899 = vld [vmem:[%s2892 + $0x18] sm:$0xf]
      %v2900 = vld [vmem:[%s2892 + $0x1c] sm:$0xf]
      %v2901 = vld [vmem:[%s2892 + $0x20] sm:$0xf]
      %v2902 = vld [vmem:[%s2892 + $0x24] sm:$0xf]
      %v2903 = vld [vmem:[%s2892 + $0x28] sm:$0xf]
      %v2904 = vld [vmem:[%s2892 + $0x2c] sm:$0xf]
      %v2905 = vld [vmem:[%s2892 + $0x30] sm:$0xf]
      %v2906 = vld [vmem:[%s2892 + $0x34] sm:$0xf]
      %v2907 = vld [vmem:[%s2892 + $0x38] sm:$0xf]
      %v2908 = vld [vmem:[%s2892 + $0x3c] sm:$0xf]
      %v2909 = vld [vmem:[%s2892 + $0x40] sm:$0xf]
      %v2910 = vld [vmem:[%s2892 + $0x44] sm:$0xf]
      %v2911 = vld [vmem:[%s2892 + $0x48] sm:$0xf]
      %v2912 = vld [vmem:[%s2892 + $0x4c] sm:$0xf]
      %v2933 = vunpack.c.l.b16 %v2893
      %v2934 = vunpack.c.l.b16 %v2894
      %v2935 = vunpack.c.l.b16 %v2895
      %v2936 = vunpack.c.l.b16 %v2896
      %v2937 = vunpack.c.l.b16 %v2897
      %v2938 = vunpack.c.l.b16 %v2898
      %v2939 = vunpack.c.l.b16 %v2899
      %v2940 = vunpack.c.l.b16 %v2900
      %v2941 = vunpack.c.l.b16 %v2901
      %v2942 = vunpack.c.l.b16 %v2902
      %v2943 = vunpack.c.l.b16 %v2903
      %v2944 = vunpack.c.l.b16 %v2904
      %v2945 = vunpack.c.l.b16 %v2905
      %v2946 = vunpack.c.l.b16 %v2906
      %v2947 = vunpack.c.l.b16 %v2907
      %v2948 = vunpack.c.l.b16 %v2908
      %v2949 = vunpack.c.l.b16 %v2909
      %v2950 = vunpack.c.l.b16 %v2910
      %v2951 = vunpack.c.l.b16 %v2911
      %v2952 = vunpack.c.l.b16 %v2912
      %v2953 = vpack.c.b16 %v2934, %v2933
      %v2954 = vpack.c.b16 %v2936, %v2935
      %v2955 = vpack.c.b16 %v2938, %v2937
      %v2956 = vpack.c.b16 %v2940, %v2939
      %v2957 = vpack.c.b16 %v2942, %v2941
      %v2958 = vpack.c.b16 %v2944, %v2943
      %v2959 = vpack.c.b16 %v2946, %v2945
      %v2960 = vpack.c.b16 %v2948, %v2947
      %v2961 = vpack.c.b16 %v2950, %v2949
      %v2962 = vpack.c.b16 %v2952, %v2951
      %v2974 = vsel %vm2792, %v2775, 0
      %v2977 = vsel %vm2792, %v2777, 0
      %v2980 = vsel %vm2792, %v2779, 0
      %v2983 = vsel %vm2792, %v2781, 0
      %v2986 = vsel %vm2792, %v2783, 0
      %v2989 = vsel %vm2792, %v2785, 0
      %v2992 = vsel %vm2792, %v2787, 0
      %2994 = vmatpush.bf16.msra.mxu0 %v2960
      %2995 = vmatpush.bf16.msra.mxu0 %v2959
      %2996 = vmatpush.bf16.msra.mxu0 %v2958
      %2997 = vmatpush.bf16.msra.mxu0 %v2957
      %2998 = vmatpush.bf16.msra.mxu0 %v2956
      %2999 = vmatpush.bf16.msra.mxu0 %v2955
      %3000 = vmatpush.bf16.msra.mxu0 %v2954
      %3001 = vmatpush.bf16.msra.mxu0 %v2953
      %3002 = vmatmul.bf16.gmra.mxu0 %v2843
      %v3003 = vpop.f32.mrf.mxu0
      %v3004 = vadd.f32 0.0, %v3003
      %v3005 = vpop.f32.mrf.mxu0
      %v3006 = vadd.f32 0.0, %v3005
      %3007 = vmatmul.bf16.gmra.mxu0 %v2846
      %v3008 = vpop.f32.mrf.mxu0
      %v3009 = vadd.f32 0.0, %v3008
      %v3010 = vpop.f32.mrf.mxu0
      %v3011 = vadd.f32 0.0, %v3010
      %3012 = vmatmul.bf16.gmra.mxu0 %v2849
      %v3013 = vpop.f32.mrf.mxu0
      %v3014 = vadd.f32 0.0, %v3013
      %v3015 = vpop.f32.mrf.mxu0
      %v3016 = vadd.f32 0.0, %v3015
      %3017 = vmatmul.bf16.gmra.mxu0 %v2852
      %v3018 = vpop.f32.mrf.mxu0
      %v3019 = vadd.f32 0.0, %v3018
      %v3020 = vpop.f32.mrf.mxu0
      %v3021 = vadd.f32 0.0, %v3020
      %3022 = vmatmul.bf16.gmra.mxu0 %v2855
      %v3023 = vpop.f32.mrf.mxu0
      %v3024 = vadd.f32 0.0, %v3023
      %v3025 = vpop.f32.mrf.mxu0
      %v3026 = vadd.f32 0.0, %v3025
      %3027 = vmatmul.bf16.gmra.mxu0 %v2858
      %v3028 = vpop.f32.mrf.mxu0
      %v3029 = vadd.f32 0.0, %v3028
      %v3030 = vpop.f32.mrf.mxu0
      %v3031 = vadd.f32 0.0, %v3030
      %3032 = vmatmul.bf16.gmra.mxu0 %v2861
      %v3033 = vpop.f32.mrf.mxu0
      %v3034 = vadd.f32 0.0, %v3033
      %v3035 = vpop.f32.mrf.mxu0
      %v3036 = vadd.f32 0.0, %v3035
      %3037 = vdwg.mxu0
      %3038 = vmatpush.bf16.msra.mxu0 0
      %3039 = vmatpush.bf16.msra.mxu0 0
      %3040 = vmatpush.bf16.msra.mxu0 0
      %3041 = vmatpush.bf16.msra.mxu0 0
      %3042 = vmatpush.bf16.msra.mxu0 0
      %3043 = vmatpush.bf16.msra.mxu0 0
      %3044 = vmatpush.bf16.msra.mxu0 %v2962
      %3045 = vmatpush.bf16.msra.mxu0 %v2961
      %3046 = vmatmul.bf16.gmra.mxu0 %v2974
      %v3047 = vpop.f32.mrf.mxu0
      %v3048 = vadd.f32 %v3004, %v3047
      %v3049 = vpop.f32.mrf.mxu0
      %v3050 = vadd.f32 %v3006, %v3049
      %3051 = vmatmul.bf16.gmra.mxu0 %v2977
      %v3052 = vpop.f32.mrf.mxu0
      %v3053 = vadd.f32 %v3009, %v3052
      %v3054 = vpop.f32.mrf.mxu0
      %v3055 = vadd.f32 %v3011, %v3054
      %3056 = vmatmul.bf16.gmra.mxu0 %v2980
      %v3057 = vpop.f32.mrf.mxu0
      %v3058 = vadd.f32 %v3014, %v3057
      %v3059 = vpop.f32.mrf.mxu0
      %v3060 = vadd.f32 %v3016, %v3059
      %3061 = vmatmul.bf16.gmra.mxu0 %v2983
      %v3062 = vpop.f32.mrf.mxu0
      %v3063 = vadd.f32 %v3019, %v3062
      %v3064 = vpop.f32.mrf.mxu0
      %v3065 = vadd.f32 %v3021, %v3064
      %3066 = vmatmul.bf16.gmra.mxu0 %v2986
      %v3067 = vpop.f32.mrf.mxu0
      %v3068 = vadd.f32 %v3024, %v3067
      %v3069 = vpop.f32.mrf.mxu0
      %v3070 = vadd.f32 %v3026, %v3069
      %3071 = vmatmul.bf16.gmra.mxu0 %v2989
      %v3072 = vpop.f32.mrf.mxu0
      %v3073 = vadd.f32 %v3029, %v3072
      %v3074 = vpop.f32.mrf.mxu0
      %v3075 = vadd.f32 %v3031, %v3074
      %3076 = vmatmul.bf16.gmra.mxu0 %v2992
      %v3077 = vpop.f32.mrf.mxu0
      %v3078 = vadd.f32 %v3034, %v3077
      %v3079 = vpop.f32.mrf.mxu0
      %v3080 = vadd.f32 %v3036, %v3079
      %3081 = vdwg.mxu0
      %v3102 = vunpack.c.l.b16 %v2872
      %v3103 = vunpack.c.l.b16 %v2873
      %v3104 = vunpack.c.l.b16 %v2874
      %v3105 = vunpack.c.l.b16 %v2875
      %v3106 = vunpack.c.l.b16 %v2876
      %v3107 = vunpack.c.l.b16 %v2877
      %v3108 = vunpack.c.l.b16 %v2878
      %v3109 = vunpack.c.l.b16 %v2879
      %v3110 = vunpack.c.l.b16 %v2880
      %v3111 = vunpack.c.l.b16 %v2881
      %v3112 = vunpack.c.l.b16 %v2882
      %v3113 = vunpack.c.l.b16 %v2883
      %v3114 = vunpack.c.l.b16 %v2884
      %v3115 = vunpack.c.l.b16 %v2885
      %v3116 = vunpack.c.l.b16 %v2886
      %v3117 = vunpack.c.l.b16 %v2887
      %v3118 = vunpack.c.l.b16 %v2888
      %v3119 = vunpack.c.l.b16 %v2889
      %v3120 = vunpack.c.l.b16 %v2890
      %v3121 = vunpack.c.l.b16 %v2891
      %v3122 = vpack.c.b16 %v3103, %v3102
      %v3123 = vpack.c.b16 %v3105, %v3104
      %v3124 = vpack.c.b16 %v3107, %v3106
      %v3125 = vpack.c.b16 %v3109, %v3108
      %v3126 = vpack.c.b16 %v3111, %v3110
      %v3127 = vpack.c.b16 %v3113, %v3112
      %v3128 = vpack.c.b16 %v3115, %v3114
      %v3129 = vpack.c.b16 %v3117, %v3116
      %v3130 = vpack.c.b16 %v3119, %v3118
      %v3131 = vpack.c.b16 %v3121, %v3120
      %v3143 = vsel %vm2792, %v2773, 0
      %3145 = vmatpush.bf16.msra.mxu0 %v3129
      %3146 = vmatpush.bf16.msra.mxu0 %v3128
      %3147 = vmatpush.bf16.msra.mxu0 %v3127
      %3148 = vmatpush.bf16.msra.mxu0 %v3126
      %3149 = vmatpush.bf16.msra.mxu0 %v3125
      %3150 = vmatpush.bf16.msra.mxu0 %v3124
      %3151 = vmatpush.bf16.msra.mxu0 %v3123
      %3152 = vmatpush.bf16.msra.mxu0 %v3122
      %3153 = vmatmul.bf16.gmra.mxu0 %v2840
      %v3154 = vpop.f32.mrf.mxu0
      %v3155 = vadd.f32 %v3048, %v3154
      %v3156 = vpop.f32.mrf.mxu0
      %v3157 = vadd.f32 %v3050, %v3156
      %3158 = vmatmul.bf16.gmra.mxu0 %v2843
      %v3159 = vpop.f32.mrf.mxu0
      %v3160 = vadd.f32 %v3053, %v3159
      %v3161 = vpop.f32.mrf.mxu0
      %v3162 = vadd.f32 %v3055, %v3161
      %3163 = vmatmul.bf16.gmra.mxu0 %v2846
      %v3164 = vpop.f32.mrf.mxu0
      %v3165 = vadd.f32 %v3058, %v3164
      %v3166 = vpop.f32.mrf.mxu0
      %v3167 = vadd.f32 %v3060, %v3166
      %3168 = vmatmul.bf16.gmra.mxu0 %v2849
      %v3169 = vpop.f32.mrf.mxu0
      %v3170 = vadd.f32 %v3063, %v3169
      %v3171 = vpop.f32.mrf.mxu0
      %v3172 = vadd.f32 %v3065, %v3171
      %3173 = vmatmul.bf16.gmra.mxu0 %v2852
      %v3174 = vpop.f32.mrf.mxu0
      %v3175 = vadd.f32 %v3068, %v3174
      %v3176 = vpop.f32.mrf.mxu0
      %v3177 = vadd.f32 %v3070, %v3176
      %3178 = vmatmul.bf16.gmra.mxu0 %v2855
      %v3179 = vpop.f32.mrf.mxu0
      %v3180 = vadd.f32 %v3073, %v3179
      %v3181 = vpop.f32.mrf.mxu0
      %v3182 = vadd.f32 %v3075, %v3181
      %3183 = vmatmul.bf16.gmra.mxu0 %v2858
      %v3184 = vpop.f32.mrf.mxu0
      %v3185 = vadd.f32 %v3078, %v3184
      %v3186 = vpop.f32.mrf.mxu0
      %v3187 = vadd.f32 %v3080, %v3186
      %3188 = vdwg.mxu0
      %3189 = vmatpush.bf16.msra.mxu0 0
      %3190 = vmatpush.bf16.msra.mxu0 0
      %3191 = vmatpush.bf16.msra.mxu0 0
      %3192 = vmatpush.bf16.msra.mxu0 0
      %3193 = vmatpush.bf16.msra.mxu0 0
      %3194 = vmatpush.bf16.msra.mxu0 0
      %3195 = vmatpush.bf16.msra.mxu0 %v3131
      %3196 = vmatpush.bf16.msra.mxu0 %v3130
      %3197 = vmatmul.bf16.gmra.mxu0 %v3143
      %v3198 = vpop.f32.mrf.mxu0
      %v3199 = vadd.f32 %v3155, %v3198
      %v3200 = vpop.f32.mrf.mxu0
      %v3201 = vadd.f32 %v3157, %v3200
      %3202 = vmatmul.bf16.gmra.mxu0 %v2974
      %v3203 = vpop.f32.mrf.mxu0
      %v3204 = vadd.f32 %v3160, %v3203
      %v3205 = vpop.f32.mrf.mxu0
      %v3206 = vadd.f32 %v3162, %v3205
      %3207 = vmatmul.bf16.gmra.mxu0 %v2977
      %v3208 = vpop.f32.mrf.mxu0
      %v3209 = vadd.f32 %v3165, %v3208
      %v3210 = vpop.f32.mrf.mxu0
      %v3211 = vadd.f32 %v3167, %v3210
      %3212 = vmatmul.bf16.gmra.mxu0 %v2980
      %v3213 = vpop.f32.mrf.mxu0
      %v3214 = vadd.f32 %v3170, %v3213
      %v3215 = vpop.f32.mrf.mxu0
      %v3216 = vadd.f32 %v3172, %v3215
      %3217 = vmatmul.bf16.gmra.mxu0 %v2983
      %v3218 = vpop.f32.mrf.mxu0
      %v3219 = vadd.f32 %v3175, %v3218
      %v3220 = vpop.f32.mrf.mxu0
      %v3221 = vadd.f32 %v3177, %v3220
      %3222 = vmatmul.bf16.gmra.mxu0 %v2986
      %v3223 = vpop.f32.mrf.mxu0
      %v3224 = vadd.f32 %v3180, %v3223
      %v3225 = vpop.f32.mrf.mxu0
      %v3226 = vadd.f32 %v3182, %v3225
      %3227 = vmatmul.bf16.gmra.mxu0 %v2989
      %v3228 = vpop.f32.mrf.mxu0
      %v3229 = vadd.f32 %v3185, %v3228
      %v3230 = vpop.f32.mrf.mxu0
      %v3231 = vadd.f32 %v3187, %v3230
      %3232 = vdwg.mxu0
      %s3233 = scalar_lea.vmem %s3, 160
      %v3234 = vld [vmem:[%s3233] sm:$0xf]
      %v3235 = vld [vmem:[%s3233 + $0x4] sm:$0xf]
      %v3236 = vld [vmem:[%s3233 + $0x8] sm:$0xf]
      %v3237 = vld [vmem:[%s3233 + $0xc] sm:$0xf]
      %v3238 = vld [vmem:[%s3233 + $0x10] sm:$0xf]
      %v3239 = vld [vmem:[%s3233 + $0x14] sm:$0xf]
      %v3240 = vld [vmem:[%s3233 + $0x18] sm:$0xf]
      %v3241 = vld [vmem:[%s3233 + $0x1c] sm:$0xf]
      %v3242 = vld [vmem:[%s3233 + $0x20] sm:$0xf]
      %v3243 = vld [vmem:[%s3233 + $0x24] sm:$0xf]
      %v3244 = vld [vmem:[%s3233 + $0x28] sm:$0xf]
      %v3245 = vld [vmem:[%s3233 + $0x2c] sm:$0xf]
      %v3246 = vld [vmem:[%s3233 + $0x30] sm:$0xf]
      %v3247 = vld [vmem:[%s3233 + $0x34] sm:$0xf]
      %v3248 = vld [vmem:[%s3233 + $0x38] sm:$0xf]
      %v3249 = vld [vmem:[%s3233 + $0x3c] sm:$0xf]
      %v3250 = vld [vmem:[%s3233 + $0x40] sm:$0xf]
      %v3251 = vld [vmem:[%s3233 + $0x44] sm:$0xf]
      %v3252 = vld [vmem:[%s3233 + $0x48] sm:$0xf]
      %v3253 = vld [vmem:[%s3233 + $0x4c] sm:$0xf]
      %v3274 = vunpack.c.l.b16 %v3234
      %v3275 = vunpack.c.l.b16 %v3235
      %v3276 = vunpack.c.l.b16 %v3236
      %v3277 = vunpack.c.l.b16 %v3237
      %v3278 = vunpack.c.l.b16 %v3238
      %v3279 = vunpack.c.l.b16 %v3239
      %v3280 = vunpack.c.l.b16 %v3240
      %v3281 = vunpack.c.l.b16 %v3241
      %v3282 = vunpack.c.l.b16 %v3242
      %v3283 = vunpack.c.l.b16 %v3243
      %v3284 = vunpack.c.l.b16 %v3244
      %v3285 = vunpack.c.l.b16 %v3245
      %v3286 = vunpack.c.l.b16 %v3246
      %v3287 = vunpack.c.l.b16 %v3247
      %v3288 = vunpack.c.l.b16 %v3248
      %v3289 = vunpack.c.l.b16 %v3249
      %v3290 = vunpack.c.l.b16 %v3250
      %v3291 = vunpack.c.l.b16 %v3251
      %v3292 = vunpack.c.l.b16 %v3252
      %v3293 = vunpack.c.l.b16 %v3253
      %v3294 = vpack.c.b16 %v3275, %v3274
      %v3295 = vpack.c.b16 %v3277, %v3276
      %v3296 = vpack.c.b16 %v3279, %v3278
      %v3297 = vpack.c.b16 %v3281, %v3280
      %v3298 = vpack.c.b16 %v3283, %v3282
      %v3299 = vpack.c.b16 %v3285, %v3284
      %v3300 = vpack.c.b16 %v3287, %v3286
      %v3301 = vpack.c.b16 %v3289, %v3288
      %v3302 = vpack.c.b16 %v3291, %v3290
      %v3303 = vpack.c.b16 %v3293, %v3292
      %v3315 = vsel %vm2792, %v2789, 0
      %3317 = vmatpush.bf16.msra.mxu0 %v3301
      %3318 = vmatpush.bf16.msra.mxu0 %v3300
      %3319 = vmatpush.bf16.msra.mxu0 %v3299
      %3320 = vmatpush.bf16.msra.mxu0 %v3298
      %3321 = vmatpush.bf16.msra.mxu0 %v3297
      %3322 = vmatpush.bf16.msra.mxu0 %v3296
      %3323 = vmatpush.bf16.msra.mxu0 %v3295
      %3324 = vmatpush.bf16.msra.mxu0 %v3294
      %3325 = vmatmul.bf16.gmra.mxu0 %v2846
      %v3326 = vpop.f32.mrf.mxu0
      %v3327 = vadd.f32 0.0, %v3326
      %v3328 = vpop.f32.mrf.mxu0
      %v3329 = vadd.f32 0.0, %v3328
      %3330 = vmatmul.bf16.gmra.mxu0 %v2849
      %v3331 = vpop.f32.mrf.mxu0
      %v3332 = vadd.f32 0.0, %v3331
      %v3333 = vpop.f32.mrf.mxu0
      %v3334 = vadd.f32 0.0, %v3333
      %3335 = vmatmul.bf16.gmra.mxu0 %v2852
      %v3336 = vpop.f32.mrf.mxu0
      %v3337 = vadd.f32 0.0, %v3336
      %v3338 = vpop.f32.mrf.mxu0
      %v3339 = vadd.f32 0.0, %v3338
      %3340 = vmatmul.bf16.gmra.mxu0 %v2855
      %v3341 = vpop.f32.mrf.mxu0
      %v3342 = vadd.f32 0.0, %v3341
      %v3343 = vpop.f32.mrf.mxu0
      %v3344 = vadd.f32 0.0, %v3343
      %3345 = vmatmul.bf16.gmra.mxu0 %v2858
      %v3346 = vpop.f32.mrf.mxu0
      %v3347 = vadd.f32 0.0, %v3346
      %v3348 = vpop.f32.mrf.mxu0
      %v3349 = vadd.f32 0.0, %v3348
      %3350 = vmatmul.bf16.gmra.mxu0 %v2861
      %v3351 = vpop.f32.mrf.mxu0
      %v3352 = vadd.f32 0.0, %v3351
      %v3353 = vpop.f32.mrf.mxu0
      %v3354 = vadd.f32 0.0, %v3353
      %3355 = vmatmul.bf16.gmra.mxu0 %v2864
      %v3356 = vpop.f32.mrf.mxu0
      %v3357 = vadd.f32 0.0, %v3356
      %v3358 = vpop.f32.mrf.mxu0
      %v3359 = vadd.f32 0.0, %v3358
      %3360 = vdwg.mxu0
      %3361 = vmatpush.bf16.msra.mxu0 0
      %3362 = vmatpush.bf16.msra.mxu0 0
      %3363 = vmatpush.bf16.msra.mxu0 0
      %3364 = vmatpush.bf16.msra.mxu0 0
      %3365 = vmatpush.bf16.msra.mxu0 0
      %3366 = vmatpush.bf16.msra.mxu0 0
      %3367 = vmatpush.bf16.msra.mxu0 %v3303
      %3368 = vmatpush.bf16.msra.mxu0 %v3302
      %3369 = vmatmul.bf16.gmra.mxu0 %v2977
      %v3370 = vpop.f32.mrf.mxu0
      %v3371 = vadd.f32 %v3327, %v3370
      %v3372 = vpop.f32.mrf.mxu0
      %v3373 = vadd.f32 %v3329, %v3372
      %3374 = vmatmul.bf16.gmra.mxu0 %v2980
      %v3375 = vpop.f32.mrf.mxu0
      %v3376 = vadd.f32 %v3332, %v3375
      %v3377 = vpop.f32.mrf.mxu0
      %v3378 = vadd.f32 %v3334, %v3377
      %3379 = vmatmul.bf16.gmra.mxu0 %v2983
      %v3380 = vpop.f32.mrf.mxu0
      %v3381 = vadd.f32 %v3337, %v3380
      %v3382 = vpop.f32.mrf.mxu0
      %v3383 = vadd.f32 %v3339, %v3382
      %3384 = vmatmul.bf16.gmra.mxu0 %v2986
      %v3385 = vpop.f32.mrf.mxu0
      %v3386 = vadd.f32 %v3342, %v3385
      %v3387 = vpop.f32.mrf.mxu0
      %v3388 = vadd.f32 %v3344, %v3387
      %3389 = vmatmul.bf16.gmra.mxu0 %v2989
      %v3390 = vpop.f32.mrf.mxu0
      %v3391 = vadd.f32 %v3347, %v3390
      %v3392 = vpop.f32.mrf.mxu0
      %v3393 = vadd.f32 %v3349, %v3392
      %3394 = vmatmul.bf16.gmra.mxu0 %v2992
      %v3395 = vpop.f32.mrf.mxu0
      %v3396 = vadd.f32 %v3352, %v3395
      %v3397 = vpop.f32.mrf.mxu0
      %v3398 = vadd.f32 %v3354, %v3397
      %3399 = vmatmul.bf16.gmra.mxu0 %v3315
      %v3400 = vpop.f32.mrf.mxu0
      %v3401 = vadd.f32 %v3357, %v3400
      %v3402 = vpop.f32.mrf.mxu0
      %v3403 = vadd.f32 %v3359, %v3402
      %3404 = vdwg.mxu0
      %v3405 = vadd.f32 %v3199, %v3371
      %v3406 = vadd.f32 %v3201, %v3373
      %v3407 = vadd.f32 %v3204, %v3376
      %v3408 = vadd.f32 %v3206, %v3378
      %v3409 = vadd.f32 %v3209, %v3381
      %v3410 = vadd.f32 %v3211, %v3383
      %v3411 = vadd.f32 %v3214, %v3386
      %v3412 = vadd.f32 %v3216, %v3388
      %v3413 = vadd.f32 %v3219, %v3391
      %v3414 = vadd.f32 %v3221, %v3393
      %v3415 = vadd.f32 %v3224, %v3396
      %v3416 = vadd.f32 %v3226, %v3398
      %v3417 = vadd.f32 %v3229, %v3401
      %v3418 = vadd.f32 %v3231, %v3403
      %s3419 = scalar_lea.vmem %s3, 240
      %v3420 = vld [vmem:[%s3419] sm:$0xf]
      %v3421 = vld [vmem:[%s3419 + $0x4] sm:$0xf]
      %v3422 = vld [vmem:[%s3419 + $0x8] sm:$0xf]
      %v3423 = vld [vmem:[%s3419 + $0xc] sm:$0xf]
      %v3424 = vld [vmem:[%s3419 + $0x10] sm:$0xf]
      %v3425 = vld [vmem:[%s3419 + $0x14] sm:$0xf]
      %v3426 = vld [vmem:[%s3419 + $0x18] sm:$0xf]
      %v3427 = vld [vmem:[%s3419 + $0x1c] sm:$0xf]
      %v3428 = vld [vmem:[%s3419 + $0x20] sm:$0xf]
      %v3429 = vld [vmem:[%s3419 + $0x24] sm:$0xf]
      %v3430 = vld [vmem:[%s3419 + $0x28] sm:$0xf]
      %v3431 = vld [vmem:[%s3419 + $0x2c] sm:$0xf]
      %v3432 = vld [vmem:[%s3419 + $0x30] sm:$0xf]
      %v3433 = vld [vmem:[%s3419 + $0x34] sm:$0xf]
      %v3434 = vld [vmem:[%s3419 + $0x38] sm:$0xf]
      %v3435 = vld [vmem:[%s3419 + $0x3c] sm:$0xf]
      %v3436 = vld [vmem:[%s3419 + $0x40] sm:$0xf]
      %v3437 = vld [vmem:[%s3419 + $0x44] sm:$0xf]
      %v3438 = vld [vmem:[%s3419 + $0x48] sm:$0xf]
      %v3439 = vld [vmem:[%s3419 + $0x4c] sm:$0xf]
      %v3460 = vunpack.c.l.b16 %v3420
      %v3461 = vunpack.c.l.b16 %v3421
      %v3462 = vunpack.c.l.b16 %v3422
      %v3463 = vunpack.c.l.b16 %v3423
      %v3464 = vunpack.c.l.b16 %v3424
      %v3465 = vunpack.c.l.b16 %v3425
      %v3466 = vunpack.c.l.b16 %v3426
      %v3467 = vunpack.c.l.b16 %v3427
      %v3468 = vunpack.c.l.b16 %v3428
      %v3469 = vunpack.c.l.b16 %v3429
      %v3470 = vunpack.c.l.b16 %v3430
      %v3471 = vunpack.c.l.b16 %v3431
      %v3472 = vunpack.c.l.b16 %v3432
      %v3473 = vunpack.c.l.b16 %v3433
      %v3474 = vunpack.c.l.b16 %v3434
      %v3475 = vunpack.c.l.b16 %v3435
      %v3476 = vunpack.c.l.b16 %v3436
      %v3477 = vunpack.c.l.b16 %v3437
      %v3478 = vunpack.c.l.b16 %v3438
      %v3479 = vunpack.c.l.b16 %v3439
      %v3480 = vpack.c.b16 %v3461, %v3460
      %v3481 = vpack.c.b16 %v3463, %v3462
      %v3482 = vpack.c.b16 %v3465, %v3464
      %v3483 = vpack.c.b16 %v3467, %v3466
      %v3484 = vpack.c.b16 %v3469, %v3468
      %v3485 = vpack.c.b16 %v3471, %v3470
      %v3486 = vpack.c.b16 %v3473, %v3472
      %v3487 = vpack.c.b16 %v3475, %v3474
      %v3488 = vpack.c.b16 %v3477, %v3476
      %v3489 = vpack.c.b16 %v3479, %v3478
      %v3501 = vsel %vm2792, %v2791, 0
      %3503 = vmatpush.bf16.msra.mxu0 %v3487
      %3504 = vmatpush.bf16.msra.mxu0 %v3486
      %3505 = vmatpush.bf16.msra.mxu0 %v3485
      %3506 = vmatpush.bf16.msra.mxu0 %v3484
      %3507 = vmatpush.bf16.msra.mxu0 %v3483
      %3508 = vmatpush.bf16.msra.mxu0 %v3482
      %3509 = vmatpush.bf16.msra.mxu0 %v3481
      %3510 = vmatpush.bf16.msra.mxu0 %v3480
      %3511 = vmatmul.bf16.gmra.mxu0 %v2849
      %v3512 = vpop.f32.mrf.mxu0
      %v3513 = vadd.f32 0.0, %v3512
      %v3514 = vpop.f32.mrf.mxu0
      %v3515 = vadd.f32 0.0, %v3514
      %3516 = vmatmul.bf16.gmra.mxu0 %v2852
      %v3517 = vpop.f32.mrf.mxu0
      %v3518 = vadd.f32 0.0, %v3517
      %v3519 = vpop.f32.mrf.mxu0
      %v3520 = vadd.f32 0.0, %v3519
      %3521 = vmatmul.bf16.gmra.mxu0 %v2855
      %v3522 = vpop.f32.mrf.mxu0
      %v3523 = vadd.f32 0.0, %v3522
      %v3524 = vpop.f32.mrf.mxu0
      %v3525 = vadd.f32 0.0, %v3524
      %3526 = vmatmul.bf16.gmra.mxu0 %v2858
      %v3527 = vpop.f32.mrf.mxu0
      %v3528 = vadd.f32 0.0, %v3527
      %v3529 = vpop.f32.mrf.mxu0
      %v3530 = vadd.f32 0.0, %v3529
      %3531 = vmatmul.bf16.gmra.mxu0 %v2861
      %v3532 = vpop.f32.mrf.mxu0
      %v3533 = vadd.f32 0.0, %v3532
      %v3534 = vpop.f32.mrf.mxu0
      %v3535 = vadd.f32 0.0, %v3534
      %3536 = vmatmul.bf16.gmra.mxu0 %v2864
      %v3537 = vpop.f32.mrf.mxu0
      %v3538 = vadd.f32 0.0, %v3537
      %v3539 = vpop.f32.mrf.mxu0
      %v3540 = vadd.f32 0.0, %v3539
      %3541 = vmatmul.bf16.gmra.mxu0 %v2867
      %v3542 = vpop.f32.mrf.mxu0
      %v3543 = vadd.f32 0.0, %v3542
      %v3544 = vpop.f32.mrf.mxu0
      %v3545 = vadd.f32 0.0, %v3544
      %3546 = vdwg.mxu0
      %3547 = vmatpush.bf16.msra.mxu0 0
      %3548 = vmatpush.bf16.msra.mxu0 0
      %3549 = vmatpush.bf16.msra.mxu0 0
      %3550 = vmatpush.bf16.msra.mxu0 0
      %3551 = vmatpush.bf16.msra.mxu0 0
      %3552 = vmatpush.bf16.msra.mxu0 0
      %3553 = vmatpush.bf16.msra.mxu0 %v3489
      %3554 = vmatpush.bf16.msra.mxu0 %v3488
      %3555 = vmatmul.bf16.gmra.mxu0 %v2980
      %v3556 = vpop.f32.mrf.mxu0
      %v3557 = vadd.f32 %v3513, %v3556
      %v3558 = vpop.f32.mrf.mxu0
      %v3559 = vadd.f32 %v3515, %v3558
      %3560 = vmatmul.bf16.gmra.mxu0 %v2983
      %v3561 = vpop.f32.mrf.mxu0
      %v3562 = vadd.f32 %v3518, %v3561
      %v3563 = vpop.f32.mrf.mxu0
      %v3564 = vadd.f32 %v3520, %v3563
      %3565 = vmatmul.bf16.gmra.mxu0 %v2986
      %v3566 = vpop.f32.mrf.mxu0
      %v3567 = vadd.f32 %v3523, %v3566
      %v3568 = vpop.f32.mrf.mxu0
      %v3569 = vadd.f32 %v3525, %v3568
      %3570 = vmatmul.bf16.gmra.mxu0 %v2989
      %v3571 = vpop.f32.mrf.mxu0
      %v3572 = vadd.f32 %v3528, %v3571
      %v3573 = vpop.f32.mrf.mxu0
      %v3574 = vadd.f32 %v3530, %v3573
      %3575 = vmatmul.bf16.gmra.mxu0 %v2992
      %v3576 = vpop.f32.mrf.mxu0
      %v3577 = vadd.f32 %v3533, %v3576
      %v3578 = vpop.f32.mrf.mxu0
      %v3579 = vadd.f32 %v3535, %v3578
      %3580 = vmatmul.bf16.gmra.mxu0 %v3315
      %v3581 = vpop.f32.mrf.mxu0
      %v3582 = vadd.f32 %v3538, %v3581
      %v3583 = vpop.f32.mrf.mxu0
      %v3584 = vadd.f32 %v3540, %v3583
      %3585 = vmatmul.bf16.gmra.mxu0 %v3501
      %v3586 = vpop.f32.mrf.mxu0
      %v3587 = vadd.f32 %v3543, %v3586
      %v3588 = vpop.f32.mrf.mxu0
      %v3589 = vadd.f32 %v3545, %v3588
      %3590 = vdwg.mxu0
      %v3591 = vadd.f32 %v3405, %v3557
      %v3592 = vadd.f32 %v3406, %v3559
      %v3593 = vadd.f32 %v3407, %v3562
      %v3594 = vadd.f32 %v3408, %v3564
      %v3595 = vadd.f32 %v3409, %v3567
      %v3596 = vadd.f32 %v3410, %v3569
      %v3597 = vadd.f32 %v3411, %v3572
      %v3598 = vadd.f32 %v3412, %v3574
      %v3599 = vadd.f32 %v3413, %v3577
      %v3600 = vadd.f32 %v3414, %v3579
      %v3601 = vadd.f32 %v3415, %v3582
      %v3602 = vadd.f32 %v3416, %v3584
      %v3603 = vadd.f32 %v3417, %v3587
      %v3604 = vadd.f32 %v3418, %v3589
      %s3605 = scalar_lea.vmem %s3, 320
      %v3606 = vld [vmem:[%s3605] sm:$0xf]
      %v3607 = vld [vmem:[%s3605 + $0x4] sm:$0xf]
      %v3608 = vld [vmem:[%s3605 + $0x8] sm:$0xf]
      %v3609 = vld [vmem:[%s3605 + $0xc] sm:$0xf]
      %v3610 = vld [vmem:[%s3605 + $0x10] sm:$0xf]
      %v3611 = vld [vmem:[%s3605 + $0x14] sm:$0xf]
      %v3612 = vld [vmem:[%s3605 + $0x18] sm:$0xf]
      %v3613 = vld [vmem:[%s3605 + $0x1c] sm:$0xf]
      %v3614 = vld [vmem:[%s3605 + $0x20] sm:$0xf]
      %v3615 = vld [vmem:[%s3605 + $0x24] sm:$0xf]
      %v3616 = vld [vmem:[%s3605 + $0x28] sm:$0xf]
      %v3617 = vld [vmem:[%s3605 + $0x2c] sm:$0xf]
      %v3618 = vld [vmem:[%s3605 + $0x30] sm:$0xf]
      %v3619 = vld [vmem:[%s3605 + $0x34] sm:$0xf]
      %v3620 = vld [vmem:[%s3605 + $0x38] sm:$0xf]
      %v3621 = vld [vmem:[%s3605 + $0x3c] sm:$0xf]
      %v3622 = vld [vmem:[%s3605 + $0x40] sm:$0xf]
      %v3623 = vld [vmem:[%s3605 + $0x44] sm:$0xf]
      %v3624 = vld [vmem:[%s3605 + $0x48] sm:$0xf]
      %v3625 = vld [vmem:[%s3605 + $0x4c] sm:$0xf]
      %v3646 = vunpack.c.l.b16 %v3606
      %v3647 = vunpack.c.l.b16 %v3607
      %v3648 = vunpack.c.l.b16 %v3608
      %v3649 = vunpack.c.l.b16 %v3609
      %v3650 = vunpack.c.l.b16 %v3610
      %v3651 = vunpack.c.l.b16 %v3611
      %v3652 = vunpack.c.l.b16 %v3612
      %v3653 = vunpack.c.l.b16 %v3613
      %v3654 = vunpack.c.l.b16 %v3614
      %v3655 = vunpack.c.l.b16 %v3615
      %v3656 = vunpack.c.l.b16 %v3616
      %v3657 = vunpack.c.l.b16 %v3617
      %v3658 = vunpack.c.l.b16 %v3618
      %v3659 = vunpack.c.l.b16 %v3619
      %v3660 = vunpack.c.l.b16 %v3620
      %v3661 = vunpack.c.l.b16 %v3621
      %v3662 = vunpack.c.l.b16 %v3622
      %v3663 = vunpack.c.l.b16 %v3623
      %v3664 = vunpack.c.l.b16 %v3624
      %v3665 = vunpack.c.l.b16 %v3625
      %v3666 = vpack.c.b16 %v3647, %v3646
      %v3667 = vpack.c.b16 %v3649, %v3648
      %v3668 = vpack.c.b16 %v3651, %v3650
      %v3669 = vpack.c.b16 %v3653, %v3652
      %v3670 = vpack.c.b16 %v3655, %v3654
      %v3671 = vpack.c.b16 %v3657, %v3656
      %v3672 = vpack.c.b16 %v3659, %v3658
      %v3673 = vpack.c.b16 %v3661, %v3660
      %v3674 = vpack.c.b16 %v3663, %v3662
      %v3675 = vpack.c.b16 %v3665, %v3664
      %v3687 = vsel %vm2792, %v2790, 0
      %3689 = vmatpush.bf16.msra.mxu0 %v3673
      %3690 = vmatpush.bf16.msra.mxu0 %v3672
      %3691 = vmatpush.bf16.msra.mxu0 %v3671
      %3692 = vmatpush.bf16.msra.mxu0 %v3670
      %3693 = vmatpush.bf16.msra.mxu0 %v3669
      %3694 = vmatpush.bf16.msra.mxu0 %v3668
      %3695 = vmatpush.bf16.msra.mxu0 %v3667
      %3696 = vmatpush.bf16.msra.mxu0 %v3666
      %3697 = vmatmul.bf16.gmra.mxu0 %v2852
      %v3698 = vpop.f32.mrf.mxu0
      %v3699 = vadd.f32 0.0, %v3698
      %v3700 = vpop.f32.mrf.mxu0
      %v3701 = vadd.f32 0.0, %v3700
      %3702 = vmatmul.bf16.gmra.mxu0 %v2855
      %v3703 = vpop.f32.mrf.mxu0
      %v3704 = vadd.f32 0.0, %v3703
      %v3705 = vpop.f32.mrf.mxu0
      %v3706 = vadd.f32 0.0, %v3705
      %3707 = vmatmul.bf16.gmra.mxu0 %v2858
      %v3708 = vpop.f32.mrf.mxu0
      %v3709 = vadd.f32 0.0, %v3708
      %v3710 = vpop.f32.mrf.mxu0
      %v3711 = vadd.f32 0.0, %v3710
      %3712 = vmatmul.bf16.gmra.mxu0 %v2861
      %v3713 = vpop.f32.mrf.mxu0
      %v3714 = vadd.f32 0.0, %v3713
      %v3715 = vpop.f32.mrf.mxu0
      %v3716 = vadd.f32 0.0, %v3715
      %3717 = vmatmul.bf16.gmra.mxu0 %v2864
      %v3718 = vpop.f32.mrf.mxu0
      %v3719 = vadd.f32 0.0, %v3718
      %v3720 = vpop.f32.mrf.mxu0
      %v3721 = vadd.f32 0.0, %v3720
      %3722 = vmatmul.bf16.gmra.mxu0 %v2867
      %v3723 = vpop.f32.mrf.mxu0
      %v3724 = vadd.f32 0.0, %v3723
      %v3725 = vpop.f32.mrf.mxu0
      %v3726 = vadd.f32 0.0, %v3725
      %3727 = vmatmul.bf16.gmra.mxu0 %v2870
      %v3728 = vpop.f32.mrf.mxu0
      %v3729 = vadd.f32 0.0, %v3728
      %v3730 = vpop.f32.mrf.mxu0
      %v3731 = vadd.f32 0.0, %v3730
      %3732 = vdwg.mxu0
      %3733 = vmatpush.bf16.msra.mxu0 0
      %3734 = vmatpush.bf16.msra.mxu0 0
      %3735 = vmatpush.bf16.msra.mxu0 0
      %3736 = vmatpush.bf16.msra.mxu0 0
      %3737 = vmatpush.bf16.msra.mxu0 0
      %3738 = vmatpush.bf16.msra.mxu0 0
      %3739 = vmatpush.bf16.msra.mxu0 %v3675
      %3740 = vmatpush.bf16.msra.mxu0 %v3674
      %3741 = vmatmul.bf16.gmra.mxu0 %v2983
      %v3742 = vpop.f32.mrf.mxu0
      %v3743 = vadd.f32 %v3699, %v3742
      %v3744 = vpop.f32.mrf.mxu0
      %v3745 = vadd.f32 %v3701, %v3744
      %3746 = vmatmul.bf16.gmra.mxu0 %v2986
      %v3747 = vpop.f32.mrf.mxu0
      %v3748 = vadd.f32 %v3704, %v3747
      %v3749 = vpop.f32.mrf.mxu0
      %v3750 = vadd.f32 %v3706, %v3749
      %3751 = vmatmul.bf16.gmra.mxu0 %v2989
      %v3752 = vpop.f32.mrf.mxu0
      %v3753 = vadd.f32 %v3709, %v3752
      %v3754 = vpop.f32.mrf.mxu0
      %v3755 = vadd.f32 %v3711, %v3754
      %3756 = vmatmul.bf16.gmra.mxu0 %v2992
      %v3757 = vpop.f32.mrf.mxu0
      %v3758 = vadd.f32 %v3714, %v3757
      %v3759 = vpop.f32.mrf.mxu0
      %v3760 = vadd.f32 %v3716, %v3759
      %3761 = vmatmul.bf16.gmra.mxu0 %v3315
      %v3762 = vpop.f32.mrf.mxu0
      %v3763 = vadd.f32 %v3719, %v3762
      %v3764 = vpop.f32.mrf.mxu0
      %v3765 = vadd.f32 %v3721, %v3764
      %3766 = vmatmul.bf16.gmra.mxu0 %v3501
      %v3767 = vpop.f32.mrf.mxu0
      %v3768 = vadd.f32 %v3724, %v3767
      %v3769 = vpop.f32.mrf.mxu0
      %v3770 = vadd.f32 %v3726, %v3769
      %3771 = vmatmul.bf16.gmra.mxu0 %v3687
      %v3772 = vpop.f32.mrf.mxu0
      %v3773 = vadd.f32 %v3729, %v3772
      %v3774 = vpop.f32.mrf.mxu0
      %v3775 = vadd.f32 %v3731, %v3774
      %3776 = vdwg.mxu0
      %v3777 = vadd.f32 %v3591, %v3743
      %v3778 = vadd.f32 %v3592, %v3745
      %v3779 = vadd.f32 %v3593, %v3748
      %v3780 = vadd.f32 %v3594, %v3750
      %v3781 = vadd.f32 %v3595, %v3753
      %v3782 = vadd.f32 %v3596, %v3755
      %v3783 = vadd.f32 %v3597, %v3758
      %v3784 = vadd.f32 %v3598, %v3760
      %v3785 = vadd.f32 %v3599, %v3763
      %v3786 = vadd.f32 %v3600, %v3765
      %v3787 = vadd.f32 %v3601, %v3768
      %v3788 = vadd.f32 %v3602, %v3770
      %v3789 = vadd.f32 %v3603, %v3773
      %v3790 = vadd.f32 %v3604, %v3775
      %3791 = vst.msk [vmem:[%s197] sm:$0xff] %vm536, %v3777
      %3792 = vst.msk [vmem:[%s197 + $0x8] sm:$0xff] %vm536, %v3778
      %3793 = vst.msk [vmem:[%s197 + $0x10] sm:$0xff] %vm536, %v3779
      %3794 = vst.msk [vmem:[%s197 + $0x18] sm:$0xff] %vm536, %v3780
      %3795 = vst.msk [vmem:[%s197 + $0x20] sm:$0xff] %vm536, %v3781
      %3796 = vst.msk [vmem:[%s197 + $0x28] sm:$0xff] %vm536, %v3782
      %3797 = vst.msk [vmem:[%s197 + $0x30] sm:$0xff] %vm536, %v3783
      %3798 = vst.msk [vmem:[%s197 + $0x38] sm:$0xff] %vm536, %v3784
      %3799 = vst.msk [vmem:[%s197 + $0x40] sm:$0xff] %vm536, %v3785
      %3800 = vst.msk [vmem:[%s197 + $0x48] sm:$0xff] %vm536, %v3786
      %3801 = vst.msk [vmem:[%s197 + $0x50] sm:$0xff] %vm536, %v3787
      %3802 = vst.msk [vmem:[%s197 + $0x58] sm:$0xff] %vm536, %v3788
      %3803 = vst.msk [vmem:[%s197 + $0x60] sm:$0xff] %vm536, %v3789
      %vm3804 = vcmask 517120
      %3805 = vst.msk [vmem:[%s197 + $0x68] sm:$0x3] %vm3804, %v3790
      %p3806 = scmp.lt.s32.totalorder %s15, 1
      %s3807 = scalar_select %p3806, %s15, 1
      %s3808 = smul.addr %s3807, 14
      %s3809 = smul.addr %s3808, 8
      %s3810 = scalar_lea.vmem %s4, %s3809
      // Predicated region
      $region37: #{_conv_pair_pallas.1} parent=35 // pred_check
        %p3811 = pneg %p122
      $region38: #{_conv_pair_pallas.1} parent=35 // pred_check_branch
        %3813 = sbr.rel (%p3811) target = $region40
      $region39: #{_conv_pair_pallas.1} parent=35 // pred_region
        _
      $region40: #{_conv_pair_pallas.1} parent=35 // pred_fallthru
        _
    $region36: #{_conv_pair_pallas.1} parent=5 // pred_fallthru
      _
    %p3814 = scmp.le.s32.totalorder 2, %s10
    // Predicated region
    $region41: #{_conv_pair_pallas.1} parent=5 // pred_check
      %p3815 = pneg %p3814
    $region42: #{_conv_pair_pallas.1} parent=5 // pred_check_branch
      %3817 = sbr.rel (%p3815) target = $region44
    $region43: #{_conv_pair_pallas.1} parent=5 // pred_region
      %s3818 = ssub.s32 %s10, 2
      // Predicated region
      $region45: #{_conv_pair_pallas.1} parent=43 // pred_check
        %p3819 = pneg %p128
      $region46: #{_conv_pair_pallas.1} parent=43 // pred_check_branch
        %3821 = sbr.rel (%p3819) target = $region48
      $region47: #{_conv_pair_pallas.1} parent=43 // pred_region
        %p3822 = scmp.lt.s32.totalorder %s16, 1
        %s3823 = scalar_select %p3822, %s16, 1
        %s3824 = smul.addr %s3823, 14
        %s3825 = smul.addr %s3824, 8
        %s3826 = scalar_lea.vmem %s4, %s3825
      $region48: #{_conv_pair_pallas.1} parent=43 // pred_fallthru
        _
    $region44: #{_conv_pair_pallas.1} parent=5 // pred_fallthru
      _
  $region6: #{_conv_pair_pallas.1} parent=0 // loop_footer
    %s14 = sadd.s32 1, %s10
  $region7: #{_conv_pair_pallas.1} parent=0 // loop_footer_branch
    %9 = sbr.rel target = $region3
  $region8: #{_conv_pair_pallas.1} parent=0 // loop_exit
    _

</llo_original>
